<compile_context>
chip_gen: v5e
topology: v5e:2x2
jax: 0.10.0
libtpu: 0.0.40
codegen_flags: <defaults>
</compile_context>

<pallas_src>
import math
import functools
import numpy as np

import jax
import jax.numpy as jnp
from jax.experimental import pallas as pl
from jax.experimental.pallas import tpu as pltpu

# ---------------- small deterministic config ----------------
DIM_FEAT_CONT = 3          # config.data.dim.features_continuous
DIM_FEAT_DISC = 1          # config.data.dim.features_discrete
VOCAB = 6                  # config.data.vocab_size.features
DIM_CTX_CONT = 4           # config.data.dim.context_continuous
DIM_TIME_EMB = 8           # config.model.dim.emb_time
DIM_FEAT_CONT_EMB = 8      # config.model.dim.emb_features_continuous
DIM_FEAT_DISC_EMB = 4      # config.model.dim.emb_features_discrete
DIM_CTX_CONT_EMB = 6       # config.model.dim.emb_context_continuous
NUM_BLOCKS = 2             # config.model.num_blocks
HL = 32                    # config.model.dim.hidden_local
HG = 8                     # config.model.dim.hidden_glob

DIN = DIM_TIME_EMB + DIM_FEAT_CONT_EMB + DIM_FEAT_DISC_EMB    # 20
DCTX = DIM_TIME_EMB + DIM_CTX_CONT_EMB                        # 14
DOUT_C = DIM_FEAT_CONT                                        # 3
DOUT_D = DIM_FEAT_DISC * VOCAB                                # 6
DOUT = DOUT_C + DOUT_D                                        # 9

NEG_SLOPE = 0.01
SELU_ALPHA = 1.6732632423543772848170429916717
SELU_SCALE = 1.0507009873554804934193349852946

TARGET_ROWS = 512          # rows (= batch_block * padded num_points) per grid step

KPARAM_ORDER = [
    "we", "be", "wp_t", "wp_c", "wp_d", "pl0_b",
    "pg0_wms", "pg0_wctx", "pg0_b", "pg1_w", "pg1_b", "pg2_w", "pg2_b",
    "lg1_wms", "lg1_wg", "lg1_wctx", "lg1_b", "lg2_w", "lg2_b",
    "ll1_wh", "ll1_wg", "ll1_wctx", "ll1_b", "ll2_w", "ll2_b",
    "out_w", "out_b", "d1_w", "d1_b", "d2_w", "d2_b",
]


def _leaky(x):
    return jnp.where(x >= 0, x, NEG_SLOPE * x)


def _selu(x):
    return SELU_SCALE * jnp.where(
        x > 0, x, SELU_ALPHA * (jnp.exp(jnp.minimum(x, 0.0)) - 1.0))


def sinusoidal_time_emb(t):
    half = DIM_TIME_EMB // 2
    freqs = jnp.exp(-math.log(10000.0) * jnp.arange(half, dtype=jnp.float32) / half)
    ts = t.reshape(-1).astype(jnp.float32)                       # (B,)
    args = ts[:, None] * freqs[None, :]                          # (B, half)
    return jnp.concatenate([jnp.cos(args), jnp.sin(args)], axis=-1)


# -------- Pallas kernel: embeddings + full EPiC network for one batch block --------
def epic_kernel(x_ref, demb_ref, temb_ref, ctx_ref, mask_ref,
                we, be, wp_t, wp_c, wp_d, pl0_b,
                pg0_wms, pg0_wctx, pg0_b, pg1_w, pg1_b, pg2_w, pg2_b,
                lg1_wms, lg1_wg, lg1_wctx, lg1_b, lg2_w, lg2_b,
                ll1_wh, ll1_wg, ll1_wctx, ll1_b, ll2_w, ll2_b,
                out_w, out_b, d1_w, d1_b, d2_w, d2_b,
                out_ref):
    BB, N, _ = x_ref.shape                     # batch block, padded particles
    R = BB * N
    mm = functools.partial(jnp.dot, preferred_element_type=jnp.float32)

    x = x_ref[...].reshape(R, DIM_FEAT_CONT)          # (R, 3)
    de = demb_ref[...].reshape(R, DIM_FEAT_DISC_EMB)  # (R, 4)
    tb = temb_ref[...].reshape(BB, DIM_TIME_EMB)      # (BB, 8)
    ctx = ctx_ref[...].reshape(BB, DCTX)              # (BB, 14)
    mask3 = mask_ref[...]                             # (BB, N, 1)
    mrow = mask3.reshape(R, 1)                        # (R, 1)

    def bc_rows(v):  # (BB, K) -> (R, K): per-batch vector broadcast to its particles
        return jnp.broadcast_to(
            v[:, None, :], (BB, N, v.shape[-1])).reshape(R, v.shape[-1])

    def pool_sum(hh):  # (R, HL) -> (BB, HL): masked sum over particles
        return jnp.sum((hh * mrow).reshape(BB, N, HL), axis=1)

    # ---- InputEmbeddings (continuous linear emb) fused with EPiC_Projection.local_0 ----
    # feats = cat([t_emb, x@We+be, disc_emb]) * mask ; h = leaky(feats @ W + b)
    #       = leaky(mask * (t_emb@Wt + cemb@Wc + demb@Wd) + b)
    cemb = mm(x, we[...]) + be[...]                                    # (R, 8)
    lin = mm(cemb, wp_c[...]) + mm(de, wp_d[...]) + bc_rows(mm(tb, wp_t[...]))
    h = _leaky(mrow * lin + pl0_b[...])                                # (R, HL)

    msum = jnp.sum(mask3, axis=1)                                      # (BB, 1)
    inv = 1.0 / msum

    # ---- projection global path: global_0/1/2 on [mean, sum, ctx] ----
    s = pool_sum(h)                                                    # (BB, HL)
    sm = mm(s, pg0_wms[...])                                           # (BB, 2*HL)
    g = _leaky(sm[:, :HL] * inv + sm[:, HL:]
               + mm(ctx, pg0_wctx[...]) + pg0_b[...])                  # (BB, HL)
    g = _leaky(mm(g, pg1_w[...]) + pg1_b[...])                         # (BB, HL)
    g = _leaky(mm(g, pg2_w[...]) + pg2_b[...])                         # (BB, HG)
    h = h * mrow

    # ---- EPiC_layer blocks (no skip connections), statically unrolled ----
    for l in range(NUM_BLOCKS):
        s = pool_sum(h)                                                # (BB, HL)
        sm = mm(s, lg1_wms[l])                                         # (BB, 2*HL)
        g1 = _leaky(sm[:, :HL] * inv + sm[:, HL:]
                    + mm(g, lg1_wg[l]) + mm(ctx, lg1_wctx[l]) + lg1_b[l])
        g = _leaky(mm(g1, lg2_w[l]) + lg2_b[l] + g)                    # (BB, HG)

        gc = mm(g, ll1_wg[l]) + mm(ctx, ll1_wctx[l]) + ll1_b[l]        # (BB, HL)
        h1 = _leaky(mm(h, ll1_wh[l]) + bc_rows(gc))                    # (R, HL)
        h = _leaky(mm(h1, ll2_w[l]) + ll2_b[l] + h)                    # (R, HL)
        h = h * mrow

    # ---- fused output head (continuous | discrete) + discrete MLP head ----
    out = (mm(h, out_w[...]) + out_b[...]) * mrow                      # (R, 9)
    z = mm(out[:, DOUT_C:], d1_w[...]) + d1_b[...]
    z = _selu(z)
    z = mm(z, d2_w[...]) + d2_b[...]                                   # (R, 6)
    res = jnp.concatenate([out[:, :DOUT_C], z], axis=-1)               # (R, 9)
    out_ref[...] = res.reshape(BB, N, DOUT)


def _const_spec(w):
    nd = w.ndim
    return pl.BlockSpec(w.shape, lambda b, _nd=nd: (0,) * _nd)


def epic_forward(kparams, x, disc_emb, t_emb, context, mask):
    """x (B,N,3), disc_emb (B,N,4), t_emb (B,8), context (B,14), mask (B,N,1)."""
    B, N, _ = x.shape

    # pad particles to a multiple of 8 (sublane tile) and pick the batch block
    n_pad = ((N + 7) // 8) * 8
    bblk = max(1, min(B, max(1, TARGET_ROWS // n_pad)))
    if B >= 2:
        bblk = min(bblk, (B + 1) // 2)     # keep >=2 parallel grid steps (dual-TC)
    b_pad = ((B + bblk - 1) // bblk) * bblk

    pad_b, pad_n = b_pad - B, n_pad - N
    x_p = jnp.pad(x, ((0, pad_b), (0, pad_n), (0, 0)))
    de_p = jnp.pad(disc_emb, ((0, pad_b), (0, pad_n), (0, 0)))
    mk_p = jnp.pad(mask, ((0, pad_b), (0, pad_n), (0, 0)))
    tb_p = jnp.pad(t_emb, ((0, pad_b), (0, 0)))[:, None, :]            # (B_pad,1,8)
    cx_p = jnp.pad(context, ((0, pad_b), (0, 0)))[:, None, :]          # (B_pad,1,14)

    weights = [kparams[name] for name in KPARAM_ORDER]
    grid = (b_pad // bblk,)
    bmap = lambda b: (b, 0, 0)

    in_specs = [
        pl.BlockSpec((bblk, n_pad, DIM_FEAT_CONT), bmap),
        pl.BlockSpec((bblk, n_pad, DIM_FEAT_DISC_EMB), bmap),
        pl.BlockSpec((bblk, 1, DIM_TIME_EMB), bmap),
        pl.BlockSpec((bblk, 1, DCTX), bmap),
        pl.BlockSpec((bblk, n_pad, 1), bmap),
    ] + [_const_spec(w) for w in weights]
    out_specs = pl.BlockSpec((bblk, n_pad, DOUT), bmap)
    out_shape = jax.ShapeDtypeStruct((b_pad, n_pad, DOUT), jnp.float32)

    # advisory cost estimate so XLA can overlap the surrounding glue
    rows = b_pad * n_pad
    flops = 2 * rows * (DIM_FEAT_CONT * DIM_FEAT_CONT_EMB
                        + (DIM_FEAT_CONT_EMB + DIM_FEAT_DISC_EMB) * HL
                        + NUM_BLOCKS * 2 * HL * HL
                        + HL * DOUT + 2 * DOUT_D * DOUT_D)
    flops += 2 * b_pad * (DIM_TIME_EMB * HL + 2 * HL * HL + DCTX * HL + HL * HL
                          + HL * HG
                          + NUM_BLOCKS * (2 * HL * HL + HG * HL + 2 * DCTX * HL
                                          + HL * HG + HG * HL))
    transc = rows * DOUT_D
    weight_bytes = sum(int(w.size) for w in weights) * 4
    io_bytes = 4 * (int(x_p.size) + int(de_p.size) + int(tb_p.size)
                    + int(cx_p.size) + int(mk_p.size) + rows * DOUT)
    cost = pl.CostEstimate(flops=int(flops), transcendentals=int(transc),
                           bytes_accessed=int(io_bytes + weight_bytes))

    out = pl.pallas_call(
        epic_kernel,
        grid=grid,
        in_specs=in_specs,
        out_specs=out_specs,
        out_shape=out_shape,
        compiler_params=pltpu.CompilerParams(
            dimension_semantics=("parallel",)),
        cost_estimate=cost,
    )(x_p, de_p, tb_p, cx_p, mk_p, *weights)

    out = out[:B, :N]
    return out[..., :DOUT_C], out[..., DOUT_C:]


# ---------------- wrapper-side weight repacking (pure reshuffles, done once) -------
def repack_params(p):
    kp = {}
    kp["we"] = p["emb_cont_w"]                          # (3, 8)
    kp["be"] = p["emb_cont_b"][None, :]                 # (1, 8)
    w = p["pl0_w"]                                      # (20, HL)
    kp["wp_t"] = w[:DIM_TIME_EMB]
    kp["wp_c"] = w[DIM_TIME_EMB:DIM_TIME_EMB + DIM_FEAT_CONT_EMB]
    kp["wp_d"] = w[DIM_TIME_EMB + DIM_FEAT_CONT_EMB:]
    kp["pl0_b"] = p["pl0_b"]
    w = p["pg0_w"]                                      # (2HL+DCTX, HL)
    kp["pg0_wms"] = jnp.concatenate([w[:HL], w[HL:2 * HL]], axis=1)    # (HL, 2HL)
    kp["pg0_wctx"] = w[2 * HL:]
    kp["pg0_b"] = p["pg0_b"]
    kp["pg1_w"], kp["pg1_b"] = p["pg1_w"], p["pg1_b"]
    kp["pg2_w"], kp["pg2_b"] = p["pg2_w"], p["pg2_b"]
    w = p["lg1_w"]                                      # (L, 2HL+HG+DCTX, HL)
    kp["lg1_wms"] = jnp.concatenate([w[:, :HL], w[:, HL:2 * HL]], axis=2)
    kp["lg1_wg"] = w[:, 2 * HL:2 * HL + HG]
    kp["lg1_wctx"] = w[:, 2 * HL + HG:]
    kp["lg1_b"] = p["lg1_b"]
    kp["lg2_w"], kp["lg2_b"] = p["lg2_w"], p["lg2_b"]
    w = p["ll1_w"]                                      # (L, HL+HG+DCTX, HL)
    kp["ll1_wh"] = w[:, :HL]
    kp["ll1_wg"] = w[:, HL:HL + HG]
    kp["ll1_wctx"] = w[:, HL + HG:]
    kp["ll1_b"] = p["ll1_b"]
    kp["ll2_w"], kp["ll2_b"] = p["ll2_w"], p["ll2_b"]
    kp["out_w"] = jnp.concatenate([p["oc_w"], p["od_w"]], axis=1)      # (HL, 9)
    kp["out_b"] = jnp.concatenate([p["oc_b"], p["od_b"]], axis=1)      # (1, 9)
    kp["d1_w"], kp["d1_b"] = p["d1_w"], p["d1_b"]
    kp["d2_w"], kp["d2_b"] = p["d2_w"], p["d2_b"]
    return kp


# ---------------- full MultiModalEPiC forward ----------------
def multimodal_epic_forward(params, t, x, k, mask, ctx_cont):
    """t (B,1), x (B,N,3), k (B,N,1) int, mask (B,N,1), ctx_cont (B,4)."""
    t_emb = sinusoidal_time_emb(t)                                     # (B, 8)
    disc_emb = jnp.take(params["emb_disc_tab"], k[..., 0], axis=0)     # (B, N, 4)
    ctx_emb = ctx_cont @ params["emb_ctx_w"] + params["emb_ctx_b"]     # (B, 6)
    context = jnp.concatenate([t_emb, ctx_emb], axis=-1)               # (B, 14)
    cont, disc = epic_forward(repack_params(params), x, disc_emb,
                              t_emb, context, mask)
    absorbing_head = mask
    return cont, disc, absorbing_head


# ---------------- pure-JAX reference for validation ----------------
def input_embeddings_ref(params, t, x, k, mask, ctx_cont):
    t_emb = sinusoidal_time_emb(t)
    B, N, _ = x.shape
    t_emb_local = jnp.broadcast_to(t_emb[:, None, :], (B, N, DIM_TIME_EMB))
    cont_emb = x @ params["emb_cont_w"] + params["emb_cont_b"]
    disc_emb = jnp.take(params["emb_disc_tab"], k[..., 0], axis=0)
    feats = jnp.concatenate([t_emb_local, cont_emb, disc_emb], axis=-1) * mask
    ctx_emb = ctx_cont @ params["emb_ctx_w"] + params["emb_ctx_b"]
    context = jnp.concatenate([t_emb, ctx_emb], axis=-1)
    return feats, context


def epic_ref(params, feats, ctx, mask):
    h = _leaky(feats @ params["pl0_w"] + params["pl0_b"])
    msum = jnp.sum(mask, axis=1)                                 # (B,1)
    x_sum = jnp.sum(h * mask, axis=1)
    x_mean = x_sum / msum
    pool = jnp.concatenate([x_mean, x_sum, ctx], axis=-1)
    g = _leaky(pool @ params["pg0_w"] + params["pg0_b"][0])
    g = _leaky(g @ params["pg1_w"] + params["pg1_b"][0])
    g = _leaky(g @ params["pg2_w"] + params["pg2_b"][0])
    h = h * mask
    B, N, _ = h.shape
    for l in range(NUM_BLOCKS):
        s = jnp.sum(h * mask, axis=1)
        m = s / msum
        pool = jnp.concatenate([m, s, g, ctx], axis=-1)
        g1 = _leaky(pool @ params["lg1_w"][l] + params["lg1_b"][l, 0])
        g = _leaky(g1 @ params["lg2_w"][l] + params["lg2_b"][l, 0] + g)
        loc = jnp.concatenate(
            [h,
             jnp.broadcast_to(g[:, None, :], (B, N, HG)),
             jnp.broadcast_to(ctx[:, None, :], (B, N, DCTX))], axis=-1)
        h1 = _leaky(loc @ params["ll1_w"][l] + params["ll1_b"][l, 0])
        h = _leaky(h1 @ params["ll2_w"][l] + params["ll2_b"][l, 0] + h)
        h = h * mask
    cont = (h @ params["oc_w"] + params["oc_b"][0]) * mask
    disc = (h @ params["od_w"] + params["od_b"][0]) * mask
    z = disc @ params["d1_w"] + params["d1_b"][0]
    z = _selu(z)
    z = z @ params["d2_w"] + params["d2_b"][0]
    return cont, z


# ---------------- deterministic parameter init ----------------
def init_params(key):
    keys = jax.random.split(key, 40)
    counter = {"i": 0}

    def w(shape):
        kk = keys[counter["i"]]
        counter["i"] += 1
        return jax.random.normal(kk, shape, jnp.float32) * 0.1

    p = {}
    # InputEmbeddings
    p["emb_cont_w"] = w((DIM_FEAT_CONT, DIM_FEAT_CONT_EMB))
    p["emb_cont_b"] = w((DIM_FEAT_CONT_EMB,))
    p["emb_disc_tab"] = w((VOCAB, DIM_FEAT_DISC_EMB))
    p["emb_ctx_w"] = w((DIM_CTX_CONT, DIM_CTX_CONT_EMB))
    p["emb_ctx_b"] = w((DIM_CTX_CONT_EMB,))
    # EPiC_Projection
    p["pl0_w"] = w((DIN, HL));                 p["pl0_b"] = w((1, HL))
    p["pg0_w"] = w((2 * HL + DCTX, HL));       p["pg0_b"] = w((1, HL))
    p["pg1_w"] = w((HL, HL));                  p["pg1_b"] = w((1, HL))
    p["pg2_w"] = w((HL, HG));                  p["pg2_b"] = w((1, HG))
    # EPiC_layer blocks (stacked over NUM_BLOCKS)
    p["lg1_w"] = w((NUM_BLOCKS, 2 * HL + HG + DCTX, HL))
    p["lg1_b"] = w((NUM_BLOCKS, 1, HL))
    p["lg2_w"] = w((NUM_BLOCKS, HL, HG));      p["lg2_b"] = w((NUM_BLOCKS, 1, HG))
    p["ll1_w"] = w((NUM_BLOCKS, HL + HG + DCTX, HL))
    p["ll1_b"] = w((NUM_BLOCKS, 1, HL))
    p["ll2_w"] = w((NUM_BLOCKS, HL, HL));      p["ll2_b"] = w((NUM_BLOCKS, 1, HL))
    # output layer (continuous / discrete column groups of one Linear(HL, 9))
    p["oc_w"] = w((HL, DOUT_C));               p["oc_b"] = w((1, DOUT_C))
    p["od_w"] = w((HL, DOUT_D));               p["od_b"] = w((1, DOUT_D))
    # discrete head MLP
    p["d1_w"] = w((DOUT_D, DOUT_D));           p["d1_b"] = w((1, DOUT_D))
    p["d2_w"] = w((DOUT_D, DOUT_D));           p["d2_b"] = w((1, DOUT_D))
    return p


if __name__ == "__main__":
    key = jax.random.PRNGKey(0)
    kp, kt, kx, kk, kc = jax.random.split(key, 5)
    params = init_params(kp)

    B, N = 2, 8
    t = jax.random.uniform(kt, (B, 1), jnp.float32)
    x = jax.random.normal(kx, (B, N, DIM_FEAT_CONT), jnp.float32)
    k = jax.random.randint(kk, (B, N, DIM_FEAT_DISC), 0, VOCAB)
    ctx_cont = jax.random.normal(kc, (B, DIM_CTX_CONT), jnp.float32)
    lens = jnp.array([N, N - 3])
    mask = (jnp.arange(N)[None, :] < lens[:, None]).astype(jnp.float32)[..., None]

    fwd = jax.jit(multimodal_epic_forward)
    cont, disc, absorbing = fwd(params, t, x, k, mask, ctx_cont)
    jax.block_until_ready((cont, disc, absorbing))

    # validate against pure-JAX reference (original, unpacked weights)
    feats, context = input_embeddings_ref(params, t, x, k, mask, ctx_cont)
    ref_cont, ref_disc = epic_ref(params, feats, context, mask)
    assert cont.shape == (B, N, DOUT_C) and disc.shape == (B, N, DOUT_D)
    err_c = np.max(np.abs(np.asarray(cont) - np.asarray(ref_cont)))
    err_d = np.max(np.abs(np.asarray(disc) - np.asarray(ref_disc)))
    assert np.allclose(np.asarray(cont), np.asarray(ref_cont),
                       atol=1e-3, rtol=1e-3), err_c
    assert np.allclose(np.asarray(disc), np.asarray(ref_disc),
                       atol=1e-3, rtol=1e-3), err_d

    print("KERNEL_OK")
</pallas_src>

<mosaic_0001>
module attributes {stable_mosaic.version = 11 : i64} {
  func.func @epic_kernel(%arg0: i32, %arg1: memref<1x8x3xf32, #tpu.memory_space<vmem>>, %arg2: memref<1x8x4xf32, #tpu.memory_space<vmem>>, %arg3: memref<1x1x8xf32, #tpu.memory_space<vmem>>, %arg4: memref<1x1x14xf32, #tpu.memory_space<vmem>>, %arg5: memref<1x8x1xf32, #tpu.memory_space<vmem>>, %arg6: memref<3x8xf32, #tpu.memory_space<vmem>>, %arg7: memref<1x8xf32, #tpu.memory_space<vmem>>, %arg8: memref<8x32xf32, #tpu.memory_space<vmem>>, %arg9: memref<8x32xf32, #tpu.memory_space<vmem>>, %arg10: memref<4x32xf32, #tpu.memory_space<vmem>>, %arg11: memref<1x32xf32, #tpu.memory_space<vmem>>, %arg12: memref<32x64xf32, #tpu.memory_space<vmem>>, %arg13: memref<14x32xf32, #tpu.memory_space<vmem>>, %arg14: memref<1x32xf32, #tpu.memory_space<vmem>>, %arg15: memref<32x32xf32, #tpu.memory_space<vmem>>, %arg16: memref<1x32xf32, #tpu.memory_space<vmem>>, %arg17: memref<32x8xf32, #tpu.memory_space<vmem>>, %arg18: memref<1x8xf32, #tpu.memory_space<vmem>>, %arg19: memref<2x32x64xf32, #tpu.memory_space<vmem>>, %arg20: memref<2x8x32xf32, #tpu.memory_space<vmem>>, %arg21: memref<2x14x32xf32, #tpu.memory_space<vmem>>, %arg22: memref<2x1x32xf32, #tpu.memory_space<vmem>>, %arg23: memref<2x32x8xf32, #tpu.memory_space<vmem>>, %arg24: memref<2x1x8xf32, #tpu.memory_space<vmem>>, %arg25: memref<2x32x32xf32, #tpu.memory_space<vmem>>, %arg26: memref<2x8x32xf32, #tpu.memory_space<vmem>>, %arg27: memref<2x14x32xf32, #tpu.memory_space<vmem>>, %arg28: memref<2x1x32xf32, #tpu.memory_space<vmem>>, %arg29: memref<2x32x32xf32, #tpu.memory_space<vmem>>, %arg30: memref<2x1x32xf32, #tpu.memory_space<vmem>>, %arg31: memref<32x9xf32, #tpu.memory_space<vmem>>, %arg32: memref<1x9xf32, #tpu.memory_space<vmem>>, %arg33: memref<6x6xf32, #tpu.memory_space<vmem>>, %arg34: memref<1x6xf32, #tpu.memory_space<vmem>>, %arg35: memref<6x6xf32, #tpu.memory_space<vmem>>, %arg36: memref<1x6xf32, #tpu.memory_space<vmem>>, %arg37: memref<1x8x9xf32, #tpu.memory_space<vmem>>) attributes {dimension_semantics = [#tpu.dimension_semantics<parallel>], iteration_bounds = array<i64: 2>, scalar_prefetch = 0 : i64, scratch_operands = 0 : i64, tpu.core_type = #tpu.core_type<tc>, window_params = [{transform_indices = @transform_0, window_bounds = array<i64: 1, 8, 3>}, {transform_indices = @transform_1, window_bounds = array<i64: 1, 8, 4>}, {transform_indices = @transform_2, window_bounds = array<i64: 1, 1, 8>}, {transform_indices = @transform_3, window_bounds = array<i64: 1, 1, 14>}, {transform_indices = @transform_4, window_bounds = array<i64: 1, 8, 1>}, {pipeline_mode = #tpu.pipeline_mode<synchronous>, transform_indices = @transform_5, window_bounds = array<i64: 3, 8>}, {pipeline_mode = #tpu.pipeline_mode<synchronous>, transform_indices = @transform_6, window_bounds = array<i64: 1, 8>}, {pipeline_mode = #tpu.pipeline_mode<synchronous>, transform_indices = @transform_7, window_bounds = array<i64: 8, 32>}, {pipeline_mode = #tpu.pipeline_mode<synchronous>, transform_indices = @transform_8, window_bounds = array<i64: 8, 32>}, {pipeline_mode = #tpu.pipeline_mode<synchronous>, transform_indices = @transform_9, window_bounds = array<i64: 4, 32>}, {pipeline_mode = #tpu.pipeline_mode<synchronous>, transform_indices = @transform_10, window_bounds = array<i64: 1, 32>}, {pipeline_mode = #tpu.pipeline_mode<synchronous>, transform_indices = @transform_11, window_bounds = array<i64: 32, 64>}, {pipeline_mode = #tpu.pipeline_mode<synchronous>, transform_indices = @transform_12, window_bounds = array<i64: 14, 32>}, {pipeline_mode = #tpu.pipeline_mode<synchronous>, transform_indices = @transform_13, window_bounds = array<i64: 1, 32>}, {pipeline_mode = #tpu.pipeline_mode<synchronous>, transform_indices = @transform_14, window_bounds = array<i64: 32, 32>}, {pipeline_mode = #tpu.pipeline_mode<synchronous>, transform_indices = @transform_15, window_bounds = array<i64: 1, 32>}, {pipeline_mode = #tpu.pipeline_mode<synchronous>, transform_indices = @transform_16, window_bounds = array<i64: 32, 8>}, {pipeline_mode = #tpu.pipeline_mode<synchronous>, transform_indices = @transform_17, window_bounds = array<i64: 1, 8>}, {pipeline_mode = #tpu.pipeline_mode<synchronous>, transform_indices = @transform_18, window_bounds = array<i64: 2, 32, 64>}, {pipeline_mode = #tpu.pipeline_mode<synchronous>, transform_indices = @transform_19, window_bounds = array<i64: 2, 8, 32>}, {pipeline_mode = #tpu.pipeline_mode<synchronous>, transform_indices = @transform_20, window_bounds = array<i64: 2, 14, 32>}, {pipeline_mode = #tpu.pipeline_mode<synchronous>, transform_indices = @transform_21, window_bounds = array<i64: 2, 1, 32>}, {pipeline_mode = #tpu.pipeline_mode<synchronous>, transform_indices = @transform_22, window_bounds = array<i64: 2, 32, 8>}, {pipeline_mode = #tpu.pipeline_mode<synchronous>, transform_indices = @transform_23, window_bounds = array<i64: 2, 1, 8>}, {pipeline_mode = #tpu.pipeline_mode<synchronous>, transform_indices = @transform_24, window_bounds = array<i64: 2, 32, 32>}, {pipeline_mode = #tpu.pipeline_mode<synchronous>, transform_indices = @transform_25, window_bounds = array<i64: 2, 8, 32>}, {pipeline_mode = #tpu.pipeline_mode<synchronous>, transform_indices = @transform_26, window_bounds = array<i64: 2, 14, 32>}, {pipeline_mode = #tpu.pipeline_mode<synchronous>, transform_indices = @transform_27, window_bounds = array<i64: 2, 1, 32>}, {pipeline_mode = #tpu.pipeline_mode<synchronous>, transform_indices = @transform_28, window_bounds = array<i64: 2, 32, 32>}, {pipeline_mode = #tpu.pipeline_mode<synchronous>, transform_indices = @transform_29, window_bounds = array<i64: 2, 1, 32>}, {pipeline_mode = #tpu.pipeline_mode<synchronous>, transform_indices = @transform_30, window_bounds = array<i64: 32, 9>}, {pipeline_mode = #tpu.pipeline_mode<synchronous>, transform_indices = @transform_31, window_bounds = array<i64: 1, 9>}, {pipeline_mode = #tpu.pipeline_mode<synchronous>, transform_indices = @transform_32, window_bounds = array<i64: 6, 6>}, {pipeline_mode = #tpu.pipeline_mode<synchronous>, transform_indices = @transform_33, window_bounds = array<i64: 1, 6>}, {pipeline_mode = #tpu.pipeline_mode<synchronous>, transform_indices = @transform_34, window_bounds = array<i64: 6, 6>}, {pipeline_mode = #tpu.pipeline_mode<synchronous>, transform_indices = @transform_35, window_bounds = array<i64: 1, 6>}, {transform_indices = @transform_36, window_bounds = array<i64: 1, 8, 9>}]} {
    %c0 = arith.constant 0 : index
    %c0_0 = arith.constant 0 : index
    %c0_1 = arith.constant 0 : index
    %0 = vector.load %arg1[%c0, %c0_0, %c0_1] : memref<1x8x3xf32, #tpu.memory_space<vmem>>, vector<1x8x3xf32>
    %1 = vector.shape_cast %0 : vector<1x8x3xf32> to vector<8x3xf32>
    %c0_2 = arith.constant 0 : index
    %c0_3 = arith.constant 0 : index
    %c0_4 = arith.constant 0 : index
    %2 = vector.load %arg2[%c0_2, %c0_3, %c0_4] : memref<1x8x4xf32, #tpu.memory_space<vmem>>, vector<1x8x4xf32>
    %3 = vector.shape_cast %2 : vector<1x8x4xf32> to vector<8x4xf32>
    %c0_5 = arith.constant 0 : index
    %c0_6 = arith.constant 0 : index
    %c0_7 = arith.constant 0 : index
    %4 = vector.load %arg3[%c0_5, %c0_6, %c0_7] : memref<1x1x8xf32, #tpu.memory_space<vmem>>, vector<1x1x8xf32>
    %5 = vector.shape_cast %4 : vector<1x1x8xf32> to vector<1x8xf32>
    %c0_8 = arith.constant 0 : index
    %c0_9 = arith.constant 0 : index
    %c0_10 = arith.constant 0 : index
    %6 = vector.load %arg4[%c0_8, %c0_9, %c0_10] : memref<1x1x14xf32, #tpu.memory_space<vmem>>, vector<1x1x14xf32>
    %7 = vector.shape_cast %6 : vector<1x1x14xf32> to vector<1x14xf32>
    %c0_11 = arith.constant 0 : index
    %c0_12 = arith.constant 0 : index
    %c0_13 = arith.constant 0 : index
    %8 = vector.load %arg5[%c0_11, %c0_12, %c0_13] : memref<1x8x1xf32, #tpu.memory_space<vmem>>, vector<1x8x1xf32>
    %9 = vector.shape_cast %8 : vector<1x8x1xf32> to vector<8x1xf32>
    %c0_14 = arith.constant 0 : index
    %c0_15 = arith.constant 0 : index
    %10 = vector.load %arg6[%c0_14, %c0_15] : memref<3x8xf32, #tpu.memory_space<vmem>>, vector<3x8xf32>
    %cst = arith.constant dense<0.000000e+00> : vector<8x8xf32>
    %11 = tpu.matmul %1, %10, %cst {dimension_numbers = #tpu.dot_dimension_numbers<[1], [0], [0], [1], [0, 0, 1, 1], [], []>} : vector<8x3xf32>, vector<3x8xf32>, vector<8x8xf32> -> vector<8x8xf32>
    %c0_16 = arith.constant 0 : index
    %c0_17 = arith.constant 0 : index
    %12 = vector.load %arg7[%c0_16, %c0_17] : memref<1x8xf32, #tpu.memory_space<vmem>>, vector<1x8xf32>
    %13 = vector.broadcast %12 : vector<1x8xf32> to vector<8x8xf32>
    %14 = arith.addf %11, %13 : vector<8x8xf32>
    %c0_18 = arith.constant 0 : index
    %c0_19 = arith.constant 0 : index
    %15 = vector.load %arg9[%c0_18, %c0_19] : memref<8x32xf32, #tpu.memory_space<vmem>>, vector<8x32xf32>
    %cst_20 = arith.constant dense<0.000000e+00> : vector<8x32xf32>
    %16 = tpu.matmul %14, %15, %cst_20 {dimension_numbers = #tpu.dot_dimension_numbers<[1], [0], [0], [1], [0, 0, 1, 1], [], []>} : vector<8x8xf32>, vector<8x32xf32>, vector<8x32xf32> -> vector<8x32xf32>
    %c0_21 = arith.constant 0 : index
    %c0_22 = arith.constant 0 : index
    %17 = vector.load %arg10[%c0_21, %c0_22] : memref<4x32xf32, #tpu.memory_space<vmem>>, vector<4x32xf32>
    %cst_23 = arith.constant dense<0.000000e+00> : vector<8x32xf32>
    %18 = tpu.matmul %3, %17, %cst_23 {dimension_numbers = #tpu.dot_dimension_numbers<[1], [0], [0], [1], [0, 0, 1, 1], [], []>} : vector<8x4xf32>, vector<4x32xf32>, vector<8x32xf32> -> vector<8x32xf32>
    %19 = arith.addf %16, %18 : vector<8x32xf32>
    %c0_24 = arith.constant 0 : index
    %c0_25 = arith.constant 0 : index
    %20 = vector.load %arg8[%c0_24, %c0_25] : memref<8x32xf32, #tpu.memory_space<vmem>>, vector<8x32xf32>
    %cst_26 = arith.constant dense<0.000000e+00> : vector<1x32xf32>
    %21 = tpu.matmul %5, %20, %cst_26 {dimension_numbers = #tpu.dot_dimension_numbers<[1], [0], [0], [1], [0, 0, 1, 1], [], []>} : vector<1x8xf32>, vector<8x32xf32>, vector<1x32xf32> -> vector<1x32xf32>
    %22 = vector.shape_cast %21 : vector<1x32xf32> to vector<1x1x32xf32>
    %23 = vector.shape_cast %22 : vector<1x1x32xf32> to vector<1x1x32xf32>
    %24 = vector.broadcast %23 : vector<1x1x32xf32> to vector<1x8x32xf32>
    %25 = vector.shape_cast %24 : vector<1x8x32xf32> to vector<8x32xf32>
    %26 = arith.addf %19, %25 : vector<8x32xf32>
    %27 = vector.broadcast %9 : vector<8x1xf32> to vector<8x32xf32>
    %28 = arith.mulf %27, %26 : vector<8x32xf32>
    %c0_27 = arith.constant 0 : index
    %c0_28 = arith.constant 0 : index
    %29 = vector.load %arg11[%c0_27, %c0_28] : memref<1x32xf32, #tpu.memory_space<vmem>>, vector<1x32xf32>
    %30 = vector.broadcast %29 : vector<1x32xf32> to vector<8x32xf32>
    %31 = arith.addf %28, %30 : vector<8x32xf32>
    %cst_29 = arith.constant 0.000000e+00 : f32
    %32 = vector.broadcast %cst_29 : f32 to vector<8x32xf32>
    %33 = arith.cmpf oge, %31, %32 : vector<8x32xf32>
    %cst_30 = arith.constant 0.00999999977 : f32
    %34 = vector.broadcast %cst_30 : f32 to vector<8x32xf32>
    %35 = arith.mulf %34, %31 : vector<8x32xf32>
    %36 = arith.select %33, %31, %35 : vector<8x32xi1>, vector<8x32xf32>
    %cst_31 = arith.constant dense<0.000000e+00> : vector<1x1xf32>
    %37 = vector.multi_reduction <add>, %8, %cst_31 [1] : vector<1x8x1xf32> to vector<1x1xf32>
    %cst_32 = arith.constant 1.000000e+00 : f32
    %38 = vector.broadcast %cst_32 : f32 to vector<1x1xf32>
    %39 = arith.divf %38, %37 : vector<1x1xf32>
    %40 = vector.broadcast %9 : vector<8x1xf32> to vector<8x32xf32>
    %41 = arith.mulf %36, %40 : vector<8x32xf32>
    %42 = vector.shape_cast %41 : vector<8x32xf32> to vector<1x8x32xf32>
    %cst_33 = arith.constant dense<0.000000e+00> : vector<1x32xf32>
    %43 = vector.multi_reduction <add>, %42, %cst_33 [1] : vector<1x8x32xf32> to vector<1x32xf32>
    %c0_34 = arith.constant 0 : index
    %c0_35 = arith.constant 0 : index
    %44 = vector.load %arg12[%c0_34, %c0_35] : memref<32x64xf32, #tpu.memory_space<vmem>>, vector<32x64xf32>
    %cst_36 = arith.constant dense<0.000000e+00> : vector<1x64xf32>
    %45 = tpu.matmul %43, %44, %cst_36 {dimension_numbers = #tpu.dot_dimension_numbers<[1], [0], [0], [1], [0, 0, 1, 1], [], []>} : vector<1x32xf32>, vector<32x64xf32>, vector<1x64xf32> -> vector<1x64xf32>
    %46 = vector.extract_strided_slice %45 {offsets = [0, 0], sizes = [1, 32], strides = [1, 1]} : vector<1x64xf32> to vector<1x32xf32>
    %47 = vector.broadcast %39 : vector<1x1xf32> to vector<1x32xf32>
    %48 = arith.mulf %46, %47 : vector<1x32xf32>
    %49 = vector.extract_strided_slice %45 {offsets = [0, 32], sizes = [1, 32], strides = [1, 1]} : vector<1x64xf32> to vector<1x32xf32>
    %50 = arith.addf %48, %49 : vector<1x32xf32>
    %c0_37 = arith.constant 0 : index
    %c0_38 = arith.constant 0 : index
    %51 = vector.load %arg13[%c0_37, %c0_38] : memref<14x32xf32, #tpu.memory_space<vmem>>, vector<14x32xf32>
    %cst_39 = arith.constant dense<0.000000e+00> : vector<1x32xf32>
    %52 = tpu.matmul %7, %51, %cst_39 {dimension_numbers = #tpu.dot_dimension_numbers<[1], [0], [0], [1], [0, 0, 1, 1], [], []>} : vector<1x14xf32>, vector<14x32xf32>, vector<1x32xf32> -> vector<1x32xf32>
    %53 = arith.addf %50, %52 : vector<1x32xf32>
    %c0_40 = arith.constant 0 : index
    %c0_41 = arith.constant 0 : index
    %54 = vector.load %arg14[%c0_40, %c0_41] : memref<1x32xf32, #tpu.memory_space<vmem>>, vector<1x32xf32>
    %55 = arith.addf %53, %54 : vector<1x32xf32>
    %cst_42 = arith.constant 0.000000e+00 : f32
    %56 = vector.broadcast %cst_42 : f32 to vector<1x32xf32>
    %57 = arith.cmpf oge, %55, %56 : vector<1x32xf32>
    %cst_43 = arith.constant 0.00999999977 : f32
    %58 = vector.broadcast %cst_43 : f32 to vector<1x32xf32>
    %59 = arith.mulf %58, %55 : vector<1x32xf32>
    %60 = arith.select %57, %55, %59 : vector<1x32xi1>, vector<1x32xf32>
    %c0_44 = arith.constant 0 : index
    %c0_45 = arith.constant 0 : index
    %61 = vector.load %arg15[%c0_44, %c0_45] : memref<32x32xf32, #tpu.memory_space<vmem>>, vector<32x32xf32>
    %cst_46 = arith.constant dense<0.000000e+00> : vector<1x32xf32>
    %62 = tpu.matmul %60, %61, %cst_46 {dimension_numbers = #tpu.dot_dimension_numbers<[1], [0], [0], [1], [0, 0, 1, 1], [], []>} : vector<1x32xf32>, vector<32x32xf32>, vector<1x32xf32> -> vector<1x32xf32>
    %c0_47 = arith.constant 0 : index
    %c0_48 = arith.constant 0 : index
    %63 = vector.load %arg16[%c0_47, %c0_48] : memref<1x32xf32, #tpu.memory_space<vmem>>, vector<1x32xf32>
    %64 = arith.addf %62, %63 : vector<1x32xf32>
    %cst_49 = arith.constant 0.000000e+00 : f32
    %65 = vector.broadcast %cst_49 : f32 to vector<1x32xf32>
    %66 = arith.cmpf oge, %64, %65 : vector<1x32xf32>
    %cst_50 = arith.constant 0.00999999977 : f32
    %67 = vector.broadcast %cst_50 : f32 to vector<1x32xf32>
    %68 = arith.mulf %67, %64 : vector<1x32xf32>
    %69 = arith.select %66, %64, %68 : vector<1x32xi1>, vector<1x32xf32>
    %c0_51 = arith.constant 0 : index
    %c0_52 = arith.constant 0 : index
    %70 = vector.load %arg17[%c0_51, %c0_52] : memref<32x8xf32, #tpu.memory_space<vmem>>, vector<32x8xf32>
    %cst_53 = arith.constant dense<0.000000e+00> : vector<1x8xf32>
    %71 = tpu.matmul %69, %70, %cst_53 {dimension_numbers = #tpu.dot_dimension_numbers<[1], [0], [0], [1], [0, 0, 1, 1], [], []>} : vector<1x32xf32>, vector<32x8xf32>, vector<1x8xf32> -> vector<1x8xf32>
    %c0_54 = arith.constant 0 : index
    %c0_55 = arith.constant 0 : index
    %72 = vector.load %arg18[%c0_54, %c0_55] : memref<1x8xf32, #tpu.memory_space<vmem>>, vector<1x8xf32>
    %73 = arith.addf %71, %72 : vector<1x8xf32>
    %cst_56 = arith.constant 0.000000e+00 : f32
    %74 = vector.broadcast %cst_56 : f32 to vector<1x8xf32>
    %75 = arith.cmpf oge, %73, %74 : vector<1x8xf32>
    %cst_57 = arith.constant 0.00999999977 : f32
    %76 = vector.broadcast %cst_57 : f32 to vector<1x8xf32>
    %77 = arith.mulf %76, %73 : vector<1x8xf32>
    %78 = arith.select %75, %73, %77 : vector<1x8xi1>, vector<1x8xf32>
    %79 = vector.broadcast %9 : vector<8x1xf32> to vector<8x32xf32>
    %80 = arith.mulf %36, %79 : vector<8x32xf32>
    %81 = vector.broadcast %9 : vector<8x1xf32> to vector<8x32xf32>
    %82 = arith.mulf %80, %81 : vector<8x32xf32>
    %83 = vector.shape_cast %82 : vector<8x32xf32> to vector<1x8x32xf32>
    %cst_58 = arith.constant dense<0.000000e+00> : vector<1x32xf32>
    %84 = vector.multi_reduction <add>, %83, %cst_58 [1] : vector<1x8x32xf32> to vector<1x32xf32>
    %c0_59 = arith.constant 0 : index
    %c0_60 = arith.constant 0 : index
    %c0_61 = arith.constant 0 : index
    %85 = vector.load %arg19[%c0_59, %c0_60, %c0_61] : memref<2x32x64xf32, #tpu.memory_space<vmem>>, vector<1x32x64xf32>
    %86 = vector.shape_cast %85 : vector<1x32x64xf32> to vector<32x64xf32>
    %cst_62 = arith.constant dense<0.000000e+00> : vector<1x64xf32>
    %87 = tpu.matmul %84, %86, %cst_62 {dimension_numbers = #tpu.dot_dimension_numbers<[1], [0], [0], [1], [0, 0, 1, 1], [], []>} : vector<1x32xf32>, vector<32x64xf32>, vector<1x64xf32> -> vector<1x64xf32>
    %88 = vector.extract_strided_slice %87 {offsets = [0, 0], sizes = [1, 32], strides = [1, 1]} : vector<1x64xf32> to vector<1x32xf32>
    %89 = vector.broadcast %39 : vector<1x1xf32> to vector<1x32xf32>
    %90 = arith.mulf %88, %89 : vector<1x32xf32>
    %91 = vector.extract_strided_slice %87 {offsets = [0, 32], sizes = [1, 32], strides = [1, 1]} : vector<1x64xf32> to vector<1x32xf32>
    %92 = arith.addf %90, %91 : vector<1x32xf32>
    %c0_63 = arith.constant 0 : index
    %c0_64 = arith.constant 0 : index
    %c0_65 = arith.constant 0 : index
    %93 = vector.load %arg20[%c0_63, %c0_64, %c0_65] : memref<2x8x32xf32, #tpu.memory_space<vmem>>, vector<1x8x32xf32>
    %94 = vector.shape_cast %93 : vector<1x8x32xf32> to vector<8x32xf32>
    %cst_66 = arith.constant dense<0.000000e+00> : vector<1x32xf32>
    %95 = tpu.matmul %78, %94, %cst_66 {dimension_numbers = #tpu.dot_dimension_numbers<[1], [0], [0], [1], [0, 0, 1, 1], [], []>} : vector<1x8xf32>, vector<8x32xf32>, vector<1x32xf32> -> vector<1x32xf32>
    %96 = arith.addf %92, %95 : vector<1x32xf32>
    %c0_67 = arith.constant 0 : index
    %c0_68 = arith.constant 0 : index
    %c0_69 = arith.constant 0 : index
    %97 = vector.load %arg21[%c0_67, %c0_68, %c0_69] : memref<2x14x32xf32, #tpu.memory_space<vmem>>, vector<1x14x32xf32>
    %98 = vector.shape_cast %97 : vector<1x14x32xf32> to vector<14x32xf32>
    %cst_70 = arith.constant dense<0.000000e+00> : vector<1x32xf32>
    %99 = tpu.matmul %7, %98, %cst_70 {dimension_numbers = #tpu.dot_dimension_numbers<[1], [0], [0], [1], [0, 0, 1, 1], [], []>} : vector<1x14xf32>, vector<14x32xf32>, vector<1x32xf32> -> vector<1x32xf32>
    %100 = arith.addf %96, %99 : vector<1x32xf32>
    %c0_71 = arith.constant 0 : index
    %c0_72 = arith.constant 0 : index
    %c0_73 = arith.constant 0 : index
    %101 = vector.load %arg22[%c0_71, %c0_72, %c0_73] : memref<2x1x32xf32, #tpu.memory_space<vmem>>, vector<1x1x32xf32>
    %102 = vector.shape_cast %101 : vector<1x1x32xf32> to vector<1x32xf32>
    %103 = arith.addf %100, %102 : vector<1x32xf32>
    %cst_74 = arith.constant 0.000000e+00 : f32
    %104 = vector.broadcast %cst_74 : f32 to vector<1x32xf32>
    %105 = arith.cmpf oge, %103, %104 : vector<1x32xf32>
    %cst_75 = arith.constant 0.00999999977 : f32
    %106 = vector.broadcast %cst_75 : f32 to vector<1x32xf32>
    %107 = arith.mulf %106, %103 : vector<1x32xf32>
    %108 = arith.select %105, %103, %107 : vector<1x32xi1>, vector<1x32xf32>
    %c0_76 = arith.constant 0 : index
    %c0_77 = arith.constant 0 : index
    %c0_78 = arith.constant 0 : index
    %109 = vector.load %arg23[%c0_76, %c0_77, %c0_78] : memref<2x32x8xf32, #tpu.memory_space<vmem>>, vector<1x32x8xf32>
    %110 = vector.shape_cast %109 : vector<1x32x8xf32> to vector<32x8xf32>
    %cst_79 = arith.constant dense<0.000000e+00> : vector<1x8xf32>
    %111 = tpu.matmul %108, %110, %cst_79 {dimension_numbers = #tpu.dot_dimension_numbers<[1], [0], [0], [1], [0, 0, 1, 1], [], []>} : vector<1x32xf32>, vector<32x8xf32>, vector<1x8xf32> -> vector<1x8xf32>
    %c0_80 = arith.constant 0 : index
    %c0_81 = arith.constant 0 : index
    %c0_82 = arith.constant 0 : index
    %112 = vector.load %arg24[%c0_80, %c0_81, %c0_82] : memref<2x1x8xf32, #tpu.memory_space<vmem>>, vector<1x1x8xf32>
    %113 = vector.shape_cast %112 : vector<1x1x8xf32> to vector<1x8xf32>
    %114 = arith.addf %111, %113 : vector<1x8xf32>
    %115 = arith.addf %114, %78 : vector<1x8xf32>
    %cst_83 = arith.constant 0.000000e+00 : f32
    %116 = vector.broadcast %cst_83 : f32 to vector<1x8xf32>
    %117 = arith.cmpf oge, %115, %116 : vector<1x8xf32>
    %cst_84 = arith.constant 0.00999999977 : f32
    %118 = vector.broadcast %cst_84 : f32 to vector<1x8xf32>
    %119 = arith.mulf %118, %115 : vector<1x8xf32>
    %120 = arith.select %117, %115, %119 : vector<1x8xi1>, vector<1x8xf32>
    %c0_85 = arith.constant 0 : index
    %c0_86 = arith.constant 0 : index
    %c0_87 = arith.constant 0 : index
    %121 = vector.load %arg26[%c0_85, %c0_86, %c0_87] : memref<2x8x32xf32, #tpu.memory_space<vmem>>, vector<1x8x32xf32>
    %122 = vector.shape_cast %121 : vector<1x8x32xf32> to vector<8x32xf32>
    %cst_88 = arith.constant dense<0.000000e+00> : vector<1x32xf32>
    %123 = tpu.matmul %120, %122, %cst_88 {dimension_numbers = #tpu.dot_dimension_numbers<[1], [0], [0], [1], [0, 0, 1, 1], [], []>} : vector<1x8xf32>, vector<8x32xf32>, vector<1x32xf32> -> vector<1x32xf32>
    %c0_89 = arith.constant 0 : index
    %c0_90 = arith.constant 0 : index
    %c0_91 = arith.constant 0 : index
    %124 = vector.load %arg27[%c0_89, %c0_90, %c0_91] : memref<2x14x32xf32, #tpu.memory_space<vmem>>, vector<1x14x32xf32>
    %125 = vector.shape_cast %124 : vector<1x14x32xf32> to vector<14x32xf32>
    %cst_92 = arith.constant dense<0.000000e+00> : vector<1x32xf32>
    %126 = tpu.matmul %7, %125, %cst_92 {dimension_numbers = #tpu.dot_dimension_numbers<[1], [0], [0], [1], [0, 0, 1, 1], [], []>} : vector<1x14xf32>, vector<14x32xf32>, vector<1x32xf32> -> vector<1x32xf32>
    %127 = arith.addf %123, %126 : vector<1x32xf32>
    %c0_93 = arith.constant 0 : index
    %c0_94 = arith.constant 0 : index
    %c0_95 = arith.constant 0 : index
    %128 = vector.load %arg28[%c0_93, %c0_94, %c0_95] : memref<2x1x32xf32, #tpu.memory_space<vmem>>, vector<1x1x32xf32>
    %129 = vector.shape_cast %128 : vector<1x1x32xf32> to vector<1x32xf32>
    %130 = arith.addf %127, %129 : vector<1x32xf32>
    %c0_96 = arith.constant 0 : index
    %c0_97 = arith.constant 0 : index
    %c0_98 = arith.constant 0 : index
    %131 = vector.load %arg25[%c0_96, %c0_97, %c0_98] : memref<2x32x32xf32, #tpu.memory_space<vmem>>, vector<1x32x32xf32>
    %132 = vector.shape_cast %131 : vector<1x32x32xf32> to vector<32x32xf32>
    %cst_99 = arith.constant dense<0.000000e+00> : vector<8x32xf32>
    %133 = tpu.matmul %80, %132, %cst_99 {dimension_numbers = #tpu.dot_dimension_numbers<[1], [0], [0], [1], [0, 0, 1, 1], [], []>} : vector<8x32xf32>, vector<32x32xf32>, vector<8x32xf32> -> vector<8x32xf32>
    %134 = vector.shape_cast %130 : vector<1x32xf32> to vector<1x1x32xf32>
    %135 = vector.shape_cast %134 : vector<1x1x32xf32> to vector<1x1x32xf32>
    %136 = vector.broadcast %135 : vector<1x1x32xf32> to vector<1x8x32xf32>
    %137 = vector.shape_cast %136 : vector<1x8x32xf32> to vector<8x32xf32>
    %138 = arith.addf %133, %137 : vector<8x32xf32>
    %cst_100 = arith.constant 0.000000e+00 : f32
    %139 = vector.broadcast %cst_100 : f32 to vector<8x32xf32>
    %140 = arith.cmpf oge, %138, %139 : vector<8x32xf32>
    %cst_101 = arith.constant 0.00999999977 : f32
    %141 = vector.broadcast %cst_101 : f32 to vector<8x32xf32>
    %142 = arith.mulf %141, %138 : vector<8x32xf32>
    %143 = arith.select %140, %138, %142 : vector<8x32xi1>, vector<8x32xf32>
    %c0_102 = arith.constant 0 : index
    %c0_103 = arith.constant 0 : index
    %c0_104 = arith.constant 0 : index
    %144 = vector.load %arg29[%c0_102, %c0_103, %c0_104] : memref<2x32x32xf32, #tpu.memory_space<vmem>>, vector<1x32x32xf32>
    %145 = vector.shape_cast %144 : vector<1x32x32xf32> to vector<32x32xf32>
    %cst_105 = arith.constant dense<0.000000e+00> : vector<8x32xf32>
    %146 = tpu.matmul %143, %145, %cst_105 {dimension_numbers = #tpu.dot_dimension_numbers<[1], [0], [0], [1], [0, 0, 1, 1], [], []>} : vector<8x32xf32>, vector<32x32xf32>, vector<8x32xf32> -> vector<8x32xf32>
    %c0_106 = arith.constant 0 : index
    %c0_107 = arith.constant 0 : index
    %c0_108 = arith.constant 0 : index
    %147 = vector.load %arg30[%c0_106, %c0_107, %c0_108] : memref<2x1x32xf32, #tpu.memory_space<vmem>>, vector<1x1x32xf32>
    %148 = vector.shape_cast %147 : vector<1x1x32xf32> to vector<1x32xf32>
    %149 = vector.broadcast %148 : vector<1x32xf32> to vector<8x32xf32>
    %150 = arith.addf %146, %149 : vector<8x32xf32>
    %151 = arith.addf %150, %80 : vector<8x32xf32>
    %cst_109 = arith.constant 0.000000e+00 : f32
    %152 = vector.broadcast %cst_109 : f32 to vector<8x32xf32>
    %153 = arith.cmpf oge, %151, %152 : vector<8x32xf32>
    %cst_110 = arith.constant 0.00999999977 : f32
    %154 = vector.broadcast %cst_110 : f32 to vector<8x32xf32>
    %155 = arith.mulf %154, %151 : vector<8x32xf32>
    %156 = arith.select %153, %151, %155 : vector<8x32xi1>, vector<8x32xf32>
    %157 = vector.broadcast %9 : vector<8x1xf32> to vector<8x32xf32>
    %158 = arith.mulf %156, %157 : vector<8x32xf32>
    %159 = vector.broadcast %9 : vector<8x1xf32> to vector<8x32xf32>
    %160 = arith.mulf %158, %159 : vector<8x32xf32>
    %161 = vector.shape_cast %160 : vector<8x32xf32> to vector<1x8x32xf32>
    %cst_111 = arith.constant dense<0.000000e+00> : vector<1x32xf32>
    %162 = vector.multi_reduction <add>, %161, %cst_111 [1] : vector<1x8x32xf32> to vector<1x32xf32>
    %c1 = arith.constant 1 : index
    %c0_112 = arith.constant 0 : index
    %c0_113 = arith.constant 0 : index
    %163 = vector.load %arg19[%c1, %c0_112, %c0_113] : memref<2x32x64xf32, #tpu.memory_space<vmem>>, vector<1x32x64xf32>
    %164 = vector.shape_cast %163 : vector<1x32x64xf32> to vector<32x64xf32>
    %cst_114 = arith.constant dense<0.000000e+00> : vector<1x64xf32>
    %165 = tpu.matmul %162, %164, %cst_114 {dimension_numbers = #tpu.dot_dimension_numbers<[1], [0], [0], [1], [0, 0, 1, 1], [], []>} : vector<1x32xf32>, vector<32x64xf32>, vector<1x64xf32> -> vector<1x64xf32>
    %166 = vector.extract_strided_slice %165 {offsets = [0, 0], sizes = [1, 32], strides = [1, 1]} : vector<1x64xf32> to vector<1x32xf32>
    %167 = vector.broadcast %39 : vector<1x1xf32> to vector<1x32xf32>
    %168 = arith.mulf %166, %167 : vector<1x32xf32>
    %169 = vector.extract_strided_slice %165 {offsets = [0, 32], sizes = [1, 32], strides = [1, 1]} : vector<1x64xf32> to vector<1x32xf32>
    %170 = arith.addf %168, %169 : vector<1x32xf32>
    %c1_115 = arith.constant 1 : index
    %c0_116 = arith.constant 0 : index
    %c0_117 = arith.constant 0 : index
    %171 = vector.load %arg20[%c1_115, %c0_116, %c0_117] : memref<2x8x32xf32, #tpu.memory_space<vmem>>, vector<1x8x32xf32>
    %172 = vector.shape_cast %171 : vector<1x8x32xf32> to vector<8x32xf32>
    %cst_118 = arith.constant dense<0.000000e+00> : vector<1x32xf32>
    %173 = tpu.matmul %120, %172, %cst_118 {dimension_numbers = #tpu.dot_dimension_numbers<[1], [0], [0], [1], [0, 0, 1, 1], [], []>} : vector<1x8xf32>, vector<8x32xf32>, vector<1x32xf32> -> vector<1x32xf32>
    %174 = arith.addf %170, %173 : vector<1x32xf32>
    %c1_119 = arith.constant 1 : index
    %c0_120 = arith.constant 0 : index
    %c0_121 = arith.constant 0 : index
    %175 = vector.load %arg21[%c1_119, %c0_120, %c0_121] : memref<2x14x32xf32, #tpu.memory_space<vmem>>, vector<1x14x32xf32>
    %176 = vector.shape_cast %175 : vector<1x14x32xf32> to vector<14x32xf32>
    %cst_122 = arith.constant dense<0.000000e+00> : vector<1x32xf32>
    %177 = tpu.matmul %7, %176, %cst_122 {dimension_numbers = #tpu.dot_dimension_numbers<[1], [0], [0], [1], [0, 0, 1, 1], [], []>} : vector<1x14xf32>, vector<14x32xf32>, vector<1x32xf32> -> vector<1x32xf32>
    %178 = arith.addf %174, %177 : vector<1x32xf32>
    %c1_123 = arith.constant 1 : index
    %c0_124 = arith.constant 0 : index
    %c0_125 = arith.constant 0 : index
    %179 = vector.load %arg22[%c1_123, %c0_124, %c0_125] : memref<2x1x32xf32, #tpu.memory_space<vmem>>, vector<1x1x32xf32>
    %180 = vector.shape_cast %179 : vector<1x1x32xf32> to vector<1x32xf32>
    %181 = arith.addf %178, %180 : vector<1x32xf32>
    %cst_126 = arith.constant 0.000000e+00 : f32
    %182 = vector.broadcast %cst_126 : f32 to vector<1x32xf32>
    %183 = arith.cmpf oge, %181, %182 : vector<1x32xf32>
    %cst_127 = arith.constant 0.00999999977 : f32
    %184 = vector.broadcast %cst_127 : f32 to vector<1x32xf32>
    %185 = arith.mulf %184, %181 : vector<1x32xf32>
    %186 = arith.select %183, %181, %185 : vector<1x32xi1>, vector<1x32xf32>
    %c1_128 = arith.constant 1 : index
    %c0_129 = arith.constant 0 : index
    %c0_130 = arith.constant 0 : index
    %187 = vector.load %arg23[%c1_128, %c0_129, %c0_130] : memref<2x32x8xf32, #tpu.memory_space<vmem>>, vector<1x32x8xf32>
    %188 = vector.shape_cast %187 : vector<1x32x8xf32> to vector<32x8xf32>
    %cst_131 = arith.constant dense<0.000000e+00> : vector<1x8xf32>
    %189 = tpu.matmul %186, %188, %cst_131 {dimension_numbers = #tpu.dot_dimension_numbers<[1], [0], [0], [1], [0, 0, 1, 1], [], []>} : vector<1x32xf32>, vector<32x8xf32>, vector<1x8xf32> -> vector<1x8xf32>
    %c1_132 = arith.constant 1 : index
    %c0_133 = arith.constant 0 : index
    %c0_134 = arith.constant 0 : index
    %190 = vector.load %arg24[%c1_132, %c0_133, %c0_134] : memref<2x1x8xf32, #tpu.memory_space<vmem>>, vector<1x1x8xf32>
    %191 = vector.shape_cast %190 : vector<1x1x8xf32> to vector<1x8xf32>
    %192 = arith.addf %189, %191 : vector<1x8xf32>
    %193 = arith.addf %192, %120 : vector<1x8xf32>
    %cst_135 = arith.constant 0.000000e+00 : f32
    %194 = vector.broadcast %cst_135 : f32 to vector<1x8xf32>
    %195 = arith.cmpf oge, %193, %194 : vector<1x8xf32>
    %cst_136 = arith.constant 0.00999999977 : f32
    %196 = vector.broadcast %cst_136 : f32 to vector<1x8xf32>
    %197 = arith.mulf %196, %193 : vector<1x8xf32>
    %198 = arith.select %195, %193, %197 : vector<1x8xi1>, vector<1x8xf32>
    %c1_137 = arith.constant 1 : index
    %c0_138 = arith.constant 0 : index
    %c0_139 = arith.constant 0 : index
    %199 = vector.load %arg26[%c1_137, %c0_138, %c0_139] : memref<2x8x32xf32, #tpu.memory_space<vmem>>, vector<1x8x32xf32>
    %200 = vector.shape_cast %199 : vector<1x8x32xf32> to vector<8x32xf32>
    %cst_140 = arith.constant dense<0.000000e+00> : vector<1x32xf32>
    %201 = tpu.matmul %198, %200, %cst_140 {dimension_numbers = #tpu.dot_dimension_numbers<[1], [0], [0], [1], [0, 0, 1, 1], [], []>} : vector<1x8xf32>, vector<8x32xf32>, vector<1x32xf32> -> vector<1x32xf32>
    %c1_141 = arith.constant 1 : index
    %c0_142 = arith.constant 0 : index
    %c0_143 = arith.constant 0 : index
    %202 = vector.load %arg27[%c1_141, %c0_142, %c0_143] : memref<2x14x32xf32, #tpu.memory_space<vmem>>, vector<1x14x32xf32>
    %203 = vector.shape_cast %202 : vector<1x14x32xf32> to vector<14x32xf32>
    %cst_144 = arith.constant dense<0.000000e+00> : vector<1x32xf32>
    %204 = tpu.matmul %7, %203, %cst_144 {dimension_numbers = #tpu.dot_dimension_numbers<[1], [0], [0], [1], [0, 0, 1, 1], [], []>} : vector<1x14xf32>, vector<14x32xf32>, vector<1x32xf32> -> vector<1x32xf32>
    %205 = arith.addf %201, %204 : vector<1x32xf32>
    %c1_145 = arith.constant 1 : index
    %c0_146 = arith.constant 0 : index
    %c0_147 = arith.constant 0 : index
    %206 = vector.load %arg28[%c1_145, %c0_146, %c0_147] : memref<2x1x32xf32, #tpu.memory_space<vmem>>, vector<1x1x32xf32>
    %207 = vector.shape_cast %206 : vector<1x1x32xf32> to vector<1x32xf32>
    %208 = arith.addf %205, %207 : vector<1x32xf32>
    %c1_148 = arith.constant 1 : index
    %c0_149 = arith.constant 0 : index
    %c0_150 = arith.constant 0 : index
    %209 = vector.load %arg25[%c1_148, %c0_149, %c0_150] : memref<2x32x32xf32, #tpu.memory_space<vmem>>, vector<1x32x32xf32>
    %210 = vector.shape_cast %209 : vector<1x32x32xf32> to vector<32x32xf32>
    %cst_151 = arith.constant dense<0.000000e+00> : vector<8x32xf32>
    %211 = tpu.matmul %158, %210, %cst_151 {dimension_numbers = #tpu.dot_dimension_numbers<[1], [0], [0], [1], [0, 0, 1, 1], [], []>} : vector<8x32xf32>, vector<32x32xf32>, vector<8x32xf32> -> vector<8x32xf32>
    %212 = vector.shape_cast %208 : vector<1x32xf32> to vector<1x1x32xf32>
    %213 = vector.shape_cast %212 : vector<1x1x32xf32> to vector<1x1x32xf32>
    %214 = vector.broadcast %213 : vector<1x1x32xf32> to vector<1x8x32xf32>
    %215 = vector.shape_cast %214 : vector<1x8x32xf32> to vector<8x32xf32>
    %216 = arith.addf %211, %215 : vector<8x32xf32>
    %cst_152 = arith.constant 0.000000e+00 : f32
    %217 = vector.broadcast %cst_152 : f32 to vector<8x32xf32>
    %218 = arith.cmpf oge, %216, %217 : vector<8x32xf32>
    %cst_153 = arith.constant 0.00999999977 : f32
    %219 = vector.broadcast %cst_153 : f32 to vector<8x32xf32>
    %220 = arith.mulf %219, %216 : vector<8x32xf32>
    %221 = arith.select %218, %216, %220 : vector<8x32xi1>, vector<8x32xf32>
    %c1_154 = arith.constant 1 : index
    %c0_155 = arith.constant 0 : index
    %c0_156 = arith.constant 0 : index
    %222 = vector.load %arg29[%c1_154, %c0_155, %c0_156] : memref<2x32x32xf32, #tpu.memory_space<vmem>>, vector<1x32x32xf32>
    %223 = vector.shape_cast %222 : vector<1x32x32xf32> to vector<32x32xf32>
    %cst_157 = arith.constant dense<0.000000e+00> : vector<8x32xf32>
    %224 = tpu.matmul %221, %223, %cst_157 {dimension_numbers = #tpu.dot_dimension_numbers<[1], [0], [0], [1], [0, 0, 1, 1], [], []>} : vector<8x32xf32>, vector<32x32xf32>, vector<8x32xf32> -> vector<8x32xf32>
    %c1_158 = arith.constant 1 : index
    %c0_159 = arith.constant 0 : index
    %c0_160 = arith.constant 0 : index
    %225 = vector.load %arg30[%c1_158, %c0_159, %c0_160] : memref<2x1x32xf32, #tpu.memory_space<vmem>>, vector<1x1x32xf32>
    %226 = vector.shape_cast %225 : vector<1x1x32xf32> to vector<1x32xf32>
    %227 = vector.broadcast %226 : vector<1x32xf32> to vector<8x32xf32>
    %228 = arith.addf %224, %227 : vector<8x32xf32>
    %229 = arith.addf %228, %158 : vector<8x32xf32>
    %cst_161 = arith.constant 0.000000e+00 : f32
    %230 = vector.broadcast %cst_161 : f32 to vector<8x32xf32>
    %231 = arith.cmpf oge, %229, %230 : vector<8x32xf32>
    %cst_162 = arith.constant 0.00999999977 : f32
    %232 = vector.broadcast %cst_162 : f32 to vector<8x32xf32>
    %233 = arith.mulf %232, %229 : vector<8x32xf32>
    %234 = arith.select %231, %229, %233 : vector<8x32xi1>, vector<8x32xf32>
    %235 = vector.broadcast %9 : vector<8x1xf32> to vector<8x32xf32>
    %236 = arith.mulf %234, %235 : vector<8x32xf32>
    %c0_163 = arith.constant 0 : index
    %c0_164 = arith.constant 0 : index
    %237 = vector.load %arg31[%c0_163, %c0_164] : memref<32x9xf32, #tpu.memory_space<vmem>>, vector<32x9xf32>
    %cst_165 = arith.constant dense<0.000000e+00> : vector<8x9xf32>
    %238 = tpu.matmul %236, %237, %cst_165 {dimension_numbers = #tpu.dot_dimension_numbers<[1], [0], [0], [1], [0, 0, 1, 1], [], []>} : vector<8x32xf32>, vector<32x9xf32>, vector<8x9xf32> -> vector<8x9xf32>
    %c0_166 = arith.constant 0 : index
    %c0_167 = arith.constant 0 : index
    %239 = vector.load %arg32[%c0_166, %c0_167] : memref<1x9xf32, #tpu.memory_space<vmem>>, vector<1x9xf32>
    %240 = vector.broadcast %239 : vector<1x9xf32> to vector<8x9xf32>
    %241 = arith.addf %238, %240 : vector<8x9xf32>
    %242 = vector.broadcast %9 : vector<8x1xf32> to vector<8x9xf32>
    %243 = arith.mulf %241, %242 : vector<8x9xf32>
    %244 = vector.extract_strided_slice %243 {offsets = [0, 3], sizes = [8, 6], strides = [1, 1]} : vector<8x9xf32> to vector<8x6xf32>
    %c0_168 = arith.constant 0 : index
    %c0_169 = arith.constant 0 : index
    %245 = vector.load %arg33[%c0_168, %c0_169] : memref<6x6xf32, #tpu.memory_space<vmem>>, vector<6x6xf32>
    %cst_170 = arith.constant dense<0.000000e+00> : vector<8x6xf32>
    %246 = tpu.matmul %244, %245, %cst_170 {dimension_numbers = #tpu.dot_dimension_numbers<[1], [0], [0], [1], [0, 0, 1, 1], [], []>} : vector<8x6xf32>, vector<6x6xf32>, vector<8x6xf32> -> vector<8x6xf32>
    %c0_171 = arith.constant 0 : index
    %c0_172 = arith.constant 0 : index
    %247 = vector.load %arg34[%c0_171, %c0_172] : memref<1x6xf32, #tpu.memory_space<vmem>>, vector<1x6xf32>
    %248 = vector.broadcast %247 : vector<1x6xf32> to vector<8x6xf32>
    %249 = arith.addf %246, %248 : vector<8x6xf32>
    %cst_173 = arith.constant 0.000000e+00 : f32
    %250 = vector.broadcast %cst_173 : f32 to vector<8x6xf32>
    %251 = arith.cmpf ogt, %249, %250 : vector<8x6xf32>
    %cst_174 = arith.constant 0.000000e+00 : f32
    %252 = vector.broadcast %cst_174 : f32 to vector<8x6xf32>
    %253 = arith.minimumf %249, %252 : vector<8x6xf32>
    %254 = math.exp %253 : vector<8x6xf32>
    %cst_175 = arith.constant 1.000000e+00 : f32
    %255 = vector.broadcast %cst_175 : f32 to vector<8x6xf32>
    %256 = arith.subf %254, %255 : vector<8x6xf32>
    %cst_176 = arith.constant 1.67326319 : f32
    %257 = vector.broadcast %cst_176 : f32 to vector<8x6xf32>
    %258 = arith.mulf %257, %256 : vector<8x6xf32>
    %259 = arith.select %251, %249, %258 : vector<8x6xi1>, vector<8x6xf32>
    %cst_177 = arith.constant 1.05070102 : f32
    %260 = vector.broadcast %cst_177 : f32 to vector<8x6xf32>
    %261 = arith.mulf %260, %259 : vector<8x6xf32>
    %c0_178 = arith.constant 0 : index
    %c0_179 = arith.constant 0 : index
    %262 = vector.load %arg35[%c0_178, %c0_179] : memref<6x6xf32, #tpu.memory_space<vmem>>, vector<6x6xf32>
    %cst_180 = arith.constant dense<0.000000e+00> : vector<8x6xf32>
    %263 = tpu.matmul %261, %262, %cst_180 {dimension_numbers = #tpu.dot_dimension_numbers<[1], [0], [0], [1], [0, 0, 1, 1], [], []>} : vector<8x6xf32>, vector<6x6xf32>, vector<8x6xf32> -> vector<8x6xf32>
    %c0_181 = arith.constant 0 : index
    %c0_182 = arith.constant 0 : index
    %264 = vector.load %arg36[%c0_181, %c0_182] : memref<1x6xf32, #tpu.memory_space<vmem>>, vector<1x6xf32>
    %265 = vector.broadcast %264 : vector<1x6xf32> to vector<8x6xf32>
    %266 = arith.addf %263, %265 : vector<8x6xf32>
    %267 = vector.extract_strided_slice %243 {offsets = [0, 0], sizes = [8, 3], strides = [1, 1]} : vector<8x9xf32> to vector<8x3xf32>
    %268 = tpu.concatenate %267, %266 in 1 : vector<8x3xf32>, vector<8x6xf32> -> vector<8x9xf32>
    %269 = vector.shape_cast %268 : vector<8x9xf32> to vector<1x8x9xf32>
    %c0_183 = arith.constant 0 : index
    %c0_184 = arith.constant 0 : index
    %c0_185 = arith.constant 0 : index
    %270 = vector.load %arg37[%c0_183, %c0_184, %c0_185] : memref<1x8x9xf32, #tpu.memory_space<vmem>>, vector<1x8x9xf32>
    tpu.vector_store %arg37[%c0_183, %c0_184, %c0_185], %269 {strides = array<i32>} : memref<1x8x9xf32, #tpu.memory_space<vmem>>, vector<1x8x9xf32>,
    return
  }
  func.func @transform_0(%arg0: i32) -> (i32, i32, i32) {
    %c0_i32 = arith.constant 0 : i32
    %c0_i32_0 = arith.constant 0 : i32
    %c0_i32_1 = arith.constant 0 : i32
    return %arg0, %c0_i32, %c0_i32_0 : i32, i32, i32
  }
  func.func @transform_1(%arg0: i32) -> (i32, i32, i32) {
    %c0_i32 = arith.constant 0 : i32
    %c0_i32_0 = arith.constant 0 : i32
    %c0_i32_1 = arith.constant 0 : i32
    return %arg0, %c0_i32, %c0_i32_0 : i32, i32, i32
  }
  func.func @transform_2(%arg0: i32) -> (i32, i32, i32) {
    %c0_i32 = arith.constant 0 : i32
    %c0_i32_0 = arith.constant 0 : i32
    %c0_i32_1 = arith.constant 0 : i32
    return %arg0, %c0_i32, %c0_i32_0 : i32, i32, i32
  }
  func.func @transform_3(%arg0: i32) -> (i32, i32, i32) {
    %c0_i32 = arith.constant 0 : i32
    %c0_i32_0 = arith.constant 0 : i32
    %c0_i32_1 = arith.constant 0 : i32
    return %arg0, %c0_i32, %c0_i32_0 : i32, i32, i32
  }
  func.func @transform_4(%arg0: i32) -> (i32, i32, i32) {
    %c0_i32 = arith.constant 0 : i32
    %c0_i32_0 = arith.constant 0 : i32
    %c0_i32_1 = arith.constant 0 : i32
    return %arg0, %c0_i32, %c0_i32_0 : i32, i32, i32
  }
  func.func @transform_5(%arg0: i32) -> (i32, i32) {
    %c0_i32 = arith.constant 0 : i32
    %c0_i32_0 = arith.constant 0 : i32
    %c0_i32_1 = arith.constant 0 : i32
    return %c0_i32, %c0_i32_0 : i32, i32
  }
  func.func @transform_6(%arg0: i32) -> (i32, i32) {
    %c0_i32 = arith.constant 0 : i32
    %c0_i32_0 = arith.constant 0 : i32
    %c0_i32_1 = arith.constant 0 : i32
    return %c0_i32, %c0_i32_0 : i32, i32
  }
  func.func @transform_7(%arg0: i32) -> (i32, i32) {
    %c0_i32 = arith.constant 0 : i32
    %c0_i32_0 = arith.constant 0 : i32
    %c0_i32_1 = arith.constant 0 : i32
    return %c0_i32, %c0_i32_0 : i32, i32
  }
  func.func @transform_8(%arg0: i32) -> (i32, i32) {
    %c0_i32 = arith.constant 0 : i32
    %c0_i32_0 = arith.constant 0 : i32
    %c0_i32_1 = arith.constant 0 : i32
    return %c0_i32, %c0_i32_0 : i32, i32
  }
  func.func @transform_9(%arg0: i32) -> (i32, i32) {
    %c0_i32 = arith.constant 0 : i32
    %c0_i32_0 = arith.constant 0 : i32
    %c0_i32_1 = arith.constant 0 : i32
    return %c0_i32, %c0_i32_0 : i32, i32
  }
  func.func @transform_10(%arg0: i32) -> (i32, i32) {
    %c0_i32 = arith.constant 0 : i32
    %c0_i32_0 = arith.constant 0 : i32
    %c0_i32_1 = arith.constant 0 : i32
    return %c0_i32, %c0_i32_0 : i32, i32
  }
  func.func @transform_11(%arg0: i32) -> (i32, i32) {
    %c0_i32 = arith.constant 0 : i32
    %c0_i32_0 = arith.constant 0 : i32
    %c0_i32_1 = arith.constant 0 : i32
    return %c0_i32, %c0_i32_0 : i32, i32
  }
  func.func @transform_12(%arg0: i32) -> (i32, i32) {
    %c0_i32 = arith.constant 0 : i32
    %c0_i32_0 = arith.constant 0 : i32
    %c0_i32_1 = arith.constant 0 : i32
    return %c0_i32, %c0_i32_0 : i32, i32
  }
  func.func @transform_13(%arg0: i32) -> (i32, i32) {
    %c0_i32 = arith.constant 0 : i32
    %c0_i32_0 = arith.constant 0 : i32
    %c0_i32_1 = arith.constant 0 : i32
    return %c0_i32, %c0_i32_0 : i32, i32
  }
  func.func @transform_14(%arg0: i32) -> (i32, i32) {
    %c0_i32 = arith.constant 0 : i32
    %c0_i32_0 = arith.constant 0 : i32
    %c0_i32_1 = arith.constant 0 : i32
    return %c0_i32, %c0_i32_0 : i32, i32
  }
  func.func @transform_15(%arg0: i32) -> (i32, i32) {
    %c0_i32 = arith.constant 0 : i32
    %c0_i32_0 = arith.constant 0 : i32
    %c0_i32_1 = arith.constant 0 : i32
    return %c0_i32, %c0_i32_0 : i32, i32
  }
  func.func @transform_16(%arg0: i32) -> (i32, i32) {
    %c0_i32 = arith.constant 0 : i32
    %c0_i32_0 = arith.constant 0 : i32
    %c0_i32_1 = arith.constant 0 : i32
    return %c0_i32, %c0_i32_0 : i32, i32
  }
  func.func @transform_17(%arg0: i32) -> (i32, i32) {
    %c0_i32 = arith.constant 0 : i32
    %c0_i32_0 = arith.constant 0 : i32
    %c0_i32_1 = arith.constant 0 : i32
    return %c0_i32, %c0_i32_0 : i32, i32
  }
  func.func @transform_18(%arg0: i32) -> (i32, i32, i32) {
    %c0_i32 = arith.constant 0 : i32
    %c0_i32_0 = arith.constant 0 : i32
    %c0_i32_1 = arith.constant 0 : i32
    %c0_i32_2 = arith.constant 0 : i32
    return %c0_i32, %c0_i32_0, %c0_i32_1 : i32, i32, i32
  }
  func.func @transform_19(%arg0: i32) -> (i32, i32, i32) {
    %c0_i32 = arith.constant 0 : i32
    %c0_i32_0 = arith.constant 0 : i32
    %c0_i32_1 = arith.constant 0 : i32
    %c0_i32_2 = arith.constant 0 : i32
    return %c0_i32, %c0_i32_0, %c0_i32_1 : i32, i32, i32
  }
  func.func @transform_20(%arg0: i32) -> (i32, i32, i32) {
    %c0_i32 = arith.constant 0 : i32
    %c0_i32_0 = arith.constant 0 : i32
    %c0_i32_1 = arith.constant 0 : i32
    %c0_i32_2 = arith.constant 0 : i32
    return %c0_i32, %c0_i32_0, %c0_i32_1 : i32, i32, i32
  }
  func.func @transform_21(%arg0: i32) -> (i32, i32, i32) {
    %c0_i32 = arith.constant 0 : i32
    %c0_i32_0 = arith.constant 0 : i32
    %c0_i32_1 = arith.constant 0 : i32
    %c0_i32_2 = arith.constant 0 : i32
    return %c0_i32, %c0_i32_0, %c0_i32_1 : i32, i32, i32
  }
  func.func @transform_22(%arg0: i32) -> (i32, i32, i32) {
    %c0_i32 = arith.constant 0 : i32
    %c0_i32_0 = arith.constant 0 : i32
    %c0_i32_1 = arith.constant 0 : i32
    %c0_i32_2 = arith.constant 0 : i32
    return %c0_i32, %c0_i32_0, %c0_i32_1 : i32, i32, i32
  }
  func.func @transform_23(%arg0: i32) -> (i32, i32, i32) {
    %c0_i32 = arith.constant 0 : i32
    %c0_i32_0 = arith.constant 0 : i32
    %c0_i32_1 = arith.constant 0 : i32
    %c0_i32_2 = arith.constant 0 : i32
    return %c0_i32, %c0_i32_0, %c0_i32_1 : i32, i32, i32
  }
  func.func @transform_24(%arg0: i32) -> (i32, i32, i32) {
    %c0_i32 = arith.constant 0 : i32
    %c0_i32_0 = arith.constant 0 : i32
    %c0_i32_1 = arith.constant 0 : i32
    %c0_i32_2 = arith.constant 0 : i32
    return %c0_i32, %c0_i32_0, %c0_i32_1 : i32, i32, i32
  }
  func.func @transform_25(%arg0: i32) -> (i32, i32, i32) {
    %c0_i32 = arith.constant 0 : i32
    %c0_i32_0 = arith.constant 0 : i32
    %c0_i32_1 = arith.constant 0 : i32
    %c0_i32_2 = arith.constant 0 : i32
    return %c0_i32, %c0_i32_0, %c0_i32_1 : i32, i32, i32
  }
  func.func @transform_26(%arg0: i32) -> (i32, i32, i32) {
    %c0_i32 = arith.constant 0 : i32
    %c0_i32_0 = arith.constant 0 : i32
    %c0_i32_1 = arith.constant 0 : i32
    %c0_i32_2 = arith.constant 0 : i32
    return %c0_i32, %c0_i32_0, %c0_i32_1 : i32, i32, i32
  }
  func.func @transform_27(%arg0: i32) -> (i32, i32, i32) {
    %c0_i32 = arith.constant 0 : i32
    %c0_i32_0 = arith.constant 0 : i32
    %c0_i32_1 = arith.constant 0 : i32
    %c0_i32_2 = arith.constant 0 : i32
    return %c0_i32, %c0_i32_0, %c0_i32_1 : i32, i32, i32
  }
  func.func @transform_28(%arg0: i32) -> (i32, i32, i32) {
    %c0_i32 = arith.constant 0 : i32
    %c0_i32_0 = arith.constant 0 : i32
    %c0_i32_1 = arith.constant 0 : i32
    %c0_i32_2 = arith.constant 0 : i32
    return %c0_i32, %c0_i32_0, %c0_i32_1 : i32, i32, i32
  }
  func.func @transform_29(%arg0: i32) -> (i32, i32, i32) {
    %c0_i32 = arith.constant 0 : i32
    %c0_i32_0 = arith.constant 0 : i32
    %c0_i32_1 = arith.constant 0 : i32
    %c0_i32_2 = arith.constant 0 : i32
    return %c0_i32, %c0_i32_0, %c0_i32_1 : i32, i32, i32
  }
  func.func @transform_30(%arg0: i32) -> (i32, i32) {
    %c0_i32 = arith.constant 0 : i32
    %c0_i32_0 = arith.constant 0 : i32
    %c0_i32_1 = arith.constant 0 : i32
    return %c0_i32, %c0_i32_0 : i32, i32
  }
  func.func @transform_31(%arg0: i32) -> (i32, i32) {
    %c0_i32 = arith.constant 0 : i32
    %c0_i32_0 = arith.constant 0 : i32
    %c0_i32_1 = arith.constant 0 : i32
    return %c0_i32, %c0_i32_0 : i32, i32
  }
  func.func @transform_32(%arg0: i32) -> (i32, i32) {
    %c0_i32 = arith.constant 0 : i32
    %c0_i32_0 = arith.constant 0 : i32
    %c0_i32_1 = arith.constant 0 : i32
    return %c0_i32, %c0_i32_0 : i32, i32
  }
  func.func @transform_33(%arg0: i32) -> (i32, i32) {
    %c0_i32 = arith.constant 0 : i32
    %c0_i32_0 = arith.constant 0 : i32
    %c0_i32_1 = arith.constant 0 : i32
    return %c0_i32, %c0_i32_0 : i32, i32
  }
  func.func @transform_34(%arg0: i32) -> (i32, i32) {
    %c0_i32 = arith.constant 0 : i32
    %c0_i32_0 = arith.constant 0 : i32
    %c0_i32_1 = arith.constant 0 : i32
    return %c0_i32, %c0_i32_0 : i32, i32
  }
  func.func @transform_35(%arg0: i32) -> (i32, i32) {
    %c0_i32 = arith.constant 0 : i32
    %c0_i32_0 = arith.constant 0 : i32
    %c0_i32_1 = arith.constant 0 : i32
    return %c0_i32, %c0_i32_0 : i32, i32
  }
  func.func @transform_36(%arg0: i32) -> (i32, i32, i32) {
    %c0_i32 = arith.constant 0 : i32
    %c0_i32_0 = arith.constant 0 : i32
    %c0_i32_1 = arith.constant 0 : i32
    return %arg0, %c0_i32, %c0_i32_0 : i32, i32, i32
  }
}

</mosaic_0001>

<llo_original>
// kernel: multimodal_epic_forward.1
$region0: #{multimodal_epic_forward.1}
  #allocation0 [shape = 'u32[]', space=smem, size = 0x4, offset = 0x4, fixed_abs, tag = 'smem constant byte address 0x4 - core index']
  #allocation1 [shape = 'u32[72,128]{1,0:T(1,128)}', space=vmem, size = 0x9000, scoped, tag = 'internal scratch']
  %s0 = inlined_call_operand.smem [shape: u32[37], index: -1, kind: input, shape index: {}]
  %s1 = sld [smem:[%s0]]
  %s2 = scalar_lea.smem %s0, 1
  %s3 = sld [smem:[%s2]]
  %s4 = scalar_lea.smem %s0, 2
  %s5 = sld [smem:[%s4]]
  %s6 = scalar_lea.smem %s0, 3
  %s7 = sld [smem:[%s6]]
  %s8 = scalar_lea.smem %s0, 4
  %s9 = sld [smem:[%s8]]
  %s10 = scalar_lea.smem %s0, 5
  %s11 = sld [smem:[%s10]]
  %s12 = scalar_lea.smem %s0, 6
  %s13 = sld [smem:[%s12]]
  %s14 = scalar_lea.smem %s0, 7
  %s15 = sld [smem:[%s14]]
  %s16 = scalar_lea.smem %s0, 8
  %s17 = sld [smem:[%s16]]
  %s18 = scalar_lea.smem %s0, 9
  %s19 = sld [smem:[%s18]]
  %s20 = scalar_lea.smem %s0, 10
  %s21 = sld [smem:[%s20]]
  %s22 = scalar_lea.smem %s0, 11
  %s23 = sld [smem:[%s22]]
  %s24 = scalar_lea.smem %s0, 12
  %s25 = sld [smem:[%s24]]
  %s26 = scalar_lea.smem %s0, 13
  %s27 = sld [smem:[%s26]]
  %s28 = scalar_lea.smem %s0, 14
  %s29 = sld [smem:[%s28]]
  %s30 = scalar_lea.smem %s0, 15
  %s31 = sld [smem:[%s30]]
  %s32 = scalar_lea.smem %s0, 16
  %s33 = sld [smem:[%s32]]
  %s34 = scalar_lea.smem %s0, 17
  %s35 = sld [smem:[%s34]]
  %s36 = scalar_lea.smem %s0, 18
  %s37 = sld [smem:[%s36]]
  %s38 = scalar_lea.smem %s0, 19
  %s39 = sld [smem:[%s38]]
  %s40 = scalar_lea.smem %s0, 20
  %s41 = sld [smem:[%s40]]
  %s42 = scalar_lea.smem %s0, 21
  %s43 = sld [smem:[%s42]]
  %s44 = scalar_lea.smem %s0, 22
  %s45 = sld [smem:[%s44]]
  %s46 = scalar_lea.smem %s0, 23
  %s47 = sld [smem:[%s46]]
  %s48 = scalar_lea.smem %s0, 24
  %s49 = sld [smem:[%s48]]
  %s50 = scalar_lea.smem %s0, 25
  %s51 = sld [smem:[%s50]]
  %s52 = scalar_lea.smem %s0, 26
  %s53 = sld [smem:[%s52]]
  %s54 = scalar_lea.smem %s0, 27
  %s55 = sld [smem:[%s54]]
  %s56 = scalar_lea.smem %s0, 28
  %s57 = sld [smem:[%s56]]
  %s58 = scalar_lea.smem %s0, 29
  %s59 = sld [smem:[%s58]]
  %s60 = scalar_lea.smem %s0, 30
  %s61 = sld [smem:[%s60]]
  %s62 = scalar_lea.smem %s0, 31
  %s63 = sld [smem:[%s62]]
  %s64 = scalar_lea.smem %s0, 32
  %s65 = sld [smem:[%s64]]
  %s66 = scalar_lea.smem %s0, 33
  %s67 = sld [smem:[%s66]]
  %s68 = scalar_lea.smem %s0, 34
  %s69 = sld [smem:[%s68]]
  %s70 = scalar_lea.smem %s0, 35
  %s71 = sld [smem:[%s70]]
  %s72 = scalar_lea.smem %s0, 36
  %s73 = sld [smem:[%s72]]
  %s74 = sld [smem:[#allocation0]]
  $region177: #{multimodal_epic_forward.1} parent=0
    _
  %s76 = ssub.s32 1, %s74
  %s77 = scalar_select 0, %s76, %s74
  loop: start=0, step=1, limit=4
  $region2: #{multimodal_epic_forward.1} parent=0 // loop_pre_header
    _
  $region3: #{multimodal_epic_forward.1} parent=0 // loop_header
    %s79 = sphi 0, %s83
    %p80 = scmp.ge.s32.totalorder %s79, 4
    %s89 = sphi 0, %s91
    %s92 = sphi 0, %s89
    %s93 = sphi 0, %s92
    %s109 = sphi 0, %s93
    %s115 = sphi 0, %s117
    %s118 = sphi 0, %s115
    %s119 = sphi 0, %s118
    %s135 = sphi 0, %s119
    %s141 = sphi 0, %s143
    %s144 = sphi 0, %s141
    %s145 = sphi 0, %s144
    %s161 = sphi 0, %s145
    %s167 = sphi 0, %s169
    %s170 = sphi 0, %s167
    %s171 = sphi 0, %s170
    %s187 = sphi 0, %s171
    %s193 = sphi 0, %s195
    %s196 = sphi 0, %s193
    %s197 = sphi 0, %s196
    %s213 = sphi 0, %s197
    %s217 = sphi 0, %s217
    %s219 = sphi 0, %s217
    %s220 = sphi 0, %s219
    %s234 = sphi 0, %s220
    %s238 = sphi 0, %s238
    %s240 = sphi 0, %s238
    %s241 = sphi 0, %s240
    %s255 = sphi 0, %s241
    %s259 = sphi 0, %s259
    %s261 = sphi 0, %s259
    %s262 = sphi 0, %s261
    %s276 = sphi 0, %s262
    %s280 = sphi 0, %s280
    %s282 = sphi 0, %s280
    %s283 = sphi 0, %s282
    %s297 = sphi 0, %s283
    %s301 = sphi 0, %s301
    %s303 = sphi 0, %s301
    %s304 = sphi 0, %s303
    %s318 = sphi 0, %s304
    %s322 = sphi 0, %s322
    %s324 = sphi 0, %s322
    %s325 = sphi 0, %s324
    %s339 = sphi 0, %s325
    %s343 = sphi 0, %s343
    %s345 = sphi 0, %s343
    %s346 = sphi 0, %s345
    %s360 = sphi 0, %s346
    %s364 = sphi 0, %s364
    %s366 = sphi 0, %s364
    %s367 = sphi 0, %s366
    %s381 = sphi 0, %s367
    %s385 = sphi 0, %s385
    %s387 = sphi 0, %s385
    %s388 = sphi 0, %s387
    %s402 = sphi 0, %s388
    %s406 = sphi 0, %s406
    %s408 = sphi 0, %s406
    %s409 = sphi 0, %s408
    %s423 = sphi 0, %s409
    %s427 = sphi 0, %s427
    %s429 = sphi 0, %s427
    %s430 = sphi 0, %s429
    %s444 = sphi 0, %s430
    %s448 = sphi 0, %s448
    %s450 = sphi 0, %s448
    %s451 = sphi 0, %s450
    %s465 = sphi 0, %s451
    %s469 = sphi 0, %s469
    %s471 = sphi 0, %s469
    %s472 = sphi 0, %s471
    %s486 = sphi 0, %s472
    %s490 = sphi 0, %s490
    %s492 = sphi 0, %s490
    %s493 = sphi 0, %s492
    %s507 = sphi 0, %s493
    %s511 = sphi 0, %s511
    %s513 = sphi 0, %s511
    %s514 = sphi 0, %s513
    %s528 = sphi 0, %s514
    %s532 = sphi 0, %s532
    %s534 = sphi 0, %s532
    %s535 = sphi 0, %s534
    %s549 = sphi 0, %s535
    %s553 = sphi 0, %s553
    %s555 = sphi 0, %s553
    %s556 = sphi 0, %s555
    %s570 = sphi 0, %s556
    %s574 = sphi 0, %s574
    %s576 = sphi 0, %s574
    %s577 = sphi 0, %s576
    %s591 = sphi 0, %s577
    %s595 = sphi 0, %s595
    %s597 = sphi 0, %s595
    %s598 = sphi 0, %s597
    %s612 = sphi 0, %s598
    %s616 = sphi 0, %s616
    %s618 = sphi 0, %s616
    %s619 = sphi 0, %s618
    %s633 = sphi 0, %s619
    %s637 = sphi 0, %s637
    %s639 = sphi 0, %s637
    %s640 = sphi 0, %s639
    %s654 = sphi 0, %s640
    %s658 = sphi 0, %s658
    %s660 = sphi 0, %s658
    %s661 = sphi 0, %s660
    %s675 = sphi 0, %s661
    %s679 = sphi 0, %s679
    %s681 = sphi 0, %s679
    %s682 = sphi 0, %s681
    %s696 = sphi 0, %s682
    %s700 = sphi 0, %s700
    %s702 = sphi 0, %s700
    %s703 = sphi 0, %s702
    %s717 = sphi 0, %s703
    %s721 = sphi 0, %s721
    %s723 = sphi 0, %s721
    %s724 = sphi 0, %s723
    %s738 = sphi 0, %s724
    %s742 = sphi 0, %s742
    %s744 = sphi 0, %s742
    %s745 = sphi 0, %s744
    %s759 = sphi 0, %s745
    %s763 = sphi 0, %s763
    %s765 = sphi 0, %s763
    %s766 = sphi 0, %s765
    %s780 = sphi 0, %s766
    %s784 = sphi 0, %s784
    %s786 = sphi 0, %s784
    %s787 = sphi 0, %s786
    %s801 = sphi 0, %s787
    %s805 = sphi 0, %s805
    %s807 = sphi 0, %s805
    %s808 = sphi 0, %s807
    %s822 = sphi 0, %s808
    %s826 = sphi 0, %s826
    %s828 = sphi 0, %s826
    %s829 = sphi 0, %s828
    %s843 = sphi 0, %s829
    %s847 = sphi 0, %s847
    %s849 = sphi 0, %s847
    %s850 = sphi 0, %s849
    %s864 = sphi 0, %s850
    %s870 = sphi 0, %s872
    %s873 = sphi 0, %s870
    %s874 = sphi 0, %s873
    %s890 = sphi 0, %s874
  $region4: #{multimodal_epic_forward.1} parent=0 // loop_header_branch
    %82 = sbr.rel (%p80) target = $region8
  $region5: #{multimodal_epic_forward.1} parent=0 // loop_body
    %s84 = ssub.s32 %s79, 1
    %s85 = ssub.s32 %s79, 2
    %s86 = sadd.s32 %s79, 1
    %s87 = ssub.s32 %s79, %s86
    %p88 = scmp.eq.s32.totalorder %s87, 0
    %s90 = sadd.s32 %s89, 1
    %s91 = scalar_select %p88, %s89, %s90
    %p94 = pneg %p88
    %p95 = scmp.eq.s32.totalorder %s79, 1
    %p96 = por %p94, %p95
    %p97 = scmp.ne.s32.totalorder %s89, %s92
    %p98 = scmp.eq.s32.totalorder %s79, 0
    %p99 = por %p97, %p98
    %p100 = scmp.ne.s32.totalorder %s89, %s92
    %p101 = scmp.eq.s32.totalorder %s84, 1
    %p102 = por %p100, %p101
    %p103 = scmp.ne.s32.totalorder %s92, %s93
    %p104 = scmp.eq.s32.totalorder %s84, 0
    %p105 = por %p103, %p104
    %p106 = scmp.ne.s32.totalorder %s92, %s93
    %p107 = scmp.eq.s32.totalorder %s85, 1
    %p108 = por %p106, %p107
    %p110 = scmp.ne.s32.totalorder %s93, %s109
    %p111 = scmp.eq.s32.totalorder %s85, 0
    %p112 = por %p110, %p111
    %s113 = ssub.s32 %s79, %s86
    %p114 = scmp.eq.s32.totalorder %s113, 0
    %s116 = sadd.s32 %s115, 1
    %s117 = scalar_select %p114, %s115, %s116
    %p120 = pneg %p114
    %p121 = scmp.eq.s32.totalorder %s79, 1
    %p122 = por %p120, %p121
    %p123 = scmp.ne.s32.totalorder %s115, %s118
    %p124 = scmp.eq.s32.totalorder %s79, 0
    %p125 = por %p123, %p124
    %p126 = scmp.ne.s32.totalorder %s115, %s118
    %p127 = scmp.eq.s32.totalorder %s84, 1
    %p128 = por %p126, %p127
    %p129 = scmp.ne.s32.totalorder %s118, %s119
    %p130 = scmp.eq.s32.totalorder %s84, 0
    %p131 = por %p129, %p130
    %p132 = scmp.ne.s32.totalorder %s118, %s119
    %p133 = scmp.eq.s32.totalorder %s85, 1
    %p134 = por %p132, %p133
    %p136 = scmp.ne.s32.totalorder %s119, %s135
    %p137 = scmp.eq.s32.totalorder %s85, 0
    %p138 = por %p136, %p137
    %s139 = ssub.s32 %s79, %s86
    %p140 = scmp.eq.s32.totalorder %s139, 0
    %s142 = sadd.s32 %s141, 1
    %s143 = scalar_select %p140, %s141, %s142
    %p146 = pneg %p140
    %p147 = scmp.eq.s32.totalorder %s79, 1
    %p148 = por %p146, %p147
    %p149 = scmp.ne.s32.totalorder %s141, %s144
    %p150 = scmp.eq.s32.totalorder %s79, 0
    %p151 = por %p149, %p150
    %p152 = scmp.ne.s32.totalorder %s141, %s144
    %p153 = scmp.eq.s32.totalorder %s84, 1
    %p154 = por %p152, %p153
    %p155 = scmp.ne.s32.totalorder %s144, %s145
    %p156 = scmp.eq.s32.totalorder %s84, 0
    %p157 = por %p155, %p156
    %p158 = scmp.ne.s32.totalorder %s144, %s145
    %p159 = scmp.eq.s32.totalorder %s85, 1
    %p160 = por %p158, %p159
    %p162 = scmp.ne.s32.totalorder %s145, %s161
    %p163 = scmp.eq.s32.totalorder %s85, 0
    %p164 = por %p162, %p163
    %s165 = ssub.s32 %s79, %s86
    %p166 = scmp.eq.s32.totalorder %s165, 0
    %s168 = sadd.s32 %s167, 1
    %s169 = scalar_select %p166, %s167, %s168
    %p172 = pneg %p166
    %p173 = scmp.eq.s32.totalorder %s79, 1
    %p174 = por %p172, %p173
    %p175 = scmp.ne.s32.totalorder %s167, %s170
    %p176 = scmp.eq.s32.totalorder %s79, 0
    %p177 = por %p175, %p176
    %p178 = scmp.ne.s32.totalorder %s167, %s170
    %p179 = scmp.eq.s32.totalorder %s84, 1
    %p180 = por %p178, %p179
    %p181 = scmp.ne.s32.totalorder %s170, %s171
    %p182 = scmp.eq.s32.totalorder %s84, 0
    %p183 = por %p181, %p182
    %p184 = scmp.ne.s32.totalorder %s170, %s171
    %p185 = scmp.eq.s32.totalorder %s85, 1
    %p186 = por %p184, %p185
    %p188 = scmp.ne.s32.totalorder %s171, %s187
    %p189 = scmp.eq.s32.totalorder %s85, 0
    %p190 = por %p188, %p189
    %s191 = ssub.s32 %s79, %s86
    %p192 = scmp.eq.s32.totalorder %s191, 0
    %s194 = sadd.s32 %s193, 1
    %s195 = scalar_select %p192, %s193, %s194
    %p198 = pneg %p192
    %p199 = scmp.eq.s32.totalorder %s79, 1
    %p200 = por %p198, %p199
    %p201 = scmp.ne.s32.totalorder %s193, %s196
    %p202 = scmp.eq.s32.totalorder %s79, 0
    %p203 = por %p201, %p202
    %p204 = scmp.ne.s32.totalorder %s193, %s196
    %p205 = scmp.eq.s32.totalorder %s84, 1
    %p206 = por %p204, %p205
    %p207 = scmp.ne.s32.totalorder %s196, %s197
    %p208 = scmp.eq.s32.totalorder %s84, 0
    %p209 = por %p207, %p208
    %p210 = scmp.ne.s32.totalorder %s196, %s197
    %p211 = scmp.eq.s32.totalorder %s85, 1
    %p212 = por %p210, %p211
    %p214 = scmp.ne.s32.totalorder %s197, %s213
    %p215 = scmp.eq.s32.totalorder %s85, 0
    %p216 = por %p214, %p215
    %s218 = sadd.s32 %s217, 1
    %p221 = scmp.eq.s32.totalorder %s79, 1
    %p222 = scmp.ne.s32.totalorder %s217, %s219
    %p223 = scmp.eq.s32.totalorder %s79, 0
    %p224 = por %p222, %p223
    %p225 = scmp.ne.s32.totalorder %s217, %s219
    %p226 = scmp.eq.s32.totalorder %s84, 1
    %p227 = por %p225, %p226
    %p228 = scmp.ne.s32.totalorder %s219, %s220
    %p229 = scmp.eq.s32.totalorder %s84, 0
    %p230 = por %p228, %p229
    %p231 = scmp.ne.s32.totalorder %s219, %s220
    %p232 = scmp.eq.s32.totalorder %s85, 1
    %p233 = por %p231, %p232
    %p235 = scmp.ne.s32.totalorder %s220, %s234
    %p236 = scmp.eq.s32.totalorder %s85, 0
    %p237 = por %p235, %p236
    %s239 = sadd.s32 %s238, 1
    %p242 = scmp.eq.s32.totalorder %s79, 1
    %p243 = scmp.ne.s32.totalorder %s238, %s240
    %p244 = scmp.eq.s32.totalorder %s79, 0
    %p245 = por %p243, %p244
    %p246 = scmp.ne.s32.totalorder %s238, %s240
    %p247 = scmp.eq.s32.totalorder %s84, 1
    %p248 = por %p246, %p247
    %p249 = scmp.ne.s32.totalorder %s240, %s241
    %p250 = scmp.eq.s32.totalorder %s84, 0
    %p251 = por %p249, %p250
    %p252 = scmp.ne.s32.totalorder %s240, %s241
    %p253 = scmp.eq.s32.totalorder %s85, 1
    %p254 = por %p252, %p253
    %p256 = scmp.ne.s32.totalorder %s241, %s255
    %p257 = scmp.eq.s32.totalorder %s85, 0
    %p258 = por %p256, %p257
    %s260 = sadd.s32 %s259, 1
    %p263 = scmp.eq.s32.totalorder %s79, 1
    %p264 = scmp.ne.s32.totalorder %s259, %s261
    %p265 = scmp.eq.s32.totalorder %s79, 0
    %p266 = por %p264, %p265
    %p267 = scmp.ne.s32.totalorder %s259, %s261
    %p268 = scmp.eq.s32.totalorder %s84, 1
    %p269 = por %p267, %p268
    %p270 = scmp.ne.s32.totalorder %s261, %s262
    %p271 = scmp.eq.s32.totalorder %s84, 0
    %p272 = por %p270, %p271
    %p273 = scmp.ne.s32.totalorder %s261, %s262
    %p274 = scmp.eq.s32.totalorder %s85, 1
    %p275 = por %p273, %p274
    %p277 = scmp.ne.s32.totalorder %s262, %s276
    %p278 = scmp.eq.s32.totalorder %s85, 0
    %p279 = por %p277, %p278
    %s281 = sadd.s32 %s280, 1
    %p284 = scmp.eq.s32.totalorder %s79, 1
    %p285 = scmp.ne.s32.totalorder %s280, %s282
    %p286 = scmp.eq.s32.totalorder %s79, 0
    %p287 = por %p285, %p286
    %p288 = scmp.ne.s32.totalorder %s280, %s282
    %p289 = scmp.eq.s32.totalorder %s84, 1
    %p290 = por %p288, %p289
    %p291 = scmp.ne.s32.totalorder %s282, %s283
    %p292 = scmp.eq.s32.totalorder %s84, 0
    %p293 = por %p291, %p292
    %p294 = scmp.ne.s32.totalorder %s282, %s283
    %p295 = scmp.eq.s32.totalorder %s85, 1
    %p296 = por %p294, %p295
    %p298 = scmp.ne.s32.totalorder %s283, %s297
    %p299 = scmp.eq.s32.totalorder %s85, 0
    %p300 = por %p298, %p299
    %s302 = sadd.s32 %s301, 1
    %p305 = scmp.eq.s32.totalorder %s79, 1
    %p306 = scmp.ne.s32.totalorder %s301, %s303
    %p307 = scmp.eq.s32.totalorder %s79, 0
    %p308 = por %p306, %p307
    %p309 = scmp.ne.s32.totalorder %s301, %s303
    %p310 = scmp.eq.s32.totalorder %s84, 1
    %p311 = por %p309, %p310
    %p312 = scmp.ne.s32.totalorder %s303, %s304
    %p313 = scmp.eq.s32.totalorder %s84, 0
    %p314 = por %p312, %p313
    %p315 = scmp.ne.s32.totalorder %s303, %s304
    %p316 = scmp.eq.s32.totalorder %s85, 1
    %p317 = por %p315, %p316
    %p319 = scmp.ne.s32.totalorder %s304, %s318
    %p320 = scmp.eq.s32.totalorder %s85, 0
    %p321 = por %p319, %p320
    %s323 = sadd.s32 %s322, 1
    %p326 = scmp.eq.s32.totalorder %s79, 1
    %p327 = scmp.ne.s32.totalorder %s322, %s324
    %p328 = scmp.eq.s32.totalorder %s79, 0
    %p329 = por %p327, %p328
    %p330 = scmp.ne.s32.totalorder %s322, %s324
    %p331 = scmp.eq.s32.totalorder %s84, 1
    %p332 = por %p330, %p331
    %p333 = scmp.ne.s32.totalorder %s324, %s325
    %p334 = scmp.eq.s32.totalorder %s84, 0
    %p335 = por %p333, %p334
    %p336 = scmp.ne.s32.totalorder %s324, %s325
    %p337 = scmp.eq.s32.totalorder %s85, 1
    %p338 = por %p336, %p337
    %p340 = scmp.ne.s32.totalorder %s325, %s339
    %p341 = scmp.eq.s32.totalorder %s85, 0
    %p342 = por %p340, %p341
    %s344 = sadd.s32 %s343, 1
    %p347 = scmp.eq.s32.totalorder %s79, 1
    %p348 = scmp.ne.s32.totalorder %s343, %s345
    %p349 = scmp.eq.s32.totalorder %s79, 0
    %p350 = por %p348, %p349
    %p351 = scmp.ne.s32.totalorder %s343, %s345
    %p352 = scmp.eq.s32.totalorder %s84, 1
    %p353 = por %p351, %p352
    %p354 = scmp.ne.s32.totalorder %s345, %s346
    %p355 = scmp.eq.s32.totalorder %s84, 0
    %p356 = por %p354, %p355
    %p357 = scmp.ne.s32.totalorder %s345, %s346
    %p358 = scmp.eq.s32.totalorder %s85, 1
    %p359 = por %p357, %p358
    %p361 = scmp.ne.s32.totalorder %s346, %s360
    %p362 = scmp.eq.s32.totalorder %s85, 0
    %p363 = por %p361, %p362
    %s365 = sadd.s32 %s364, 1
    %p368 = scmp.eq.s32.totalorder %s79, 1
    %p369 = scmp.ne.s32.totalorder %s364, %s366
    %p370 = scmp.eq.s32.totalorder %s79, 0
    %p371 = por %p369, %p370
    %p372 = scmp.ne.s32.totalorder %s364, %s366
    %p373 = scmp.eq.s32.totalorder %s84, 1
    %p374 = por %p372, %p373
    %p375 = scmp.ne.s32.totalorder %s366, %s367
    %p376 = scmp.eq.s32.totalorder %s84, 0
    %p377 = por %p375, %p376
    %p378 = scmp.ne.s32.totalorder %s366, %s367
    %p379 = scmp.eq.s32.totalorder %s85, 1
    %p380 = por %p378, %p379
    %p382 = scmp.ne.s32.totalorder %s367, %s381
    %p383 = scmp.eq.s32.totalorder %s85, 0
    %p384 = por %p382, %p383
    %s386 = sadd.s32 %s385, 1
    %p389 = scmp.eq.s32.totalorder %s79, 1
    %p390 = scmp.ne.s32.totalorder %s385, %s387
    %p391 = scmp.eq.s32.totalorder %s79, 0
    %p392 = por %p390, %p391
    %p393 = scmp.ne.s32.totalorder %s385, %s387
    %p394 = scmp.eq.s32.totalorder %s84, 1
    %p395 = por %p393, %p394
    %p396 = scmp.ne.s32.totalorder %s387, %s388
    %p397 = scmp.eq.s32.totalorder %s84, 0
    %p398 = por %p396, %p397
    %p399 = scmp.ne.s32.totalorder %s387, %s388
    %p400 = scmp.eq.s32.totalorder %s85, 1
    %p401 = por %p399, %p400
    %p403 = scmp.ne.s32.totalorder %s388, %s402
    %p404 = scmp.eq.s32.totalorder %s85, 0
    %p405 = por %p403, %p404
    %s407 = sadd.s32 %s406, 1
    %p410 = scmp.eq.s32.totalorder %s79, 1
    %p411 = scmp.ne.s32.totalorder %s406, %s408
    %p412 = scmp.eq.s32.totalorder %s79, 0
    %p413 = por %p411, %p412
    %p414 = scmp.ne.s32.totalorder %s406, %s408
    %p415 = scmp.eq.s32.totalorder %s84, 1
    %p416 = por %p414, %p415
    %p417 = scmp.ne.s32.totalorder %s408, %s409
    %p418 = scmp.eq.s32.totalorder %s84, 0
    %p419 = por %p417, %p418
    %p420 = scmp.ne.s32.totalorder %s408, %s409
    %p421 = scmp.eq.s32.totalorder %s85, 1
    %p422 = por %p420, %p421
    %p424 = scmp.ne.s32.totalorder %s409, %s423
    %p425 = scmp.eq.s32.totalorder %s85, 0
    %p426 = por %p424, %p425
    %s428 = sadd.s32 %s427, 1
    %p431 = scmp.eq.s32.totalorder %s79, 1
    %p432 = scmp.ne.s32.totalorder %s427, %s429
    %p433 = scmp.eq.s32.totalorder %s79, 0
    %p434 = por %p432, %p433
    %p435 = scmp.ne.s32.totalorder %s427, %s429
    %p436 = scmp.eq.s32.totalorder %s84, 1
    %p437 = por %p435, %p436
    %p438 = scmp.ne.s32.totalorder %s429, %s430
    %p439 = scmp.eq.s32.totalorder %s84, 0
    %p440 = por %p438, %p439
    %p441 = scmp.ne.s32.totalorder %s429, %s430
    %p442 = scmp.eq.s32.totalorder %s85, 1
    %p443 = por %p441, %p442
    %p445 = scmp.ne.s32.totalorder %s430, %s444
    %p446 = scmp.eq.s32.totalorder %s85, 0
    %p447 = por %p445, %p446
    %s449 = sadd.s32 %s448, 1
    %p452 = scmp.eq.s32.totalorder %s79, 1
    %p453 = scmp.ne.s32.totalorder %s448, %s450
    %p454 = scmp.eq.s32.totalorder %s79, 0
    %p455 = por %p453, %p454
    %p456 = scmp.ne.s32.totalorder %s448, %s450
    %p457 = scmp.eq.s32.totalorder %s84, 1
    %p458 = por %p456, %p457
    %p459 = scmp.ne.s32.totalorder %s450, %s451
    %p460 = scmp.eq.s32.totalorder %s84, 0
    %p461 = por %p459, %p460
    %p462 = scmp.ne.s32.totalorder %s450, %s451
    %p463 = scmp.eq.s32.totalorder %s85, 1
    %p464 = por %p462, %p463
    %p466 = scmp.ne.s32.totalorder %s451, %s465
    %p467 = scmp.eq.s32.totalorder %s85, 0
    %p468 = por %p466, %p467
    %s470 = sadd.s32 %s469, 1
    %p473 = scmp.eq.s32.totalorder %s79, 1
    %p474 = scmp.ne.s32.totalorder %s469, %s471
    %p475 = scmp.eq.s32.totalorder %s79, 0
    %p476 = por %p474, %p475
    %p477 = scmp.ne.s32.totalorder %s469, %s471
    %p478 = scmp.eq.s32.totalorder %s84, 1
    %p479 = por %p477, %p478
    %p480 = scmp.ne.s32.totalorder %s471, %s472
    %p481 = scmp.eq.s32.totalorder %s84, 0
    %p482 = por %p480, %p481
    %p483 = scmp.ne.s32.totalorder %s471, %s472
    %p484 = scmp.eq.s32.totalorder %s85, 1
    %p485 = por %p483, %p484
    %p487 = scmp.ne.s32.totalorder %s472, %s486
    %p488 = scmp.eq.s32.totalorder %s85, 0
    %p489 = por %p487, %p488
    %s491 = sadd.s32 %s490, 1
    %p494 = scmp.eq.s32.totalorder %s79, 1
    %p495 = scmp.ne.s32.totalorder %s490, %s492
    %p496 = scmp.eq.s32.totalorder %s79, 0
    %p497 = por %p495, %p496
    %p498 = scmp.ne.s32.totalorder %s490, %s492
    %p499 = scmp.eq.s32.totalorder %s84, 1
    %p500 = por %p498, %p499
    %p501 = scmp.ne.s32.totalorder %s492, %s493
    %p502 = scmp.eq.s32.totalorder %s84, 0
    %p503 = por %p501, %p502
    %p504 = scmp.ne.s32.totalorder %s492, %s493
    %p505 = scmp.eq.s32.totalorder %s85, 1
    %p506 = por %p504, %p505
    %p508 = scmp.ne.s32.totalorder %s493, %s507
    %p509 = scmp.eq.s32.totalorder %s85, 0
    %p510 = por %p508, %p509
    %s512 = sadd.s32 %s511, 1
    %p515 = scmp.eq.s32.totalorder %s79, 1
    %p516 = scmp.ne.s32.totalorder %s511, %s513
    %p517 = scmp.eq.s32.totalorder %s79, 0
    %p518 = por %p516, %p517
    %p519 = scmp.ne.s32.totalorder %s511, %s513
    %p520 = scmp.eq.s32.totalorder %s84, 1
    %p521 = por %p519, %p520
    %p522 = scmp.ne.s32.totalorder %s513, %s514
    %p523 = scmp.eq.s32.totalorder %s84, 0
    %p524 = por %p522, %p523
    %p525 = scmp.ne.s32.totalorder %s513, %s514
    %p526 = scmp.eq.s32.totalorder %s85, 1
    %p527 = por %p525, %p526
    %p529 = scmp.ne.s32.totalorder %s514, %s528
    %p530 = scmp.eq.s32.totalorder %s85, 0
    %p531 = por %p529, %p530
    %s533 = sadd.s32 %s532, 1
    %p536 = scmp.eq.s32.totalorder %s79, 1
    %p537 = scmp.ne.s32.totalorder %s532, %s534
    %p538 = scmp.eq.s32.totalorder %s79, 0
    %p539 = por %p537, %p538
    %p540 = scmp.ne.s32.totalorder %s532, %s534
    %p541 = scmp.eq.s32.totalorder %s84, 1
    %p542 = por %p540, %p541
    %p543 = scmp.ne.s32.totalorder %s534, %s535
    %p544 = scmp.eq.s32.totalorder %s84, 0
    %p545 = por %p543, %p544
    %p546 = scmp.ne.s32.totalorder %s534, %s535
    %p547 = scmp.eq.s32.totalorder %s85, 1
    %p548 = por %p546, %p547
    %p550 = scmp.ne.s32.totalorder %s535, %s549
    %p551 = scmp.eq.s32.totalorder %s85, 0
    %p552 = por %p550, %p551
    %s554 = sadd.s32 %s553, 1
    %p557 = scmp.eq.s32.totalorder %s79, 1
    %p558 = scmp.ne.s32.totalorder %s553, %s555
    %p559 = scmp.eq.s32.totalorder %s79, 0
    %p560 = por %p558, %p559
    %p561 = scmp.ne.s32.totalorder %s553, %s555
    %p562 = scmp.eq.s32.totalorder %s84, 1
    %p563 = por %p561, %p562
    %p564 = scmp.ne.s32.totalorder %s555, %s556
    %p565 = scmp.eq.s32.totalorder %s84, 0
    %p566 = por %p564, %p565
    %p567 = scmp.ne.s32.totalorder %s555, %s556
    %p568 = scmp.eq.s32.totalorder %s85, 1
    %p569 = por %p567, %p568
    %p571 = scmp.ne.s32.totalorder %s556, %s570
    %p572 = scmp.eq.s32.totalorder %s85, 0
    %p573 = por %p571, %p572
    %s575 = sadd.s32 %s574, 1
    %p578 = scmp.eq.s32.totalorder %s79, 1
    %p579 = scmp.ne.s32.totalorder %s574, %s576
    %p580 = scmp.eq.s32.totalorder %s79, 0
    %p581 = por %p579, %p580
    %p582 = scmp.ne.s32.totalorder %s574, %s576
    %p583 = scmp.eq.s32.totalorder %s84, 1
    %p584 = por %p582, %p583
    %p585 = scmp.ne.s32.totalorder %s576, %s577
    %p586 = scmp.eq.s32.totalorder %s84, 0
    %p587 = por %p585, %p586
    %p588 = scmp.ne.s32.totalorder %s576, %s577
    %p589 = scmp.eq.s32.totalorder %s85, 1
    %p590 = por %p588, %p589
    %p592 = scmp.ne.s32.totalorder %s577, %s591
    %p593 = scmp.eq.s32.totalorder %s85, 0
    %p594 = por %p592, %p593
    %s596 = sadd.s32 %s595, 1
    %p599 = scmp.eq.s32.totalorder %s79, 1
    %p600 = scmp.ne.s32.totalorder %s595, %s597
    %p601 = scmp.eq.s32.totalorder %s79, 0
    %p602 = por %p600, %p601
    %p603 = scmp.ne.s32.totalorder %s595, %s597
    %p604 = scmp.eq.s32.totalorder %s84, 1
    %p605 = por %p603, %p604
    %p606 = scmp.ne.s32.totalorder %s597, %s598
    %p607 = scmp.eq.s32.totalorder %s84, 0
    %p608 = por %p606, %p607
    %p609 = scmp.ne.s32.totalorder %s597, %s598
    %p610 = scmp.eq.s32.totalorder %s85, 1
    %p611 = por %p609, %p610
    %p613 = scmp.ne.s32.totalorder %s598, %s612
    %p614 = scmp.eq.s32.totalorder %s85, 0
    %p615 = por %p613, %p614
    %s617 = sadd.s32 %s616, 1
    %p620 = scmp.eq.s32.totalorder %s79, 1
    %p621 = scmp.ne.s32.totalorder %s616, %s618
    %p622 = scmp.eq.s32.totalorder %s79, 0
    %p623 = por %p621, %p622
    %p624 = scmp.ne.s32.totalorder %s616, %s618
    %p625 = scmp.eq.s32.totalorder %s84, 1
    %p626 = por %p624, %p625
    %p627 = scmp.ne.s32.totalorder %s618, %s619
    %p628 = scmp.eq.s32.totalorder %s84, 0
    %p629 = por %p627, %p628
    %p630 = scmp.ne.s32.totalorder %s618, %s619
    %p631 = scmp.eq.s32.totalorder %s85, 1
    %p632 = por %p630, %p631
    %p634 = scmp.ne.s32.totalorder %s619, %s633
    %p635 = scmp.eq.s32.totalorder %s85, 0
    %p636 = por %p634, %p635
    %s638 = sadd.s32 %s637, 1
    %p641 = scmp.eq.s32.totalorder %s79, 1
    %p642 = scmp.ne.s32.totalorder %s637, %s639
    %p643 = scmp.eq.s32.totalorder %s79, 0
    %p644 = por %p642, %p643
    %p645 = scmp.ne.s32.totalorder %s637, %s639
    %p646 = scmp.eq.s32.totalorder %s84, 1
    %p647 = por %p645, %p646
    %p648 = scmp.ne.s32.totalorder %s639, %s640
    %p649 = scmp.eq.s32.totalorder %s84, 0
    %p650 = por %p648, %p649
    %p651 = scmp.ne.s32.totalorder %s639, %s640
    %p652 = scmp.eq.s32.totalorder %s85, 1
    %p653 = por %p651, %p652
    %p655 = scmp.ne.s32.totalorder %s640, %s654
    %p656 = scmp.eq.s32.totalorder %s85, 0
    %p657 = por %p655, %p656
    %s659 = sadd.s32 %s658, 1
    %p662 = scmp.eq.s32.totalorder %s79, 1
    %p663 = scmp.ne.s32.totalorder %s658, %s660
    %p664 = scmp.eq.s32.totalorder %s79, 0
    %p665 = por %p663, %p664
    %p666 = scmp.ne.s32.totalorder %s658, %s660
    %p667 = scmp.eq.s32.totalorder %s84, 1
    %p668 = por %p666, %p667
    %p669 = scmp.ne.s32.totalorder %s660, %s661
    %p670 = scmp.eq.s32.totalorder %s84, 0
    %p671 = por %p669, %p670
    %p672 = scmp.ne.s32.totalorder %s660, %s661
    %p673 = scmp.eq.s32.totalorder %s85, 1
    %p674 = por %p672, %p673
    %p676 = scmp.ne.s32.totalorder %s661, %s675
    %p677 = scmp.eq.s32.totalorder %s85, 0
    %p678 = por %p676, %p677
    %s680 = sadd.s32 %s679, 1
    %p683 = scmp.eq.s32.totalorder %s79, 1
    %p684 = scmp.ne.s32.totalorder %s679, %s681
    %p685 = scmp.eq.s32.totalorder %s79, 0
    %p686 = por %p684, %p685
    %p687 = scmp.ne.s32.totalorder %s679, %s681
    %p688 = scmp.eq.s32.totalorder %s84, 1
    %p689 = por %p687, %p688
    %p690 = scmp.ne.s32.totalorder %s681, %s682
    %p691 = scmp.eq.s32.totalorder %s84, 0
    %p692 = por %p690, %p691
    %p693 = scmp.ne.s32.totalorder %s681, %s682
    %p694 = scmp.eq.s32.totalorder %s85, 1
    %p695 = por %p693, %p694
    %p697 = scmp.ne.s32.totalorder %s682, %s696
    %p698 = scmp.eq.s32.totalorder %s85, 0
    %p699 = por %p697, %p698
    %s701 = sadd.s32 %s700, 1
    %p704 = scmp.eq.s32.totalorder %s79, 1
    %p705 = scmp.ne.s32.totalorder %s700, %s702
    %p706 = scmp.eq.s32.totalorder %s79, 0
    %p707 = por %p705, %p706
    %p708 = scmp.ne.s32.totalorder %s700, %s702
    %p709 = scmp.eq.s32.totalorder %s84, 1
    %p710 = por %p708, %p709
    %p711 = scmp.ne.s32.totalorder %s702, %s703
    %p712 = scmp.eq.s32.totalorder %s84, 0
    %p713 = por %p711, %p712
    %p714 = scmp.ne.s32.totalorder %s702, %s703
    %p715 = scmp.eq.s32.totalorder %s85, 1
    %p716 = por %p714, %p715
    %p718 = scmp.ne.s32.totalorder %s703, %s717
    %p719 = scmp.eq.s32.totalorder %s85, 0
    %p720 = por %p718, %p719
    %s722 = sadd.s32 %s721, 1
    %p725 = scmp.eq.s32.totalorder %s79, 1
    %p726 = scmp.ne.s32.totalorder %s721, %s723
    %p727 = scmp.eq.s32.totalorder %s79, 0
    %p728 = por %p726, %p727
    %p729 = scmp.ne.s32.totalorder %s721, %s723
    %p730 = scmp.eq.s32.totalorder %s84, 1
    %p731 = por %p729, %p730
    %p732 = scmp.ne.s32.totalorder %s723, %s724
    %p733 = scmp.eq.s32.totalorder %s84, 0
    %p734 = por %p732, %p733
    %p735 = scmp.ne.s32.totalorder %s723, %s724
    %p736 = scmp.eq.s32.totalorder %s85, 1
    %p737 = por %p735, %p736
    %p739 = scmp.ne.s32.totalorder %s724, %s738
    %p740 = scmp.eq.s32.totalorder %s85, 0
    %p741 = por %p739, %p740
    %s743 = sadd.s32 %s742, 1
    %p746 = scmp.eq.s32.totalorder %s79, 1
    %p747 = scmp.ne.s32.totalorder %s742, %s744
    %p748 = scmp.eq.s32.totalorder %s79, 0
    %p749 = por %p747, %p748
    %p750 = scmp.ne.s32.totalorder %s742, %s744
    %p751 = scmp.eq.s32.totalorder %s84, 1
    %p752 = por %p750, %p751
    %p753 = scmp.ne.s32.totalorder %s744, %s745
    %p754 = scmp.eq.s32.totalorder %s84, 0
    %p755 = por %p753, %p754
    %p756 = scmp.ne.s32.totalorder %s744, %s745
    %p757 = scmp.eq.s32.totalorder %s85, 1
    %p758 = por %p756, %p757
    %p760 = scmp.ne.s32.totalorder %s745, %s759
    %p761 = scmp.eq.s32.totalorder %s85, 0
    %p762 = por %p760, %p761
    %s764 = sadd.s32 %s763, 1
    %p767 = scmp.eq.s32.totalorder %s79, 1
    %p768 = scmp.ne.s32.totalorder %s763, %s765
    %p769 = scmp.eq.s32.totalorder %s79, 0
    %p770 = por %p768, %p769
    %p771 = scmp.ne.s32.totalorder %s763, %s765
    %p772 = scmp.eq.s32.totalorder %s84, 1
    %p773 = por %p771, %p772
    %p774 = scmp.ne.s32.totalorder %s765, %s766
    %p775 = scmp.eq.s32.totalorder %s84, 0
    %p776 = por %p774, %p775
    %p777 = scmp.ne.s32.totalorder %s765, %s766
    %p778 = scmp.eq.s32.totalorder %s85, 1
    %p779 = por %p777, %p778
    %p781 = scmp.ne.s32.totalorder %s766, %s780
    %p782 = scmp.eq.s32.totalorder %s85, 0
    %p783 = por %p781, %p782
    %s785 = sadd.s32 %s784, 1
    %p788 = scmp.eq.s32.totalorder %s79, 1
    %p789 = scmp.ne.s32.totalorder %s784, %s786
    %p790 = scmp.eq.s32.totalorder %s79, 0
    %p791 = por %p789, %p790
    %p792 = scmp.ne.s32.totalorder %s784, %s786
    %p793 = scmp.eq.s32.totalorder %s84, 1
    %p794 = por %p792, %p793
    %p795 = scmp.ne.s32.totalorder %s786, %s787
    %p796 = scmp.eq.s32.totalorder %s84, 0
    %p797 = por %p795, %p796
    %p798 = scmp.ne.s32.totalorder %s786, %s787
    %p799 = scmp.eq.s32.totalorder %s85, 1
    %p800 = por %p798, %p799
    %p802 = scmp.ne.s32.totalorder %s787, %s801
    %p803 = scmp.eq.s32.totalorder %s85, 0
    %p804 = por %p802, %p803
    %s806 = sadd.s32 %s805, 1
    %p809 = scmp.eq.s32.totalorder %s79, 1
    %p810 = scmp.ne.s32.totalorder %s805, %s807
    %p811 = scmp.eq.s32.totalorder %s79, 0
    %p812 = por %p810, %p811
    %p813 = scmp.ne.s32.totalorder %s805, %s807
    %p814 = scmp.eq.s32.totalorder %s84, 1
    %p815 = por %p813, %p814
    %p816 = scmp.ne.s32.totalorder %s807, %s808
    %p817 = scmp.eq.s32.totalorder %s84, 0
    %p818 = por %p816, %p817
    %p819 = scmp.ne.s32.totalorder %s807, %s808
    %p820 = scmp.eq.s32.totalorder %s85, 1
    %p821 = por %p819, %p820
    %p823 = scmp.ne.s32.totalorder %s808, %s822
    %p824 = scmp.eq.s32.totalorder %s85, 0
    %p825 = por %p823, %p824
    %s827 = sadd.s32 %s826, 1
    %p830 = scmp.eq.s32.totalorder %s79, 1
    %p831 = scmp.ne.s32.totalorder %s826, %s828
    %p832 = scmp.eq.s32.totalorder %s79, 0
    %p833 = por %p831, %p832
    %p834 = scmp.ne.s32.totalorder %s826, %s828
    %p835 = scmp.eq.s32.totalorder %s84, 1
    %p836 = por %p834, %p835
    %p837 = scmp.ne.s32.totalorder %s828, %s829
    %p838 = scmp.eq.s32.totalorder %s84, 0
    %p839 = por %p837, %p838
    %p840 = scmp.ne.s32.totalorder %s828, %s829
    %p841 = scmp.eq.s32.totalorder %s85, 1
    %p842 = por %p840, %p841
    %p844 = scmp.ne.s32.totalorder %s829, %s843
    %p845 = scmp.eq.s32.totalorder %s85, 0
    %p846 = por %p844, %p845
    %s848 = sadd.s32 %s847, 1
    %p851 = scmp.eq.s32.totalorder %s79, 1
    %p852 = scmp.ne.s32.totalorder %s847, %s849
    %p853 = scmp.eq.s32.totalorder %s79, 0
    %p854 = por %p852, %p853
    %p855 = scmp.ne.s32.totalorder %s847, %s849
    %p856 = scmp.eq.s32.totalorder %s84, 1
    %p857 = por %p855, %p856
    %p858 = scmp.ne.s32.totalorder %s849, %s850
    %p859 = scmp.eq.s32.totalorder %s84, 0
    %p860 = por %p858, %p859
    %p861 = scmp.ne.s32.totalorder %s849, %s850
    %p862 = scmp.eq.s32.totalorder %s85, 1
    %p863 = por %p861, %p862
    %p865 = scmp.ne.s32.totalorder %s850, %s864
    %p866 = scmp.eq.s32.totalorder %s85, 0
    %p867 = por %p865, %p866
    %s868 = ssub.s32 %s79, %s86
    %p869 = scmp.eq.s32.totalorder %s868, 0
    %s871 = sadd.s32 %s870, 1
    %s872 = scalar_select %p869, %s870, %s871
    %p875 = pneg %p869
    %p876 = scmp.eq.s32.totalorder %s79, 1
    %p877 = por %p875, %p876
    %p878 = scmp.ne.s32.totalorder %s870, %s873
    %p879 = scmp.eq.s32.totalorder %s79, 0
    %p880 = por %p878, %p879
    %p881 = scmp.ne.s32.totalorder %s870, %s873
    %p882 = scmp.eq.s32.totalorder %s84, 1
    %p883 = por %p881, %p882
    %p884 = scmp.ne.s32.totalorder %s873, %s874
    %p885 = scmp.eq.s32.totalorder %s84, 0
    %p886 = por %p884, %p885
    %p887 = scmp.ne.s32.totalorder %s873, %s874
    %p888 = scmp.eq.s32.totalorder %s85, 1
    %p889 = por %p887, %p888
    %p891 = scmp.ne.s32.totalorder %s874, %s890
    %p892 = scmp.eq.s32.totalorder %s85, 0
    %p893 = por %p891, %p892
    %p894 = scmp.le.s32.totalorder 1, %s79
    %p895 = scmp.lt.s32.totalorder %s79, 3
    %p896 = pnand %p894, %p895
    %p897 = pneg %p896
    // Predicated region
    $region9: #{multimodal_epic_forward.1} parent=5 // pred_check
      _
    $region10: #{multimodal_epic_forward.1} parent=5 // pred_check_branch
      %899 = sbr.rel (%p896) target = $region12
    $region11: #{multimodal_epic_forward.1} parent=5 // pred_region
      %s900 = ssub.s32 %s79, 1
      // Predicated region
      $region13: #{multimodal_epic_forward.1} parent=11 // pred_check
        %p901 = pneg %p230
      $region14: #{multimodal_epic_forward.1} parent=11 // pred_check_branch
        %903 = sbr.rel (%p901) target = $region16
      $region15: #{multimodal_epic_forward.1} parent=11 // pred_region
        _
      $region16: #{multimodal_epic_forward.1} parent=11 // pred_fallthru
        _
      // Predicated region
      $region17: #{multimodal_epic_forward.1} parent=11 // pred_check
        %p904 = pneg %p251
      $region18: #{multimodal_epic_forward.1} parent=11 // pred_check_branch
        %906 = sbr.rel (%p904) target = $region20
      $region19: #{multimodal_epic_forward.1} parent=11 // pred_region
        _
      $region20: #{multimodal_epic_forward.1} parent=11 // pred_fallthru
        _
      // Predicated region
      $region21: #{multimodal_epic_forward.1} parent=11 // pred_check
        %p907 = pneg %p272
      $region22: #{multimodal_epic_forward.1} parent=11 // pred_check_branch
        %909 = sbr.rel (%p907) target = $region24
      $region23: #{multimodal_epic_forward.1} parent=11 // pred_region
        _
      $region24: #{multimodal_epic_forward.1} parent=11 // pred_fallthru
        _
      // Predicated region
      $region25: #{multimodal_epic_forward.1} parent=11 // pred_check
        %p910 = pneg %p293
      $region26: #{multimodal_epic_forward.1} parent=11 // pred_check_branch
        %912 = sbr.rel (%p910) target = $region28
      $region27: #{multimodal_epic_forward.1} parent=11 // pred_region
        _
      $region28: #{multimodal_epic_forward.1} parent=11 // pred_fallthru
        _
      // Predicated region
      $region29: #{multimodal_epic_forward.1} parent=11 // pred_check
        %p913 = pneg %p314
      $region30: #{multimodal_epic_forward.1} parent=11 // pred_check_branch
        %915 = sbr.rel (%p913) target = $region32
      $region31: #{multimodal_epic_forward.1} parent=11 // pred_region
        _
      $region32: #{multimodal_epic_forward.1} parent=11 // pred_fallthru
        _
      // Predicated region
      $region33: #{multimodal_epic_forward.1} parent=11 // pred_check
        %p916 = pneg %p335
      $region34: #{multimodal_epic_forward.1} parent=11 // pred_check_branch
        %918 = sbr.rel (%p916) target = $region36
      $region35: #{multimodal_epic_forward.1} parent=11 // pred_region
        _
      $region36: #{multimodal_epic_forward.1} parent=11 // pred_fallthru
        _
      // Predicated region
      $region37: #{multimodal_epic_forward.1} parent=11 // pred_check
        %p919 = pneg %p356
      $region38: #{multimodal_epic_forward.1} parent=11 // pred_check_branch
        %921 = sbr.rel (%p919) target = $region40
      $region39: #{multimodal_epic_forward.1} parent=11 // pred_region
        _
      $region40: #{multimodal_epic_forward.1} parent=11 // pred_fallthru
        _
      // Predicated region
      $region41: #{multimodal_epic_forward.1} parent=11 // pred_check
        %p922 = pneg %p377
      $region42: #{multimodal_epic_forward.1} parent=11 // pred_check_branch
        %924 = sbr.rel (%p922) target = $region44
      $region43: #{multimodal_epic_forward.1} parent=11 // pred_region
        _
      $region44: #{multimodal_epic_forward.1} parent=11 // pred_fallthru
        _
      // Predicated region
      $region45: #{multimodal_epic_forward.1} parent=11 // pred_check
        %p925 = pneg %p398
      $region46: #{multimodal_epic_forward.1} parent=11 // pred_check_branch
        %927 = sbr.rel (%p925) target = $region48
      $region47: #{multimodal_epic_forward.1} parent=11 // pred_region
        _
      $region48: #{multimodal_epic_forward.1} parent=11 // pred_fallthru
        _
      // Predicated region
      $region49: #{multimodal_epic_forward.1} parent=11 // pred_check
        %p928 = pneg %p419
      $region50: #{multimodal_epic_forward.1} parent=11 // pred_check_branch
        %930 = sbr.rel (%p928) target = $region52
      $region51: #{multimodal_epic_forward.1} parent=11 // pred_region
        _
      $region52: #{multimodal_epic_forward.1} parent=11 // pred_fallthru
        _
      // Predicated region
      $region53: #{multimodal_epic_forward.1} parent=11 // pred_check
        %p931 = pneg %p440
      $region54: #{multimodal_epic_forward.1} parent=11 // pred_check_branch
        %933 = sbr.rel (%p931) target = $region56
      $region55: #{multimodal_epic_forward.1} parent=11 // pred_region
        _
      $region56: #{multimodal_epic_forward.1} parent=11 // pred_fallthru
        _
      // Predicated region
      $region57: #{multimodal_epic_forward.1} parent=11 // pred_check
        %p934 = pneg %p461
      $region58: #{multimodal_epic_forward.1} parent=11 // pred_check_branch
        %936 = sbr.rel (%p934) target = $region60
      $region59: #{multimodal_epic_forward.1} parent=11 // pred_region
        _
      $region60: #{multimodal_epic_forward.1} parent=11 // pred_fallthru
        _
      // Predicated region
      $region61: #{multimodal_epic_forward.1} parent=11 // pred_check
        %p937 = pneg %p482
      $region62: #{multimodal_epic_forward.1} parent=11 // pred_check_branch
        %939 = sbr.rel (%p937) target = $region64
      $region63: #{multimodal_epic_forward.1} parent=11 // pred_region
        _
      $region64: #{multimodal_epic_forward.1} parent=11 // pred_fallthru
        _
      // Predicated region
      $region65: #{multimodal_epic_forward.1} parent=11 // pred_check
        %p940 = pneg %p503
      $region66: #{multimodal_epic_forward.1} parent=11 // pred_check_branch
        %942 = sbr.rel (%p940) target = $region68
      $region67: #{multimodal_epic_forward.1} parent=11 // pred_region
        _
      $region68: #{multimodal_epic_forward.1} parent=11 // pred_fallthru
        _
      // Predicated region
      $region69: #{multimodal_epic_forward.1} parent=11 // pred_check
        %p943 = pneg %p524
      $region70: #{multimodal_epic_forward.1} parent=11 // pred_check_branch
        %945 = sbr.rel (%p943) target = $region72
      $region71: #{multimodal_epic_forward.1} parent=11 // pred_region
        _
      $region72: #{multimodal_epic_forward.1} parent=11 // pred_fallthru
        _
      // Predicated region
      $region73: #{multimodal_epic_forward.1} parent=11 // pred_check
        %p946 = pneg %p545
      $region74: #{multimodal_epic_forward.1} parent=11 // pred_check_branch
        %948 = sbr.rel (%p946) target = $region76
      $region75: #{multimodal_epic_forward.1} parent=11 // pred_region
        _
      $region76: #{multimodal_epic_forward.1} parent=11 // pred_fallthru
        _
      // Predicated region
      $region77: #{multimodal_epic_forward.1} parent=11 // pred_check
        %p949 = pneg %p566
      $region78: #{multimodal_epic_forward.1} parent=11 // pred_check_branch
        %951 = sbr.rel (%p949) target = $region80
      $region79: #{multimodal_epic_forward.1} parent=11 // pred_region
        _
      $region80: #{multimodal_epic_forward.1} parent=11 // pred_fallthru
        _
      // Predicated region
      $region81: #{multimodal_epic_forward.1} parent=11 // pred_check
        %p952 = pneg %p587
      $region82: #{multimodal_epic_forward.1} parent=11 // pred_check_branch
        %954 = sbr.rel (%p952) target = $region84
      $region83: #{multimodal_epic_forward.1} parent=11 // pred_region
        _
      $region84: #{multimodal_epic_forward.1} parent=11 // pred_fallthru
        _
      // Predicated region
      $region85: #{multimodal_epic_forward.1} parent=11 // pred_check
        %p955 = pneg %p608
      $region86: #{multimodal_epic_forward.1} parent=11 // pred_check_branch
        %957 = sbr.rel (%p955) target = $region88
      $region87: #{multimodal_epic_forward.1} parent=11 // pred_region
        _
      $region88: #{multimodal_epic_forward.1} parent=11 // pred_fallthru
        _
      // Predicated region
      $region89: #{multimodal_epic_forward.1} parent=11 // pred_check
        %p958 = pneg %p629
      $region90: #{multimodal_epic_forward.1} parent=11 // pred_check_branch
        %960 = sbr.rel (%p958) target = $region92
      $region91: #{multimodal_epic_forward.1} parent=11 // pred_region
        _
      $region92: #{multimodal_epic_forward.1} parent=11 // pred_fallthru
        _
      // Predicated region
      $region93: #{multimodal_epic_forward.1} parent=11 // pred_check
        %p961 = pneg %p650
      $region94: #{multimodal_epic_forward.1} parent=11 // pred_check_branch
        %963 = sbr.rel (%p961) target = $region96
      $region95: #{multimodal_epic_forward.1} parent=11 // pred_region
        _
      $region96: #{multimodal_epic_forward.1} parent=11 // pred_fallthru
        _
      // Predicated region
      $region97: #{multimodal_epic_forward.1} parent=11 // pred_check
        %p964 = pneg %p671
      $region98: #{multimodal_epic_forward.1} parent=11 // pred_check_branch
        %966 = sbr.rel (%p964) target = $region100
      $region99: #{multimodal_epic_forward.1} parent=11 // pred_region
        _
      $region100: #{multimodal_epic_forward.1} parent=11 // pred_fallthru
        _
      // Predicated region
      $region101: #{multimodal_epic_forward.1} parent=11 // pred_check
        %p967 = pneg %p692
      $region102: #{multimodal_epic_forward.1} parent=11 // pred_check_branch
        %969 = sbr.rel (%p967) target = $region104
      $region103: #{multimodal_epic_forward.1} parent=11 // pred_region
        _
      $region104: #{multimodal_epic_forward.1} parent=11 // pred_fallthru
        _
      // Predicated region
      $region105: #{multimodal_epic_forward.1} parent=11 // pred_check
        %p970 = pneg %p713
      $region106: #{multimodal_epic_forward.1} parent=11 // pred_check_branch
        %972 = sbr.rel (%p970) target = $region108
      $region107: #{multimodal_epic_forward.1} parent=11 // pred_region
        _
      $region108: #{multimodal_epic_forward.1} parent=11 // pred_fallthru
        _
      // Predicated region
      $region109: #{multimodal_epic_forward.1} parent=11 // pred_check
        %p973 = pneg %p734
      $region110: #{multimodal_epic_forward.1} parent=11 // pred_check_branch
        %975 = sbr.rel (%p973) target = $region112
      $region111: #{multimodal_epic_forward.1} parent=11 // pred_region
        _
      $region112: #{multimodal_epic_forward.1} parent=11 // pred_fallthru
        _
      // Predicated region
      $region113: #{multimodal_epic_forward.1} parent=11 // pred_check
        %p976 = pneg %p755
      $region114: #{multimodal_epic_forward.1} parent=11 // pred_check_branch
        %978 = sbr.rel (%p976) target = $region116
      $region115: #{multimodal_epic_forward.1} parent=11 // pred_region
        _
      $region116: #{multimodal_epic_forward.1} parent=11 // pred_fallthru
        _
      // Predicated region
      $region117: #{multimodal_epic_forward.1} parent=11 // pred_check
        %p979 = pneg %p776
      $region118: #{multimodal_epic_forward.1} parent=11 // pred_check_branch
        %981 = sbr.rel (%p979) target = $region120
      $region119: #{multimodal_epic_forward.1} parent=11 // pred_region
        _
      $region120: #{multimodal_epic_forward.1} parent=11 // pred_fallthru
        _
      // Predicated region
      $region121: #{multimodal_epic_forward.1} parent=11 // pred_check
        %p982 = pneg %p797
      $region122: #{multimodal_epic_forward.1} parent=11 // pred_check_branch
        %984 = sbr.rel (%p982) target = $region124
      $region123: #{multimodal_epic_forward.1} parent=11 // pred_region
        _
      $region124: #{multimodal_epic_forward.1} parent=11 // pred_fallthru
        _
      // Predicated region
      $region125: #{multimodal_epic_forward.1} parent=11 // pred_check
        %p985 = pneg %p818
      $region126: #{multimodal_epic_forward.1} parent=11 // pred_check_branch
        %987 = sbr.rel (%p985) target = $region128
      $region127: #{multimodal_epic_forward.1} parent=11 // pred_region
        _
      $region128: #{multimodal_epic_forward.1} parent=11 // pred_fallthru
        _
      // Predicated region
      $region129: #{multimodal_epic_forward.1} parent=11 // pred_check
        %p988 = pneg %p839
      $region130: #{multimodal_epic_forward.1} parent=11 // pred_check_branch
        %990 = sbr.rel (%p988) target = $region132
      $region131: #{multimodal_epic_forward.1} parent=11 // pred_region
        _
      $region132: #{multimodal_epic_forward.1} parent=11 // pred_fallthru
        _
      // Predicated region
      $region133: #{multimodal_epic_forward.1} parent=11 // pred_check
        %p991 = pneg %p860
      $region134: #{multimodal_epic_forward.1} parent=11 // pred_check_branch
        %993 = sbr.rel (%p991) target = $region136
      $region135: #{multimodal_epic_forward.1} parent=11 // pred_region
        _
      $region136: #{multimodal_epic_forward.1} parent=11 // pred_fallthru
        _
    $region12: #{multimodal_epic_forward.1} parent=5 // pred_fallthru
      _
    %p994 = scmp.lt.s32.totalorder %s79, 2
    // Predicated region
    $region137: #{multimodal_epic_forward.1} parent=5 // pred_check
      %p995 = pneg %p994
    $region138: #{multimodal_epic_forward.1} parent=5 // pred_check_branch
      %997 = sbr.rel (%p995) target = $region140
    $region139: #{multimodal_epic_forward.1} parent=5 // pred_region
      // Predicated region
      $region141: #{multimodal_epic_forward.1} parent=139 // pred_check
        %p998 = pneg %p99
      $region142: #{multimodal_epic_forward.1} parent=139 // pred_check_branch
        %1000 = sbr.rel (%p998) target = $region144
      $region143: #{multimodal_epic_forward.1} parent=139 // pred_region
        %p1001 = scmp.lt.s32.totalorder %s79, 1
        %s1002 = scalar_select %p1001, %s79, 1
        %s1003 = smul.addr %s1002, 8
        %s1004 = scalar_lea.vmem %s1, %s1003
      $region144: #{multimodal_epic_forward.1} parent=139 // pred_fallthru
        _
      // Predicated region
      $region145: #{multimodal_epic_forward.1} parent=139 // pred_check
        %p1005 = pneg %p125
      $region146: #{multimodal_epic_forward.1} parent=139 // pred_check_branch
        %1007 = sbr.rel (%p1005) target = $region148
      $region147: #{multimodal_epic_forward.1} parent=139 // pred_region
        %p1008 = scmp.lt.s32.totalorder %s79, 1
        %s1009 = scalar_select %p1008, %s79, 1
        %s1010 = smul.addr %s1009, 8
        %s1011 = scalar_lea.vmem %s3, %s1010
      $region148: #{multimodal_epic_forward.1} parent=139 // pred_fallthru
        _
      // Predicated region
      $region149: #{multimodal_epic_forward.1} parent=139 // pred_check
        %p1012 = pneg %p151
      $region150: #{multimodal_epic_forward.1} parent=139 // pred_check_branch
        %1014 = sbr.rel (%p1012) target = $region152
      $region151: #{multimodal_epic_forward.1} parent=139 // pred_region
        %p1015 = scmp.lt.s32.totalorder %s79, 1
        %s1016 = scalar_select %p1015, %s79, 1
        %s1017 = scalar_lea.vmem %s5, %s1016
      $region152: #{multimodal_epic_forward.1} parent=139 // pred_fallthru
        _
      // Predicated region
      $region153: #{multimodal_epic_forward.1} parent=139 // pred_check
        %p1018 = pneg %p177
      $region154: #{multimodal_epic_forward.1} parent=139 // pred_check_branch
        %1020 = sbr.rel (%p1018) target = $region156
      $region155: #{multimodal_epic_forward.1} parent=139 // pred_region
        %p1021 = scmp.lt.s32.totalorder %s79, 1
        %s1022 = scalar_select %p1021, %s79, 1
        %s1023 = scalar_lea.vmem %s7, %s1022
      $region156: #{multimodal_epic_forward.1} parent=139 // pred_fallthru
        _
      // Predicated region
      $region157: #{multimodal_epic_forward.1} parent=139 // pred_check
        %p1024 = pneg %p203
      $region158: #{multimodal_epic_forward.1} parent=139 // pred_check_branch
        %1026 = sbr.rel (%p1024) target = $region160
      $region159: #{multimodal_epic_forward.1} parent=139 // pred_region
        %p1027 = scmp.lt.s32.totalorder %s79, 1
        %s1028 = scalar_select %p1027, %s79, 1
        %s1029 = smul.addr %s1028, 8
        %s1030 = scalar_lea.vmem %s9, %s1029
      $region160: #{multimodal_epic_forward.1} parent=139 // pred_fallthru
        _
    $region140: #{multimodal_epic_forward.1} parent=5 // pred_fallthru
      _
    %p1031 = scmp.le.s32.totalorder 1, %s79
    %p1032 = scmp.lt.s32.totalorder %s79, 3
    %p1033 = pnand %p1031, %p1032
    %p1034 = pneg %p1033
    // Predicated region
    $region161: #{multimodal_epic_forward.1} parent=5 // pred_check
      _
    $region162: #{multimodal_epic_forward.1} parent=5 // pred_check_branch
      %1036 = sbr.rel (%p1033) target = $region164
    $region163: #{multimodal_epic_forward.1} parent=5 // pred_region
      %s1037 = ssub.s32 %s79, 1
      %p1038 = scmp.lt.s32.totalorder %s84, 1
      %s1039 = scalar_select %p1038, %s84, 1
      %s1040 = smul.addr %s1039, 8
      %s1041 = scalar_lea.vmem %s1, %s1040
      %p1042 = pneg %p105
      %p1043 = pneg %p102
      %p1044 = scmp.lt.s32.totalorder %s84, 1
      %s1045 = scalar_select %p1044, %s84, 1
      %s1046 = smul.addr %s1045, 8
      %s1047 = scalar_lea.vmem %s3, %s1046
      %p1048 = pneg %p131
      %p1049 = pneg %p128
      %p1050 = scmp.lt.s32.totalorder %s84, 1
      %s1051 = scalar_select %p1050, %s84, 1
      %s1052 = scalar_lea.vmem %s5, %s1051
      %p1053 = pneg %p157
      %p1054 = pneg %p154
      %p1055 = scmp.lt.s32.totalorder %s84, 1
      %s1056 = scalar_select %p1055, %s84, 1
      %s1057 = scalar_lea.vmem %s7, %s1056
      %p1058 = pneg %p183
      %p1059 = pneg %p180
      %p1060 = scmp.lt.s32.totalorder %s84, 1
      %s1061 = scalar_select %p1060, %s84, 1
      %s1062 = smul.addr %s1061, 8
      %s1063 = scalar_lea.vmem %s9, %s1062
      %p1064 = pneg %p209
      %p1065 = pneg %p206
      %p1066 = pneg %p230
      %p1067 = pneg %p227
      %p1068 = pneg %p251
      %p1069 = pneg %p248
      %p1070 = pneg %p272
      %p1071 = pneg %p269
      %p1072 = pneg %p293
      %p1073 = pneg %p290
      %p1074 = pneg %p314
      %p1075 = pneg %p311
      %p1076 = pneg %p335
      %p1077 = pneg %p332
      %p1078 = pneg %p356
      %p1079 = pneg %p353
      %p1080 = pneg %p377
      %p1081 = pneg %p374
      %p1082 = pneg %p398
      %p1083 = pneg %p395
      %p1084 = pneg %p419
      %p1085 = pneg %p416
      %p1086 = pneg %p440
      %p1087 = pneg %p437
      %p1088 = pneg %p461
      %p1089 = pneg %p458
      %p1090 = pneg %p482
      %p1091 = pneg %p479
      %p1092 = pneg %p503
      %p1093 = pneg %p500
      %p1094 = pneg %p524
      %p1095 = pneg %p521
      %p1096 = pneg %p545
      %p1097 = pneg %p542
      %p1098 = pneg %p566
      %p1099 = pneg %p563
      %p1100 = pneg %p587
      %p1101 = pneg %p584
      %p1102 = pneg %p608
      %p1103 = pneg %p605
      %p1104 = pneg %p629
      %p1105 = pneg %p626
      %p1106 = pneg %p650
      %p1107 = pneg %p647
      %p1108 = pneg %p671
      %p1109 = pneg %p668
      %p1110 = pneg %p692
      %p1111 = pneg %p689
      %p1112 = pneg %p713
      %p1113 = pneg %p710
      %p1114 = pneg %p734
      %p1115 = pneg %p731
      %p1116 = pneg %p755
      %p1117 = pneg %p752
      %p1118 = pneg %p776
      %p1119 = pneg %p773
      %p1120 = pneg %p797
      %p1121 = pneg %p794
      %p1122 = pneg %p818
      %p1123 = pneg %p815
      %p1124 = pneg %p839
      %p1125 = pneg %p836
      %p1126 = pneg %p860
      %p1127 = pneg %p857
      %p1128 = pneg %p886
      %p1129 = pneg %p883
      %p1130 = scmp.lt.s32.totalorder %s84, 1
      %s1131 = scalar_select %p1130, %s84, 1
      %s1132 = smul.addr %s1131, 8
      %s1133 = scalar_lea.vmem %s73, %s1132
      %p1134 = scmp.lt.s32.totalorder %s84, 1
      %s1135 = scalar_select %p1134, %s84, 1
      %s1136 = smul.addr %s1135, 8
      %s1137 = scalar_lea.vmem %s1, %s1136
      %p1138 = scmp.lt.s32.totalorder %s84, 1
      %s1139 = scalar_select %p1138, %s84, 1
      %s1140 = smul.addr %s1139, 8
      %s1141 = scalar_lea.vmem %s3, %s1140
      %p1142 = scmp.lt.s32.totalorder %s84, 1
      %s1143 = scalar_select %p1142, %s84, 1
      %s1144 = scalar_lea.vmem %s5, %s1143
      %p1145 = scmp.lt.s32.totalorder %s84, 1
      %s1146 = scalar_select %p1145, %s84, 1
      %s1147 = scalar_lea.vmem %s7, %s1146
      %p1148 = scmp.lt.s32.totalorder %s84, 1
      %s1149 = scalar_select %p1148, %s84, 1
      %s1150 = smul.addr %s1149, 8
      %s1151 = scalar_lea.vmem %s9, %s1150
      %p1152 = scmp.lt.s32.totalorder %s84, 1
      %s1153 = scalar_select %p1152, %s84, 1
      %s1154 = smul.addr %s1153, 8
      %s1155 = scalar_lea.vmem %s73, %s1154
      %v1156 = vld [vmem:[%s1137] sm:$0xff]
      %v1157 = vld [vmem:[%s1141] sm:$0xff]
      %v1158 = vld [vmem:[%s1144] sm:$0x1]
      %v1159 = vld [vmem:[%s1147] sm:$0x1]
      %v1160 = vld [vmem:[%s1151] sm:$0xff]
      %v1161 = vld [vmem:[%s11] sm:$0x7]
      %v1162 = vld [vmem:[%s13] sm:$0x1]
      %v1164 = vperm.slane %v1162, 0
      %vm1166 = vcmask 23552
      %v1168 = vsel %vm1166, %v1156, 0
      %vm1170 = vcmask 1042432
      %v1172 = vsel %vm1170, %v1161, 0
      %1174 = vmatpush.msra.mxu0 0.0
      %1175 = vmatpush.msra.mxu0 0.0
      %1176 = vmatpush.msra.mxu0 0.0
      %1177 = vmatpush.msra.mxu0 0.0
      %1178 = vmatpush.msra.mxu0 0.0
      %1179 = vmatpush.msra.mxu0 0.0
      %1180 = vmatpush.msra.mxu0 0.0
      %1181 = vmatpush.msra.mxu0 0.0
      %1182 = vmatpush.msra.mxu0 0.0
      %1183 = vmatpush.msra.mxu0 0.0
      %1184 = vmatpush.msra.mxu0 0.0
      %1185 = vmatpush.msra.mxu0 0.0
      %1186 = vmatpush.msra.mxu0 0.0
      %1187 = vmatpush.msra.mxu0 0.0
      %1188 = vmatpush.msra.mxu0 0.0
      %1189 = vmatpush.msra.mxu0 %v1172
      %1190 = vmatmul.f32.gmra.mxu0 %v1168
      %v1191 = vpop.f32.mrf.mxu0
      %v1192 = vadd.f32 %v1164, %v1191
      %1193 = vdwg.mxu0
      %v1194 = vld [vmem:[%s17] sm:$0xff]
      %v1195 = vld [vmem:[%s19] sm:$0xf]
      %vm1196 = vcmask 31744
      %v1198 = vsel %vm1196, %v1157, 0
      %vm1200 = vcmask 1043456
      %v1202 = vsel %vm1200, %v1195, 0
      %1204 = vmatpush.msra.mxu0 0.0
      %1205 = vmatpush.msra.mxu0 0.0
      %1206 = vmatpush.msra.mxu0 0.0
      %1207 = vmatpush.msra.mxu0 0.0
      %1208 = vmatpush.msra.mxu0 0.0
      %1209 = vmatpush.msra.mxu0 0.0
      %1210 = vmatpush.msra.mxu0 0.0
      %1211 = vmatpush.msra.mxu0 0.0
      %1212 = vmatpush.msra.mxu0 0.0
      %1213 = vmatpush.msra.mxu0 0.0
      %1214 = vmatpush.msra.mxu0 0.0
      %1215 = vmatpush.msra.mxu0 0.0
      %1216 = vmatpush.msra.mxu0 0.0
      %1217 = vmatpush.msra.mxu0 0.0
      %1218 = vmatpush.msra.mxu0 0.0
      %1219 = vmatpush.msra.mxu0 %v1202
      %1220 = vmatmul.f32.gmra.mxu0 %v1198
      %v1221 = vpop.f32.mrf.mxu0
      %v1222 = vadd.f32 0.0, %v1221
      %1223 = vdwg.mxu0
      %vm1224 = vcmask 64512
      %v1226 = vsel %vm1224, %v1192, 0
      %1228 = vmatpush.msra.mxu0 0.0
      %1229 = vmatpush.msra.mxu0 0.0
      %1230 = vmatpush.msra.mxu0 0.0
      %1231 = vmatpush.msra.mxu0 0.0
      %1232 = vmatpush.msra.mxu0 0.0
      %1233 = vmatpush.msra.mxu0 0.0
      %1234 = vmatpush.msra.mxu0 0.0
      %1235 = vmatpush.msra.mxu0 0.0
      %1236 = vmatpush.msra.mxu0 0.0
      %1237 = vmatpush.msra.mxu0 0.0
      %1238 = vmatpush.msra.mxu0 0.0
      %1239 = vmatpush.msra.mxu0 0.0
      %1240 = vmatpush.msra.mxu0 0.0
      %1241 = vmatpush.msra.mxu0 0.0
      %1242 = vmatpush.msra.mxu0 0.0
      %1243 = vmatpush.msra.mxu0 %v1194
      %1244 = vmatmul.f32.gmra.mxu0 %v1226
      %v1245 = vpop.f32.mrf.mxu0
      %v1246 = vadd.f32 %v1222, %v1245
      %1247 = vdwg.mxu0
      %v1248 = vld [vmem:[%s15] sm:$0xff]
      %v1250 = vsel %vm1224, %v1158, 0
      %1252 = vmatpush.msra.mxu0 0.0
      %1253 = vmatpush.msra.mxu0 0.0
      %1254 = vmatpush.msra.mxu0 0.0
      %1255 = vmatpush.msra.mxu0 0.0
      %1256 = vmatpush.msra.mxu0 0.0
      %1257 = vmatpush.msra.mxu0 0.0
      %1258 = vmatpush.msra.mxu0 0.0
      %1259 = vmatpush.msra.mxu0 0.0
      %1260 = vmatpush.msra.mxu0 0.0
      %1261 = vmatpush.msra.mxu0 0.0
      %1262 = vmatpush.msra.mxu0 0.0
      %1263 = vmatpush.msra.mxu0 0.0
      %1264 = vmatpush.msra.mxu0 0.0
      %1265 = vmatpush.msra.mxu0 0.0
      %1266 = vmatpush.msra.mxu0 0.0
      %1267 = vmatpush.msra.mxu0 %v1248
      %1268 = vmatmul.f32.gmra.mxu0 %v1250
      %v1269 = vpop.f32.mrf.mxu0
      %v1270 = vadd.f32 0.0, %v1269
      %1271 = vdwg.mxu0
      %v1272 = vperm.slane %v1270, 0
      %v1273 = vadd.f32 %v1246, %v1272
      %1275 = vset.pattern.permute.xlu0 0
      %1276 = vperm.xlu0 %1275, %v1160
      %v1277 = vpop.permute.xlu0 %1276
      %v1279 = vmul.f32 %v1277, %v1273
      %v1280 = vld [vmem:[%s21] sm:$0x1]
      %v1282 = vperm.slane %v1280, 0
      %v1284 = vadd.f32 %v1279, %v1282
      %vm1285 = vcmp.ge.f32.partialorder %v1284, 0.0
      %v1286 = vmul.f32 %v1284, 0.01
      %v1287 = vsel %vm1285, %v1284, %v1286
      %vm1288 = vcmask 7168
      %v1289 = vsel %vm1288, %v1160, 0.0
      %v1290 = vrot.slane %v1289, 4
      %v1291 = vadd.f32 %v1289, %v1290
      %v1292 = vrot.slane %v1291, 2
      %v1293 = vadd.f32 %v1291, %v1292
      %v1294 = vrot.slane %v1293, 1
      %v1295 = vadd.f32 %v1293, %v1294
      %v1296 = vrcp.pop %v1295
      %v1297 = vmul.f32 %v1295, %v1296
      %v1298 = vsub.f32 1.0, %v1297
      %v1299 = vmul.f32 %v1296, %v1298
      %v1300 = vadd.f32 %v1296, %v1299
      %vm1301 = vweird.f32 %v1295
      %vm1302 = vweird.f32 %v1296
      %vm1303 = vmor %vm1301, %vm1302
      %v1304 = vsel %vm1303, %v1296, %v1300
      %v1305 = vand.u32 2147483647, %v1295
      %vm1306 = vcmp.eq.f32.partialorder %v1305, 8.507059e+37
      %v1307 = vand.u32 %v1295, 2147483648
      %v1308 = vor.u32 1.1754944e-38, %v1307
      %v1309 = vsel %vm1306, %v1308, %v1304
      %v1310 = vmul.f32 1.0, %v1309
      %v1311 = vmul.f32 %v1287, %v1277
      %vm1312 = vcmask 261120
      %v1313 = vsel %vm1312, %v1311, 0.0
      %v1314 = vrot.slane %v1313, 4
      %v1315 = vadd.f32 %v1313, %v1314
      %v1316 = vrot.slane %v1315, 2
      %v1317 = vadd.f32 %v1315, %v1316
      %v1318 = vrot.slane %v1317, 1
      %v1319 = vadd.f32 %v1317, %v1318
      %v1320 = vld [vmem:[%s23] sm:$0xff]
      %v1321 = vld [vmem:[%s23 + $0x8] sm:$0xff]
      %v1322 = vld [vmem:[%s23 + $0x10] sm:$0xff]
      %v1323 = vld [vmem:[%s23 + $0x18] sm:$0xff]
      %v1325 = vsel %vm1312, %v1319, 0
      %1327 = vmatpush.msra.mxu0 0.0
      %1328 = vmatpush.msra.mxu0 0.0
      %1329 = vmatpush.msra.mxu0 0.0
      %1330 = vmatpush.msra.mxu0 0.0
      %1331 = vmatpush.msra.mxu0 0.0
      %1332 = vmatpush.msra.mxu0 0.0
      %1333 = vmatpush.msra.mxu0 0.0
      %1334 = vmatpush.msra.mxu0 0.0
      %1335 = vmatpush.msra.mxu0 0.0
      %1336 = vmatpush.msra.mxu0 0.0
      %1337 = vmatpush.msra.mxu0 0.0
      %1338 = vmatpush.msra.mxu0 0.0
      %1339 = vmatpush.msra.mxu0 %v1323
      %1340 = vmatpush.msra.mxu0 %v1322
      %1341 = vmatpush.msra.mxu0 %v1321
      %1342 = vmatpush.msra.mxu0 %v1320
      %1343 = vmatmul.f32.gmra.mxu0 %v1325
      %v1344 = vpop.f32.mrf.mxu0
      %v1345 = vadd.f32 0.0, %v1344
      %1346 = vdwg.mxu0
      %1348 = vset.pattern.permute.xlu0 0
      %1349 = vperm.xlu0 %1348, %v1310
      %v1350 = vpop.permute.xlu0 %1349
      %v1352 = vmul.f32 %v1345, %v1350
      %1354 = vrot.lane.b32.xlu0 %v1345, 96
      %v1355 = vpop.permute.xlu0 %1354
      %v1357 = vadd.f32 %v1352, %v1355
      %v1358 = vld [vmem:[%s25] sm:$0xff]
      %v1359 = vld [vmem:[%s25 + $0x8] sm:$0x3f]
      %vm1360 = vcmask 113664
      %v1362 = vsel %vm1360, %v1159, 0
      %vm1364 = vcmask 1045504
      %v1366 = vsel %vm1364, %v1359, 0
      %1368 = vmatpush.msra.mxu0 0.0
      %1369 = vmatpush.msra.mxu0 0.0
      %1370 = vmatpush.msra.mxu0 0.0
      %1371 = vmatpush.msra.mxu0 0.0
      %1372 = vmatpush.msra.mxu0 0.0
      %1373 = vmatpush.msra.mxu0 0.0
      %1374 = vmatpush.msra.mxu0 0.0
      %1375 = vmatpush.msra.mxu0 0.0
      %1376 = vmatpush.msra.mxu0 0.0
      %1377 = vmatpush.msra.mxu0 0.0
      %1378 = vmatpush.msra.mxu0 0.0
      %1379 = vmatpush.msra.mxu0 0.0
      %1380 = vmatpush.msra.mxu0 0.0
      %1381 = vmatpush.msra.mxu0 0.0
      %1382 = vmatpush.msra.mxu0 %v1366
      %1383 = vmatpush.msra.mxu0 %v1358
      %1384 = vmatmul.f32.gmra.mxu0 %v1362
      %v1385 = vpop.f32.mrf.mxu0
      %v1386 = vadd.f32 0.0, %v1385
      %1387 = vdwg.mxu0
      %v1388 = vadd.f32 %v1357, %v1386
      %v1389 = vld [vmem:[%s27] sm:$0x1]
      %v1390 = vadd.f32 %v1388, %v1389
      %vm1391 = vcmp.ge.f32.partialorder %v1390, 0.0
      %v1392 = vmul.f32 %v1390, 0.01
      %v1393 = vsel %vm1391, %v1390, %v1392
      %v1394 = vld [vmem:[%s29] sm:$0xff]
      %v1395 = vld [vmem:[%s29 + $0x8] sm:$0xff]
      %v1396 = vld [vmem:[%s29 + $0x10] sm:$0xff]
      %v1397 = vld [vmem:[%s29 + $0x18] sm:$0xff]
      %v1398 = vld [vmem:[%s31] sm:$0x1]
      %v1400 = vsel %vm1312, %v1393, 0
      %1402 = vmatpush.msra.mxu0 0.0
      %1403 = vmatpush.msra.mxu0 0.0
      %1404 = vmatpush.msra.mxu0 0.0
      %1405 = vmatpush.msra.mxu0 0.0
      %1406 = vmatpush.msra.mxu0 0.0
      %1407 = vmatpush.msra.mxu0 0.0
      %1408 = vmatpush.msra.mxu0 0.0
      %1409 = vmatpush.msra.mxu0 0.0
      %1410 = vmatpush.msra.mxu0 0.0
      %1411 = vmatpush.msra.mxu0 0.0
      %1412 = vmatpush.msra.mxu0 0.0
      %1413 = vmatpush.msra.mxu0 0.0
      %1414 = vmatpush.msra.mxu0 %v1397
      %1415 = vmatpush.msra.mxu0 %v1396
      %1416 = vmatpush.msra.mxu0 %v1395
      %1417 = vmatpush.msra.mxu0 %v1394
      %1418 = vmatmul.f32.gmra.mxu0 %v1400
      %v1419 = vpop.f32.mrf.mxu0
      %v1420 = vadd.f32 %v1398, %v1419
      %1421 = vdwg.mxu0
      %vm1422 = vcmp.ge.f32.partialorder %v1420, 0.0
      %v1423 = vmul.f32 %v1420, 0.01
      %v1424 = vsel %vm1422, %v1420, %v1423
      %v1425 = vld [vmem:[%s33] sm:$0xff]
      %v1426 = vld [vmem:[%s33 + $0x8] sm:$0xff]
      %v1427 = vld [vmem:[%s33 + $0x10] sm:$0xff]
      %v1428 = vld [vmem:[%s33 + $0x18] sm:$0xff]
      %v1429 = vld [vmem:[%s35] sm:$0x1]
      %v1431 = vsel %vm1312, %v1424, 0
      %1433 = vmatpush.msra.mxu0 0.0
      %1434 = vmatpush.msra.mxu0 0.0
      %1435 = vmatpush.msra.mxu0 0.0
      %1436 = vmatpush.msra.mxu0 0.0
      %1437 = vmatpush.msra.mxu0 0.0
      %1438 = vmatpush.msra.mxu0 0.0
      %1439 = vmatpush.msra.mxu0 0.0
      %1440 = vmatpush.msra.mxu0 0.0
      %1441 = vmatpush.msra.mxu0 0.0
      %1442 = vmatpush.msra.mxu0 0.0
      %1443 = vmatpush.msra.mxu0 0.0
      %1444 = vmatpush.msra.mxu0 0.0
      %1445 = vmatpush.msra.mxu0 %v1428
      %1446 = vmatpush.msra.mxu0 %v1427
      %1447 = vmatpush.msra.mxu0 %v1426
      %1448 = vmatpush.msra.mxu0 %v1425
      %1449 = vmatmul.f32.gmra.mxu0 %v1431
      %v1450 = vpop.f32.mrf.mxu0
      %v1451 = vadd.f32 %v1429, %v1450
      %1452 = vdwg.mxu0
      %vm1453 = vcmp.ge.f32.partialorder %v1451, 0.0
      %v1454 = vmul.f32 %v1451, 0.01
      %v1455 = vsel %vm1453, %v1451, %v1454
      %v1456 = vmul.f32 %v1311, %v1277
      %v1457 = vsel %vm1312, %v1456, 0.0
      %v1458 = vrot.slane %v1457, 4
      %v1459 = vadd.f32 %v1457, %v1458
      %v1460 = vrot.slane %v1459, 2
      %v1461 = vadd.f32 %v1459, %v1460
      %v1462 = vrot.slane %v1461, 1
      %v1463 = vadd.f32 %v1461, %v1462
      %v1464 = vld [vmem:[%s37] sm:$0xff]
      %v1465 = vld [vmem:[%s37 + $0x8] sm:$0xff]
      %v1466 = vld [vmem:[%s37 + $0x10] sm:$0xff]
      %v1467 = vld [vmem:[%s37 + $0x18] sm:$0xff]
      %v1469 = vsel %vm1312, %v1463, 0
      %1471 = vmatpush.msra.mxu0 0.0
      %1472 = vmatpush.msra.mxu0 0.0
      %1473 = vmatpush.msra.mxu0 0.0
      %1474 = vmatpush.msra.mxu0 0.0
      %1475 = vmatpush.msra.mxu0 0.0
      %1476 = vmatpush.msra.mxu0 0.0
      %1477 = vmatpush.msra.mxu0 0.0
      %1478 = vmatpush.msra.mxu0 0.0
      %1479 = vmatpush.msra.mxu0 0.0
      %1480 = vmatpush.msra.mxu0 0.0
      %1481 = vmatpush.msra.mxu0 0.0
      %1482 = vmatpush.msra.mxu0 0.0
      %1483 = vmatpush.msra.mxu0 %v1467
      %1484 = vmatpush.msra.mxu0 %v1466
      %1485 = vmatpush.msra.mxu0 %v1465
      %1486 = vmatpush.msra.mxu0 %v1464
      %1487 = vmatmul.f32.gmra.mxu0 %v1469
      %v1488 = vpop.f32.mrf.mxu0
      %v1489 = vadd.f32 0.0, %v1488
      %1490 = vdwg.mxu0
      %v1491 = vmul.f32 %v1489, %v1350
      %1493 = vrot.lane.b32.xlu0 %v1489, 96
      %v1494 = vpop.permute.xlu0 %1493
      %v1496 = vadd.f32 %v1491, %v1494
      %v1497 = vld [vmem:[%s39] sm:$0xff]
      %v1499 = vsel %vm1224, %v1455, 0
      %1501 = vmatpush.msra.mxu0 0.0
      %1502 = vmatpush.msra.mxu0 0.0
      %1503 = vmatpush.msra.mxu0 0.0
      %1504 = vmatpush.msra.mxu0 0.0
      %1505 = vmatpush.msra.mxu0 0.0
      %1506 = vmatpush.msra.mxu0 0.0
      %1507 = vmatpush.msra.mxu0 0.0
      %1508 = vmatpush.msra.mxu0 0.0
      %1509 = vmatpush.msra.mxu0 0.0
      %1510 = vmatpush.msra.mxu0 0.0
      %1511 = vmatpush.msra.mxu0 0.0
      %1512 = vmatpush.msra.mxu0 0.0
      %1513 = vmatpush.msra.mxu0 0.0
      %1514 = vmatpush.msra.mxu0 0.0
      %1515 = vmatpush.msra.mxu0 0.0
      %1516 = vmatpush.msra.mxu0 %v1497
      %1517 = vmatmul.f32.gmra.mxu0 %v1499
      %v1518 = vpop.f32.mrf.mxu0
      %v1519 = vadd.f32 0.0, %v1518
      %1520 = vdwg.mxu0
      %v1521 = vadd.f32 %v1496, %v1519
      %v1522 = vld [vmem:[%s41] sm:$0xff]
      %v1523 = vld [vmem:[%s41 + $0x8] sm:$0x3f]
      %v1525 = vsel %vm1364, %v1523, 0
      %1527 = vmatpush.msra.mxu0 0.0
      %1528 = vmatpush.msra.mxu0 0.0
      %1529 = vmatpush.msra.mxu0 0.0
      %1530 = vmatpush.msra.mxu0 0.0
      %1531 = vmatpush.msra.mxu0 0.0
      %1532 = vmatpush.msra.mxu0 0.0
      %1533 = vmatpush.msra.mxu0 0.0
      %1534 = vmatpush.msra.mxu0 0.0
      %1535 = vmatpush.msra.mxu0 0.0
      %1536 = vmatpush.msra.mxu0 0.0
      %1537 = vmatpush.msra.mxu0 0.0
      %1538 = vmatpush.msra.mxu0 0.0
      %1539 = vmatpush.msra.mxu0 0.0
      %1540 = vmatpush.msra.mxu0 0.0
      %1541 = vmatpush.msra.mxu0 %v1525
      %1542 = vmatpush.msra.mxu0 %v1522
      %1543 = vmatmul.f32.gmra.mxu0 %v1362
      %v1544 = vpop.f32.mrf.mxu0
      %v1545 = vadd.f32 0.0, %v1544
      %1546 = vdwg.mxu0
      %v1547 = vadd.f32 %v1521, %v1545
      %v1548 = vld [vmem:[%s43] sm:$0x1]
      %v1549 = vadd.f32 %v1547, %v1548
      %vm1550 = vcmp.ge.f32.partialorder %v1549, 0.0
      %v1551 = vmul.f32 %v1549, 0.01
      %v1552 = vsel %vm1550, %v1549, %v1551
      %v1553 = vld [vmem:[%s45] sm:$0xff]
      %v1554 = vld [vmem:[%s45 + $0x8] sm:$0xff]
      %v1555 = vld [vmem:[%s45 + $0x10] sm:$0xff]
      %v1556 = vld [vmem:[%s45 + $0x18] sm:$0xff]
      %v1557 = vld [vmem:[%s47] sm:$0x1]
      %v1559 = vsel %vm1312, %v1552, 0
      %1561 = vmatpush.msra.mxu0 0.0
      %1562 = vmatpush.msra.mxu0 0.0
      %1563 = vmatpush.msra.mxu0 0.0
      %1564 = vmatpush.msra.mxu0 0.0
      %1565 = vmatpush.msra.mxu0 0.0
      %1566 = vmatpush.msra.mxu0 0.0
      %1567 = vmatpush.msra.mxu0 0.0
      %1568 = vmatpush.msra.mxu0 0.0
      %1569 = vmatpush.msra.mxu0 0.0
      %1570 = vmatpush.msra.mxu0 0.0
      %1571 = vmatpush.msra.mxu0 0.0
      %1572 = vmatpush.msra.mxu0 0.0
      %1573 = vmatpush.msra.mxu0 %v1556
      %1574 = vmatpush.msra.mxu0 %v1555
      %1575 = vmatpush.msra.mxu0 %v1554
      %1576 = vmatpush.msra.mxu0 %v1553
      %1577 = vmatmul.f32.gmra.mxu0 %v1559
      %v1578 = vpop.f32.mrf.mxu0
      %v1579 = vadd.f32 %v1557, %v1578
      %1580 = vdwg.mxu0
      %v1581 = vadd.f32 %v1579, %v1455
      %vm1582 = vcmp.ge.f32.partialorder %v1581, 0.0
      %v1583 = vmul.f32 %v1581, 0.01
      %v1584 = vsel %vm1582, %v1581, %v1583
      %v1585 = vld [vmem:[%s51] sm:$0xff]
      %v1586 = vld [vmem:[%s53] sm:$0xff]
      %v1587 = vld [vmem:[%s53 + $0x8] sm:$0x3f]
      %v1589 = vsel %vm1364, %v1587, 0
      %1591 = vmatpush.msra.mxu0 0.0
      %1592 = vmatpush.msra.mxu0 0.0
      %1593 = vmatpush.msra.mxu0 0.0
      %1594 = vmatpush.msra.mxu0 0.0
      %1595 = vmatpush.msra.mxu0 0.0
      %1596 = vmatpush.msra.mxu0 0.0
      %1597 = vmatpush.msra.mxu0 0.0
      %1598 = vmatpush.msra.mxu0 0.0
      %1599 = vmatpush.msra.mxu0 0.0
      %1600 = vmatpush.msra.mxu0 0.0
      %1601 = vmatpush.msra.mxu0 0.0
      %1602 = vmatpush.msra.mxu0 0.0
      %1603 = vmatpush.msra.mxu0 0.0
      %1604 = vmatpush.msra.mxu0 0.0
      %1605 = vmatpush.msra.mxu0 %v1589
      %1606 = vmatpush.msra.mxu0 %v1586
      %1607 = vmatmul.f32.gmra.mxu0 %v1362
      %v1608 = vpop.f32.mrf.mxu0
      %v1609 = vadd.f32 0.0, %v1608
      %1610 = vdwg.mxu0
      %v1612 = vsel %vm1224, %v1584, 0
      %1614 = vmatpush.msra.mxu0 0.0
      %1615 = vmatpush.msra.mxu0 0.0
      %1616 = vmatpush.msra.mxu0 0.0
      %1617 = vmatpush.msra.mxu0 0.0
      %1618 = vmatpush.msra.mxu0 0.0
      %1619 = vmatpush.msra.mxu0 0.0
      %1620 = vmatpush.msra.mxu0 0.0
      %1621 = vmatpush.msra.mxu0 0.0
      %1622 = vmatpush.msra.mxu0 0.0
      %1623 = vmatpush.msra.mxu0 0.0
      %1624 = vmatpush.msra.mxu0 0.0
      %1625 = vmatpush.msra.mxu0 0.0
      %1626 = vmatpush.msra.mxu0 0.0
      %1627 = vmatpush.msra.mxu0 0.0
      %1628 = vmatpush.msra.mxu0 0.0
      %1629 = vmatpush.msra.mxu0 %v1585
      %1630 = vmatmul.f32.gmra.mxu0 %v1612
      %v1631 = vpop.f32.mrf.mxu0
      %v1632 = vadd.f32 %v1609, %v1631
      %1633 = vdwg.mxu0
      %v1634 = vld [vmem:[%s55] sm:$0x1]
      %v1635 = vadd.f32 %v1632, %v1634
      %v1636 = vld [vmem:[%s49] sm:$0xff]
      %v1637 = vld [vmem:[%s49 + $0x8] sm:$0xff]
      %v1638 = vld [vmem:[%s49 + $0x10] sm:$0xff]
      %v1639 = vld [vmem:[%s49 + $0x18] sm:$0xff]
      %v1640 = vperm.slane %v1635, 0
      %v1642 = vsel %vm1312, %v1311, 0
      %1644 = vmatpush.msra.mxu0 0.0
      %1645 = vmatpush.msra.mxu0 0.0
      %1646 = vmatpush.msra.mxu0 0.0
      %1647 = vmatpush.msra.mxu0 0.0
      %1648 = vmatpush.msra.mxu0 0.0
      %1649 = vmatpush.msra.mxu0 0.0
      %1650 = vmatpush.msra.mxu0 0.0
      %1651 = vmatpush.msra.mxu0 0.0
      %1652 = vmatpush.msra.mxu0 0.0
      %1653 = vmatpush.msra.mxu0 0.0
      %1654 = vmatpush.msra.mxu0 0.0
      %1655 = vmatpush.msra.mxu0 0.0
      %1656 = vmatpush.msra.mxu0 %v1639
      %1657 = vmatpush.msra.mxu0 %v1638
      %1658 = vmatpush.msra.mxu0 %v1637
      %1659 = vmatpush.msra.mxu0 %v1636
      %1660 = vmatmul.f32.gmra.mxu0 %v1642
      %v1661 = vpop.f32.mrf.mxu0
      %v1662 = vadd.f32 %v1640, %v1661
      %1663 = vdwg.mxu0
      %vm1664 = vcmp.ge.f32.partialorder %v1662, 0.0
      %v1665 = vmul.f32 %v1662, 0.01
      %v1666 = vsel %vm1664, %v1662, %v1665
      %v1667 = vld [vmem:[%s57] sm:$0xff]
      %v1668 = vld [vmem:[%s57 + $0x8] sm:$0xff]
      %v1669 = vld [vmem:[%s57 + $0x10] sm:$0xff]
      %v1670 = vld [vmem:[%s57 + $0x18] sm:$0xff]
      %v1671 = vld [vmem:[%s59] sm:$0x1]
      %v1673 = vperm.slane %v1671, 0
      %v1676 = vsel %vm1312, %v1666, 0
      %1678 = vmatpush.msra.mxu0 0.0
      %1679 = vmatpush.msra.mxu0 0.0
      %1680 = vmatpush.msra.mxu0 0.0
      %1681 = vmatpush.msra.mxu0 0.0
      %1682 = vmatpush.msra.mxu0 0.0
      %1683 = vmatpush.msra.mxu0 0.0
      %1684 = vmatpush.msra.mxu0 0.0
      %1685 = vmatpush.msra.mxu0 0.0
      %1686 = vmatpush.msra.mxu0 0.0
      %1687 = vmatpush.msra.mxu0 0.0
      %1688 = vmatpush.msra.mxu0 0.0
      %1689 = vmatpush.msra.mxu0 0.0
      %1690 = vmatpush.msra.mxu0 %v1670
      %1691 = vmatpush.msra.mxu0 %v1669
      %1692 = vmatpush.msra.mxu0 %v1668
      %1693 = vmatpush.msra.mxu0 %v1667
      %1694 = vmatmul.f32.gmra.mxu0 %v1676
      %v1695 = vpop.f32.mrf.mxu0
      %v1696 = vadd.f32 %v1673, %v1695
      %1697 = vdwg.mxu0
      %v1698 = vadd.f32 %v1696, %v1311
      %vm1699 = vcmp.ge.f32.partialorder %v1698, 0.0
      %v1700 = vmul.f32 %v1698, 0.01
      %v1701 = vsel %vm1699, %v1698, %v1700
      %v1702 = vmul.f32 %v1701, %v1277
      %v1703 = vmul.f32 %v1702, %v1277
      %v1704 = vsel %vm1312, %v1703, 0.0
      %v1705 = vrot.slane %v1704, 4
      %v1706 = vadd.f32 %v1704, %v1705
      %v1707 = vrot.slane %v1706, 2
      %v1708 = vadd.f32 %v1706, %v1707
      %v1709 = vrot.slane %v1708, 1
      %v1710 = vadd.f32 %v1708, %v1709
      %s1711 = scalar_lea.vmem %s37, 32
      %v1712 = vld [vmem:[%s1711] sm:$0xff]
      %v1713 = vld [vmem:[%s1711 + $0x8] sm:$0xff]
      %v1714 = vld [vmem:[%s1711 + $0x10] sm:$0xff]
      %v1715 = vld [vmem:[%s1711 + $0x18] sm:$0xff]
      %v1717 = vsel %vm1312, %v1710, 0
      %1719 = vmatpush.msra.mxu0 0.0
      %1720 = vmatpush.msra.mxu0 0.0
      %1721 = vmatpush.msra.mxu0 0.0
      %1722 = vmatpush.msra.mxu0 0.0
      %1723 = vmatpush.msra.mxu0 0.0
      %1724 = vmatpush.msra.mxu0 0.0
      %1725 = vmatpush.msra.mxu0 0.0
      %1726 = vmatpush.msra.mxu0 0.0
      %1727 = vmatpush.msra.mxu0 0.0
      %1728 = vmatpush.msra.mxu0 0.0
      %1729 = vmatpush.msra.mxu0 0.0
      %1730 = vmatpush.msra.mxu0 0.0
      %1731 = vmatpush.msra.mxu0 %v1715
      %1732 = vmatpush.msra.mxu0 %v1714
      %1733 = vmatpush.msra.mxu0 %v1713
      %1734 = vmatpush.msra.mxu0 %v1712
      %1735 = vmatmul.f32.gmra.mxu0 %v1717
      %v1736 = vpop.f32.mrf.mxu0
      %v1737 = vadd.f32 0.0, %v1736
      %1738 = vdwg.mxu0
      %v1739 = vmul.f32 %v1737, %v1350
      %1741 = vrot.lane.b32.xlu0 %v1737, 96
      %v1742 = vpop.permute.xlu0 %1741
      %v1744 = vadd.f32 %v1739, %v1742
      %s1745 = scalar_lea.vmem %s39, 8
      %v1746 = vld [vmem:[%s1745] sm:$0xff]
      %1747 = vmatpush.msra.mxu0 0.0
      %1748 = vmatpush.msra.mxu0 0.0
      %1749 = vmatpush.msra.mxu0 0.0
      %1750 = vmatpush.msra.mxu0 0.0
      %1751 = vmatpush.msra.mxu0 0.0
      %1752 = vmatpush.msra.mxu0 0.0
      %1753 = vmatpush.msra.mxu0 0.0
      %1754 = vmatpush.msra.mxu0 0.0
      %1755 = vmatpush.msra.mxu0 0.0
      %1756 = vmatpush.msra.mxu0 0.0
      %1757 = vmatpush.msra.mxu0 0.0
      %1758 = vmatpush.msra.mxu0 0.0
      %1759 = vmatpush.msra.mxu0 0.0
      %1760 = vmatpush.msra.mxu0 0.0
      %1761 = vmatpush.msra.mxu0 0.0
      %1762 = vmatpush.msra.mxu0 %v1746
      %1763 = vmatmul.f32.gmra.mxu0 %v1612
      %v1764 = vpop.f32.mrf.mxu0
      %v1765 = vadd.f32 0.0, %v1764
      %1766 = vdwg.mxu0
      %v1767 = vadd.f32 %v1744, %v1765
      %s1768 = scalar_lea.vmem %s41, 16
      %v1769 = vld [vmem:[%s1768] sm:$0xff]
      %v1770 = vld [vmem:[%s1768 + $0x8] sm:$0x3f]
      %v1772 = vsel %vm1364, %v1770, 0
      %1774 = vmatpush.msra.mxu0 0.0
      %1775 = vmatpush.msra.mxu0 0.0
      %1776 = vmatpush.msra.mxu0 0.0
      %1777 = vmatpush.msra.mxu0 0.0
      %1778 = vmatpush.msra.mxu0 0.0
      %1779 = vmatpush.msra.mxu0 0.0
      %1780 = vmatpush.msra.mxu0 0.0
      %1781 = vmatpush.msra.mxu0 0.0
      %1782 = vmatpush.msra.mxu0 0.0
      %1783 = vmatpush.msra.mxu0 0.0
      %1784 = vmatpush.msra.mxu0 0.0
      %1785 = vmatpush.msra.mxu0 0.0
      %1786 = vmatpush.msra.mxu0 0.0
      %1787 = vmatpush.msra.mxu0 0.0
      %1788 = vmatpush.msra.mxu0 %v1772
      %1789 = vmatpush.msra.mxu0 %v1769
      %1790 = vmatmul.f32.gmra.mxu0 %v1362
      %v1791 = vpop.f32.mrf.mxu0
      %v1792 = vadd.f32 0.0, %v1791
      %1793 = vdwg.mxu0
      %v1794 = vadd.f32 %v1767, %v1792
      %s1795 = scalar_lea.vmem %s43, 1
      %v1796 = vld [vmem:[%s1795] sm:$0x1]
      %v1797 = vadd.f32 %v1794, %v1796
      %vm1798 = vcmp.ge.f32.partialorder %v1797, 0.0
      %v1799 = vmul.f32 %v1797, 0.01
      %v1800 = vsel %vm1798, %v1797, %v1799
      %s1801 = scalar_lea.vmem %s45, 32
      %v1802 = vld [vmem:[%s1801] sm:$0xff]
      %v1803 = vld [vmem:[%s1801 + $0x8] sm:$0xff]
      %v1804 = vld [vmem:[%s1801 + $0x10] sm:$0xff]
      %v1805 = vld [vmem:[%s1801 + $0x18] sm:$0xff]
      %s1806 = scalar_lea.vmem %s47, 1
      %v1807 = vld [vmem:[%s1806] sm:$0x1]
      %v1809 = vsel %vm1312, %v1800, 0
      %1811 = vmatpush.msra.mxu0 0.0
      %1812 = vmatpush.msra.mxu0 0.0
      %1813 = vmatpush.msra.mxu0 0.0
      %1814 = vmatpush.msra.mxu0 0.0
      %1815 = vmatpush.msra.mxu0 0.0
      %1816 = vmatpush.msra.mxu0 0.0
      %1817 = vmatpush.msra.mxu0 0.0
      %1818 = vmatpush.msra.mxu0 0.0
      %1819 = vmatpush.msra.mxu0 0.0
      %1820 = vmatpush.msra.mxu0 0.0
      %1821 = vmatpush.msra.mxu0 0.0
      %1822 = vmatpush.msra.mxu0 0.0
      %1823 = vmatpush.msra.mxu0 %v1805
      %1824 = vmatpush.msra.mxu0 %v1804
      %1825 = vmatpush.msra.mxu0 %v1803
      %1826 = vmatpush.msra.mxu0 %v1802
      %1827 = vmatmul.f32.gmra.mxu0 %v1809
      %v1828 = vpop.f32.mrf.mxu0
      %v1829 = vadd.f32 %v1807, %v1828
      %1830 = vdwg.mxu0
      %v1831 = vadd.f32 %v1829, %v1584
      %vm1832 = vcmp.ge.f32.partialorder %v1831, 0.0
      %v1833 = vmul.f32 %v1831, 0.01
      %v1834 = vsel %vm1832, %v1831, %v1833
      %s1835 = scalar_lea.vmem %s51, 8
      %v1836 = vld [vmem:[%s1835] sm:$0xff]
      %s1837 = scalar_lea.vmem %s53, 16
      %v1838 = vld [vmem:[%s1837] sm:$0xff]
      %v1839 = vld [vmem:[%s1837 + $0x8] sm:$0x3f]
      %v1841 = vsel %vm1364, %v1839, 0
      %1843 = vmatpush.msra.mxu0 0.0
      %1844 = vmatpush.msra.mxu0 0.0
      %1845 = vmatpush.msra.mxu0 0.0
      %1846 = vmatpush.msra.mxu0 0.0
      %1847 = vmatpush.msra.mxu0 0.0
      %1848 = vmatpush.msra.mxu0 0.0
      %1849 = vmatpush.msra.mxu0 0.0
      %1850 = vmatpush.msra.mxu0 0.0
      %1851 = vmatpush.msra.mxu0 0.0
      %1852 = vmatpush.msra.mxu0 0.0
      %1853 = vmatpush.msra.mxu0 0.0
      %1854 = vmatpush.msra.mxu0 0.0
      %1855 = vmatpush.msra.mxu0 0.0
      %1856 = vmatpush.msra.mxu0 0.0
      %1857 = vmatpush.msra.mxu0 %v1841
      %1858 = vmatpush.msra.mxu0 %v1838
      %1859 = vmatmul.f32.gmra.mxu0 %v1362
      %v1860 = vpop.f32.mrf.mxu0
      %v1861 = vadd.f32 0.0, %v1860
      %1862 = vdwg.mxu0
      %v1864 = vsel %vm1224, %v1834, 0
      %1866 = vmatpush.msra.mxu0 0.0
      %1867 = vmatpush.msra.mxu0 0.0
      %1868 = vmatpush.msra.mxu0 0.0
      %1869 = vmatpush.msra.mxu0 0.0
      %1870 = vmatpush.msra.mxu0 0.0
      %1871 = vmatpush.msra.mxu0 0.0
      %1872 = vmatpush.msra.mxu0 0.0
      %1873 = vmatpush.msra.mxu0 0.0
      %1874 = vmatpush.msra.mxu0 0.0
      %1875 = vmatpush.msra.mxu0 0.0
      %1876 = vmatpush.msra.mxu0 0.0
      %1877 = vmatpush.msra.mxu0 0.0
      %1878 = vmatpush.msra.mxu0 0.0
      %1879 = vmatpush.msra.mxu0 0.0
      %1880 = vmatpush.msra.mxu0 0.0
      %1881 = vmatpush.msra.mxu0 %v1836
      %1882 = vmatmul.f32.gmra.mxu0 %v1864
      %v1883 = vpop.f32.mrf.mxu0
      %v1884 = vadd.f32 %v1861, %v1883
      %1885 = vdwg.mxu0
      %s1886 = scalar_lea.vmem %s55, 1
      %v1887 = vld [vmem:[%s1886] sm:$0x1]
      %v1888 = vadd.f32 %v1884, %v1887
      %s1889 = scalar_lea.vmem %s49, 32
      %v1890 = vld [vmem:[%s1889] sm:$0xff]
      %v1891 = vld [vmem:[%s1889 + $0x8] sm:$0xff]
      %v1892 = vld [vmem:[%s1889 + $0x10] sm:$0xff]
      %v1893 = vld [vmem:[%s1889 + $0x18] sm:$0xff]
      %v1894 = vperm.slane %v1888, 0
      %v1896 = vsel %vm1312, %v1702, 0
      %1898 = vmatpush.msra.mxu0 0.0
      %1899 = vmatpush.msra.mxu0 0.0
      %1900 = vmatpush.msra.mxu0 0.0
      %1901 = vmatpush.msra.mxu0 0.0
      %1902 = vmatpush.msra.mxu0 0.0
      %1903 = vmatpush.msra.mxu0 0.0
      %1904 = vmatpush.msra.mxu0 0.0
      %1905 = vmatpush.msra.mxu0 0.0
      %1906 = vmatpush.msra.mxu0 0.0
      %1907 = vmatpush.msra.mxu0 0.0
      %1908 = vmatpush.msra.mxu0 0.0
      %1909 = vmatpush.msra.mxu0 0.0
      %1910 = vmatpush.msra.mxu0 %v1893
      %1911 = vmatpush.msra.mxu0 %v1892
      %1912 = vmatpush.msra.mxu0 %v1891
      %1913 = vmatpush.msra.mxu0 %v1890
      %1914 = vmatmul.f32.gmra.mxu0 %v1896
      %v1915 = vpop.f32.mrf.mxu0
      %v1916 = vadd.f32 %v1894, %v1915
      %1917 = vdwg.mxu0
      %vm1918 = vcmp.ge.f32.partialorder %v1916, 0.0
      %v1919 = vmul.f32 %v1916, 0.01
      %v1920 = vsel %vm1918, %v1916, %v1919
      %s1921 = scalar_lea.vmem %s57, 32
      %v1922 = vld [vmem:[%s1921] sm:$0xff]
      %v1923 = vld [vmem:[%s1921 + $0x8] sm:$0xff]
      %v1924 = vld [vmem:[%s1921 + $0x10] sm:$0xff]
      %v1925 = vld [vmem:[%s1921 + $0x18] sm:$0xff]
      %s1926 = scalar_lea.vmem %s59, 1
      %v1927 = vld [vmem:[%s1926] sm:$0x1]
      %v1929 = vperm.slane %v1927, 0
      %v1932 = vsel %vm1312, %v1920, 0
      %1934 = vmatpush.msra.mxu0 0.0
      %1935 = vmatpush.msra.mxu0 0.0
      %1936 = vmatpush.msra.mxu0 0.0
      %1937 = vmatpush.msra.mxu0 0.0
      %1938 = vmatpush.msra.mxu0 0.0
      %1939 = vmatpush.msra.mxu0 0.0
      %1940 = vmatpush.msra.mxu0 0.0
      %1941 = vmatpush.msra.mxu0 0.0
      %1942 = vmatpush.msra.mxu0 0.0
      %1943 = vmatpush.msra.mxu0 0.0
      %1944 = vmatpush.msra.mxu0 0.0
      %1945 = vmatpush.msra.mxu0 0.0
      %1946 = vmatpush.msra.mxu0 %v1925
      %1947 = vmatpush.msra.mxu0 %v1924
      %1948 = vmatpush.msra.mxu0 %v1923
      %1949 = vmatpush.msra.mxu0 %v1922
      %1950 = vmatmul.f32.gmra.mxu0 %v1932
      %v1951 = vpop.f32.mrf.mxu0
      %v1952 = vadd.f32 %v1929, %v1951
      %1953 = vdwg.mxu0
      %v1954 = vadd.f32 %v1952, %v1702
      %vm1955 = vcmp.ge.f32.partialorder %v1954, 0.0
      %v1956 = vmul.f32 %v1954, 0.01
      %v1957 = vsel %vm1955, %v1954, %v1956
      %v1958 = vmul.f32 %v1957, %v1277
      %v1959 = vld [vmem:[%s61] sm:$0xff]
      %v1960 = vld [vmem:[%s61 + $0x8] sm:$0xff]
      %v1961 = vld [vmem:[%s61 + $0x10] sm:$0xff]
      %v1962 = vld [vmem:[%s61 + $0x18] sm:$0xff]
      %v1963 = vld [vmem:[%s63] sm:$0x1]
      %v1965 = vperm.slane %v1963, 0
      %v1968 = vsel %vm1312, %v1958, 0
      %1970 = vmatpush.msra.mxu0 0.0
      %1971 = vmatpush.msra.mxu0 0.0
      %1972 = vmatpush.msra.mxu0 0.0
      %1973 = vmatpush.msra.mxu0 0.0
      %1974 = vmatpush.msra.mxu0 0.0
      %1975 = vmatpush.msra.mxu0 0.0
      %1976 = vmatpush.msra.mxu0 0.0
      %1977 = vmatpush.msra.mxu0 0.0
      %1978 = vmatpush.msra.mxu0 0.0
      %1979 = vmatpush.msra.mxu0 0.0
      %1980 = vmatpush.msra.mxu0 0.0
      %1981 = vmatpush.msra.mxu0 0.0
      %1982 = vmatpush.msra.mxu0 %v1962
      %1983 = vmatpush.msra.mxu0 %v1961
      %1984 = vmatpush.msra.mxu0 %v1960
      %1985 = vmatpush.msra.mxu0 %v1959
      %1986 = vmatmul.f32.gmra.mxu0 %v1968
      %v1987 = vpop.f32.mrf.mxu0
      %v1988 = vadd.f32 %v1965, %v1987
      %1989 = vdwg.mxu0
      %v1990 = vmul.f32 %v1988, %v1277
      %v1991 = vld [vmem:[%s65] sm:$0x3f]
      %v1992 = vld [vmem:[%s67] sm:$0x1]
      %v1994 = vperm.slane %v1992, 0
      %1997 = vrot.lane.b32.xlu0 %v1990, 125
      %v1998 = vpop.permute.xlu0 %1997
      %vm1999 = vcmask 48128
      %v2000 = vsel %vm1999, %v1998, 0
      %v2003 = vsel %vm1364, %v1991, 0
      %2005 = vmatpush.msra.mxu0 0.0
      %2006 = vmatpush.msra.mxu0 0.0
      %2007 = vmatpush.msra.mxu0 0.0
      %2008 = vmatpush.msra.mxu0 0.0
      %2009 = vmatpush.msra.mxu0 0.0
      %2010 = vmatpush.msra.mxu0 0.0
      %2011 = vmatpush.msra.mxu0 0.0
      %2012 = vmatpush.msra.mxu0 0.0
      %2013 = vmatpush.msra.mxu0 0.0
      %2014 = vmatpush.msra.mxu0 0.0
      %2015 = vmatpush.msra.mxu0 0.0
      %2016 = vmatpush.msra.mxu0 0.0
      %2017 = vmatpush.msra.mxu0 0.0
      %2018 = vmatpush.msra.mxu0 0.0
      %2019 = vmatpush.msra.mxu0 0.0
      %2020 = vmatpush.msra.mxu0 %v2003
      %2021 = vmatmul.f32.gmra.mxu0 %v2000
      %v2022 = vpop.f32.mrf.mxu0
      %v2023 = vadd.f32 %v1994, %v2022
      %2024 = vdwg.mxu0
      %vm2025 = vcmp.gt.f32.partialorder %v2023, 0.0
      %v2026 = vmin.f32 %v2023, 0.0
      %v2027 = vmul.f32 %v2026, 1.442695
      %v2028 = vpow.pop %v2027
      %v2029 = vsub.f32 %v2028, 1.0
      %v2030 = vmul.f32 %v2029, 1.6732632
      %v2031 = vsel %vm2025, %v2023, %v2030
      %v2032 = vmul.f32 %v2031, 1.050701
      %v2033 = vld [vmem:[%s69] sm:$0x3f]
      %v2034 = vld [vmem:[%s71] sm:$0x1]
      %v2036 = vperm.slane %v2034, 0
      %v2039 = vsel %vm1999, %v2032, 0
      %v2042 = vsel %vm1364, %v2033, 0
      %2044 = vmatpush.msra.mxu0 0.0
      %2045 = vmatpush.msra.mxu0 0.0
      %2046 = vmatpush.msra.mxu0 0.0
      %2047 = vmatpush.msra.mxu0 0.0
      %2048 = vmatpush.msra.mxu0 0.0
      %2049 = vmatpush.msra.mxu0 0.0
      %2050 = vmatpush.msra.mxu0 0.0
      %2051 = vmatpush.msra.mxu0 0.0
      %2052 = vmatpush.msra.mxu0 0.0
      %2053 = vmatpush.msra.mxu0 0.0
      %2054 = vmatpush.msra.mxu0 0.0
      %2055 = vmatpush.msra.mxu0 0.0
      %2056 = vmatpush.msra.mxu0 0.0
      %2057 = vmatpush.msra.mxu0 0.0
      %2058 = vmatpush.msra.mxu0 0.0
      %2059 = vmatpush.msra.mxu0 %v2042
      %2060 = vmatmul.f32.gmra.mxu0 %v2039
      %v2061 = vpop.f32.mrf.mxu0
      %v2062 = vadd.f32 %v2036, %v2061
      %2063 = vdwg.mxu0
      %2065 = vrot.lane.b32.xlu0 %v2062, 3
      %v2066 = vpop.permute.xlu0 %2065
      %v2068 = vsel %vm1166, %v1990, %v2066
      %vm2069 = vcmask 72704
      %2070 = vst.msk [vmem:[%s1155] sm:$0xff] %vm2069, %v2068
      %p2071 = scmp.lt.s32.totalorder %s84, 1
      %s2072 = scalar_select %p2071, %s84, 1
      %s2073 = smul.addr %s2072, 8
      %s2074 = scalar_lea.vmem %s73, %s2073
      // Predicated region
      $region165: #{multimodal_epic_forward.1} parent=163 // pred_check
        %p2075 = pneg %p883
      $region166: #{multimodal_epic_forward.1} parent=163 // pred_check_branch
        %2077 = sbr.rel (%p2075) target = $region168
      $region167: #{multimodal_epic_forward.1} parent=163 // pred_region
        _
      $region168: #{multimodal_epic_forward.1} parent=163 // pred_fallthru
        _
    $region164: #{multimodal_epic_forward.1} parent=5 // pred_fallthru
      _
    %p2078 = scmp.le.s32.totalorder 2, %s79
    // Predicated region
    $region169: #{multimodal_epic_forward.1} parent=5 // pred_check
      %p2079 = pneg %p2078
    $region170: #{multimodal_epic_forward.1} parent=5 // pred_check_branch
      %2081 = sbr.rel (%p2079) target = $region172
    $region171: #{multimodal_epic_forward.1} parent=5 // pred_region
      %s2082 = ssub.s32 %s79, 2
      // Predicated region
      $region173: #{multimodal_epic_forward.1} parent=171 // pred_check
        %p2083 = pneg %p889
      $region174: #{multimodal_epic_forward.1} parent=171 // pred_check_branch
        %2085 = sbr.rel (%p2083) target = $region176
      $region175: #{multimodal_epic_forward.1} parent=171 // pred_region
        %p2086 = scmp.lt.s32.totalorder %s85, 1
        %s2087 = scalar_select %p2086, %s85, 1
        %s2088 = smul.addr %s2087, 8
        %s2089 = scalar_lea.vmem %s73, %s2088
      $region176: #{multimodal_epic_forward.1} parent=171 // pred_fallthru
        _
    $region172: #{multimodal_epic_forward.1} parent=5 // pred_fallthru
      _
  $region6: #{multimodal_epic_forward.1} parent=0 // loop_footer
    %s83 = sadd.s32 1, %s79
  $region7: #{multimodal_epic_forward.1} parent=0 // loop_footer_branch
    %78 = sbr.rel target = $region3
  $region8: #{multimodal_epic_forward.1} parent=0 // loop_exit
    _

</llo_original>
